<compile_context>
chip_gen: v6e
topology: v6e:2x2x1
jax: 0.10.0
libtpu: 0.0.40
codegen_flags: <defaults>
</compile_context>

<pallas_src>
import math

import jax
import jax.numpy as jnp
from jax.experimental import pallas as pl
from jax.experimental.pallas import tpu as pltpu

_LOG_2PI = math.log(2.0 * math.pi)


def _round_up(x: int, m: int) -> int:
    return (x + m - 1) // m * m


# ----------------------------------------------------------------------------
# Pallas kernel: mixture-of-diagonal-Gaussians log_prob over a batch tile
# ----------------------------------------------------------------------------
def _vamp_log_prob_kernel(z_ref, isig2_ref, mu_isig2_ref, const_ref, out_ref):
    z = z_ref[...]                                   # (TB, D)
    # Per-component quadratic forms via MXU ("A @ B^T" contraction over D).
    quad = jnp.einsum(
        "bd,kd->bk", z * z, isig2_ref[...],
        preferred_element_type=jnp.float32,
        precision=jax.lax.Precision.HIGHEST)         # (TB, K) = sum_d z^2 / sig^2
    cross = jnp.einsum(
        "bd,kd->bk", z, mu_isig2_ref[...],
        preferred_element_type=jnp.float32,
        precision=jax.lax.Precision.HIGHEST)         # (TB, K) = sum_d z*mu / sig^2
    comp = cross - 0.5 * quad + const_ref[...]       # (TB, K), const broadcasts (1, K)
    # logsumexp over components (lane-axis reduce, EUP exp/log).
    m = jnp.max(comp, axis=-1, keepdims=True)        # (TB, 1)
    s = jnp.sum(jnp.exp(comp - m), axis=-1, keepdims=True)
    out_ref[...] = m + jnp.log(s)                    # (TB, 1)


def mixture_log_prob_pallas(z, log_pi, mu, sigma, *, tb: int = 256):
    """z: (B, D); log_pi: (K,); mu/sigma: (K, D)  ->  (B,) mixture log-prob."""
    z = z.astype(jnp.float32)
    B, D = z.shape
    K = log_pi.shape[0]

    # Precompute component constants in the wrapper (no per-tile divide / log).
    isig2 = (1.0 / (sigma * sigma)).astype(jnp.float32)             # (K, D)
    mu_isig2 = (mu * isig2).astype(jnp.float32)                     # (K, D)
    const = (log_pi
             - 0.5 * jnp.sum(mu * mu * isig2, axis=-1)
             - jnp.sum(jnp.log(sigma), axis=-1)
             - 0.5 * D * _LOG_2PI).astype(jnp.float32).reshape(1, K)  # (1, K)

    # Batch tiling: TB rows per grid step (sublane-aligned), pad B if needed.
    TB = min(tb, _round_up(B, 8))
    Bp = _round_up(B, TB)
    zp = z if Bp == B else jnp.pad(z, ((0, Bp - B), (0, 0)))
    grid = (Bp // TB,)

    out = pl.pallas_call(
        _vamp_log_prob_kernel,
        out_shape=jax.ShapeDtypeStruct((Bp, 1), jnp.float32),
        grid=grid,
        in_specs=[
            pl.BlockSpec((TB, D), lambda i: (i, 0)),   # z tile (pipelined)
            pl.BlockSpec((K, D), lambda i: (0, 0)),    # inv_sigma^2 (resident)
            pl.BlockSpec((K, D), lambda i: (0, 0)),    # mu * inv_sigma^2 (resident)
            pl.BlockSpec((1, K), lambda i: (0, 0)),    # per-component constant
        ],
        out_specs=pl.BlockSpec((TB, 1), lambda i: (i, 0)),
        compiler_params=pltpu.CompilerParams(
            dimension_semantics=("parallel",),
            vmem_limit_bytes=32 * 1024 * 1024,
        ),
    )(zp, isig2, mu_isig2, const)
    return out[:B, 0]


# ----------------------------------------------------------------------------
# Mixture handle (stand-in for td.MixtureSameFamily) with Pallas-backed log_prob
# ----------------------------------------------------------------------------
class VampMixture:
    def __init__(self, log_pi, mu, sigma):
        self.log_pi = log_pi       # (K,)
        self.mu = mu               # (K, D)
        self.sigma = sigma         # (K, D)

    def log_prob(self, z):
        B = z.shape[0]
        if B < 8:
            # Tiny-batch fallback: Pallas launch overhead dominates, use plain JAX.
            return _mixture_log_prob_ref(self.log_pi, self.mu, self.sigma, z)
        return mixture_log_prob_pallas(z, self.log_pi, self.mu, self.sigma)

    def sample(self, key, n):
        # Plain-JAX sampling (categorical gather is not a Pallas hot path).
        kc, kn = jax.random.split(key)
        comp = jax.random.categorical(kc, self.log_pi, shape=(n,))
        eps = jax.random.normal(kn, (n, self.mu.shape[-1]), dtype=jnp.float32)
        return self.mu[comp] + self.sigma[comp] * eps


# ----------------------------------------------------------------------------
# VampPrior module port
# ----------------------------------------------------------------------------
class VampPriorPallas:
    def __init__(self, num_components, H, W, C, latent_dim, key):
        self.num_components = num_components
        self.H, self.W, self.C = H, W, C
        self.latent_dim = latent_dim
        k1, k2, k3, k4 = jax.random.split(key, 4)
        # Matches the torch init: randn mixture weights, rand pseudo-inputs.
        self.mixture_weights = jax.random.normal(k1, (num_components,), jnp.float32)
        self.pseudo_inputs = jax.random.uniform(k2, (num_components, C, H, W), jnp.float32)
        # TODO(synk): the real encoder is an external nn.Module passed into VampPrior;
        # emulated here with a deterministic linear Gaussian head (mu, log_sigma).
        feat = C * H * W
        self.enc_w_mu = 0.2 * jax.random.normal(k3, (feat, latent_dim), jnp.float32)
        self.enc_w_ls = 0.2 * jax.random.normal(k4, (feat, latent_dim), jnp.float32)

    def _encoder(self, x):
        flat = x.reshape(x.shape[0], -1)                      # (K, C*H*W)
        mu = flat @ self.enc_w_mu                             # (K, D)
        sigma = jnp.exp(jnp.clip(flat @ self.enc_w_ls, -5.0, 5.0))
        return mu, sigma

    def forward(self):
        log_pi = jax.nn.log_softmax(self.mixture_weights)     # Categorical(softmax(w))
        mu, sigma = self._encoder(self.pseudo_inputs)         # component distribution
        return VampMixture(log_pi, mu, sigma)                 # MixtureSameFamily


# ----------------------------------------------------------------------------
# Pure-JAX reference for verification
# ----------------------------------------------------------------------------
def _mixture_log_prob_ref(log_pi, mu, sigma, z):
    zc = z[:, None, :]                                        # (B, 1, D)
    per_dim = (-0.5 * ((zc - mu[None]) / sigma[None]) ** 2
               - jnp.log(sigma)[None]
               - 0.5 * _LOG_2PI)                              # (B, K, D)
    comp = per_dim.sum(-1) + log_pi[None, :]                  # (B, K)
    return jax.scipy.special.logsumexp(comp, axis=-1)         # (B,)


if __name__ == "__main__":
    key = jax.random.PRNGKey(0)
    k_prior, k_z = jax.random.split(key)

    K, C, H, W, D, B = 16, 1, 8, 8, 128, 512
    module = VampPriorPallas(K, H, W, C, D, k_prior)
    prior = module.forward()

    z = jax.random.normal(k_z, (B, D), dtype=jnp.float32)
    logp = jax.block_until_ready(prior.log_prob(z))

    ref = _mixture_log_prob_ref(prior.log_pi, prior.mu, prior.sigma, z)
    assert logp.shape == (B,)
    max_err = float(jnp.max(jnp.abs(logp - ref)))
    assert jnp.allclose(logp, ref, rtol=1e-4, atol=5e-2), f"log_prob mismatch, max_err={max_err}"

    print("KERNEL_OK")
</pallas_src>

<mosaic_0001>
module attributes {stable_mosaic.version = 11 : i64} {
  func.func @_vamp_log_prob_kernel(%arg0: i32, %arg1: memref<256x128xf32, #tpu.memory_space<vmem>>, %arg2: memref<16x128xf32, #tpu.memory_space<vmem>>, %arg3: memref<16x128xf32, #tpu.memory_space<vmem>>, %arg4: memref<1x16xf32, #tpu.memory_space<vmem>>, %arg5: memref<256x1xf32, #tpu.memory_space<vmem>>) attributes {dimension_semantics = [#tpu.dimension_semantics<parallel>], iteration_bounds = array<i64: 2>, scalar_prefetch = 0 : i64, scratch_operands = 0 : i64, tpu.core_type = #tpu.core_type<tc>, window_params = [{transform_indices = @transform_0, window_bounds = array<i64: 256, 128>}, {pipeline_mode = #tpu.pipeline_mode<synchronous>, transform_indices = @transform_1, window_bounds = array<i64: 16, 128>}, {pipeline_mode = #tpu.pipeline_mode<synchronous>, transform_indices = @transform_2, window_bounds = array<i64: 16, 128>}, {pipeline_mode = #tpu.pipeline_mode<synchronous>, transform_indices = @transform_3, window_bounds = array<i64: 1, 16>}, {transform_indices = @transform_4, window_bounds = array<i64: 256, 1>}]} {
    %c0 = arith.constant 0 : index
    %c0_0 = arith.constant 0 : index
    %0 = vector.load %arg1[%c0, %c0_0] : memref<256x128xf32, #tpu.memory_space<vmem>>, vector<256x128xf32>
    %1 = arith.mulf %0, %0 : vector<256x128xf32>
    %c0_1 = arith.constant 0 : index
    %c0_2 = arith.constant 0 : index
    %2 = vector.load %arg2[%c0_1, %c0_2] : memref<16x128xf32, #tpu.memory_space<vmem>>, vector<16x128xf32>
    "tpu.trace_start"() <{level = 10 : i32, message = "bd,kd->bk"}> : () -> ()
    %cst = arith.constant dense<0.000000e+00> : vector<256x16xf32>
    %3 = tpu.matmul %1, %2, %cst {dimension_numbers = #tpu.dot_dimension_numbers<[1], [1], [0], [0], [0, 0, 1, 0], [], []>, precision = #tpu.contract_precision<fp32>} : vector<256x128xf32>, vector<16x128xf32>, vector<256x16xf32> -> vector<256x16xf32>
    "tpu.trace_stop"() : () -> ()
    %c0_3 = arith.constant 0 : index
    %c0_4 = arith.constant 0 : index
    %4 = vector.load %arg3[%c0_3, %c0_4] : memref<16x128xf32, #tpu.memory_space<vmem>>, vector<16x128xf32>
    "tpu.trace_start"() <{level = 10 : i32, message = "bd,kd->bk"}> : () -> ()
    %cst_5 = arith.constant dense<0.000000e+00> : vector<256x16xf32>
    %5 = tpu.matmul %0, %4, %cst_5 {dimension_numbers = #tpu.dot_dimension_numbers<[1], [1], [0], [0], [0, 0, 1, 0], [], []>, precision = #tpu.contract_precision<fp32>} : vector<256x128xf32>, vector<16x128xf32>, vector<256x16xf32> -> vector<256x16xf32>
    "tpu.trace_stop"() : () -> ()
    %cst_6 = arith.constant 5.000000e-01 : f32
    %6 = vector.broadcast %cst_6 : f32 to vector<256x16xf32>
    %7 = arith.mulf %6, %3 : vector<256x16xf32>
    %8 = arith.subf %5, %7 : vector<256x16xf32>
    %c0_7 = arith.constant 0 : index
    %c0_8 = arith.constant 0 : index
    %9 = vector.load %arg4[%c0_7, %c0_8] : memref<1x16xf32, #tpu.memory_space<vmem>>, vector<1x16xf32>
    %10 = vector.broadcast %9 : vector<1x16xf32> to vector<256x16xf32>
    %11 = arith.addf %8, %10 : vector<256x16xf32>
    %cst_9 = arith.constant dense<0xFF800000> : vector<256xf32>
    %12 = vector.multi_reduction <maximumf>, %11, %cst_9 [1] : vector<256x16xf32> to vector<256xf32>
    %13 = vector.shape_cast %12 : vector<256xf32> to vector<256x1xf32>
    %14 = vector.broadcast %13 : vector<256x1xf32> to vector<256x16xf32>
    %15 = arith.subf %11, %14 : vector<256x16xf32>
    %16 = math.exp %15 : vector<256x16xf32>
    %cst_10 = arith.constant dense<0.000000e+00> : vector<256xf32>
    %17 = vector.multi_reduction <add>, %16, %cst_10 [1] : vector<256x16xf32> to vector<256xf32>
    %18 = vector.shape_cast %17 : vector<256xf32> to vector<256x1xf32>
    %19 = math.log %18 : vector<256x1xf32>
    %20 = arith.addf %13, %19 : vector<256x1xf32>
    %c0_11 = arith.constant 0 : index
    %c0_12 = arith.constant 0 : index
    %21 = vector.load %arg5[%c0_11, %c0_12] : memref<256x1xf32, #tpu.memory_space<vmem>>, vector<256x1xf32>
    tpu.vector_store %arg5[%c0_11, %c0_12], %20 {strides = array<i32>} : memref<256x1xf32, #tpu.memory_space<vmem>>, vector<256x1xf32>,
    return
  }
  func.func @transform_0(%arg0: i32) -> (i32, i32) {
    %c0_i32 = arith.constant 0 : i32
    %c0_i32_0 = arith.constant 0 : i32
    return %arg0, %c0_i32 : i32, i32
  }
  func.func @transform_1(%arg0: i32) -> (i32, i32) {
    %c0_i32 = arith.constant 0 : i32
    %c0_i32_0 = arith.constant 0 : i32
    %c0_i32_1 = arith.constant 0 : i32
    return %c0_i32, %c0_i32_0 : i32, i32
  }
  func.func @transform_2(%arg0: i32) -> (i32, i32) {
    %c0_i32 = arith.constant 0 : i32
    %c0_i32_0 = arith.constant 0 : i32
    %c0_i32_1 = arith.constant 0 : i32
    return %c0_i32, %c0_i32_0 : i32, i32
  }
  func.func @transform_3(%arg0: i32) -> (i32, i32) {
    %c0_i32 = arith.constant 0 : i32
    %c0_i32_0 = arith.constant 0 : i32
    %c0_i32_1 = arith.constant 0 : i32
    return %c0_i32, %c0_i32_0 : i32, i32
  }
  func.func @transform_4(%arg0: i32) -> (i32, i32) {
    %c0_i32 = arith.constant 0 : i32
    %c0_i32_0 = arith.constant 0 : i32
    return %arg0, %c0_i32 : i32, i32
  }
}

</mosaic_0001>

<llo_original>
// kernel: tpu_custom_call.1
$region0: #{tpu_custom_call.1}
  #allocation0 [shape = 'u32[]', space=smem, size = 0x4, offset = 0x4, fixed_abs, tag = 'smem constant byte address 0x4 - core index']
  #allocation1 [shape = 'u32[144,128]{1,0:T(1,128)}', space=vmem, size = 0x12000, scoped, tag = 'internal scratch']
  %s0 = inlined_call_operand.hbm [shape: f32[512,128], index: 0, kind: input, shape index: {}]
  %s1 = inlined_call_operand.hbm [shape: f32[16,128], index: 1, kind: input, shape index: {}]
  %s2 = inlined_call_operand.hbm [shape: f32[16,128], index: 2, kind: input, shape index: {}]
  %s3 = inlined_call_operand.vmem [shape: f32[1,16], index: 3, kind: input, shape index: {}]
  %s4 = inlined_call_operand.vmem [shape: f32[512,1], index: 4, kind: output, shape index: {}]
  %s5 = sld [smem:[#allocation0]]
  $region61: #{tpu_custom_call.1} parent=0
    _
  %s7 = ssub.s32 1, %s5
  %s8 = scalar_select 0, %s7, %s5
  $region1: #{tpu_custom_call.1} parent=0
    #allocation2 [shape = 'u8[262144]{0}', space=vmem, size = 0x40000, scoped, tag = 'input window, operand 0']
    #allocation3 [shape = 's32[2]{0}', space=sflag, size = 0x8, scoped, tag = 'scoped memory for tpu_custom_call.1']
    #allocation4 [shape = 'u8[8192]{0}', space=vmem, size = 0x2000, scoped, tag = 'input window, operand 1, single buffered']
    #allocation5 [shape = 's32[1]{0}', space=sflag, size = 0x4, scoped, tag = 'scoped memory for tpu_custom_call.1']
    #allocation6 [shape = 'u8[8192]{0}', space=vmem, size = 0x2000, scoped, tag = 'input window, operand 2, single buffered']
    %9 = vsyncpa [#allocation3], 0
    %s10 = scalar_lea.sflag [#allocation3], 1
    %11 = vsyncpa %s10, 0
    %12 = vsyncpa [#allocation5], 0
    loop: start=0, step=1, limit=4
    $region2: #{tpu_custom_call.1} parent=1 // loop_pre_header
      _
    $region3: #{tpu_custom_call.1} parent=1 // loop_header
      %s14 = sphi 0, %s18
      %p15 = scmp.ge.s32.totalorder %s14, 4
      %s24 = sphi 0, %s26
      %s27 = sphi 0, %s24
      %s28 = sphi 0, %s27
      %s44 = sphi 0, %s28
      %s48 = sphi 0, %s48
      %s50 = sphi 0, %s48
      %s51 = sphi 0, %s50
      %s65 = sphi 0, %s51
      %s69 = sphi 0, %s69
      %s71 = sphi 0, %s69
      %s72 = sphi 0, %s71
      %s86 = sphi 0, %s72
      %s90 = sphi 0, %s90
      %s92 = sphi 0, %s90
      %s93 = sphi 0, %s92
      %s107 = sphi 0, %s93
      %s113 = sphi 0, %s115
      %s116 = sphi 0, %s113
      %s117 = sphi 0, %s116
      %s133 = sphi 0, %s117
    $region4: #{tpu_custom_call.1} parent=1 // loop_header_branch
      %17 = sbr.rel (%p15) target = $region8
    $region5: #{tpu_custom_call.1} parent=1 // loop_body
      %s19 = ssub.s32 %s14, 1
      %s20 = ssub.s32 %s14, 2
      %s21 = sadd.s32 %s14, 1
      %s22 = ssub.s32 %s14, %s21
      %p23 = scmp.eq.s32.totalorder %s22, 0
      %s25 = sadd.s32 %s24, 1
      %s26 = scalar_select %p23, %s24, %s25
      %p29 = pneg %p23
      %p30 = scmp.eq.s32.totalorder %s14, 1
      %p31 = por %p29, %p30
      %p32 = scmp.ne.s32.totalorder %s24, %s27
      %p33 = scmp.eq.s32.totalorder %s14, 0
      %p34 = por %p32, %p33
      %p35 = scmp.ne.s32.totalorder %s24, %s27
      %p36 = scmp.eq.s32.totalorder %s19, 1
      %p37 = por %p35, %p36
      %p38 = scmp.ne.s32.totalorder %s27, %s28
      %p39 = scmp.eq.s32.totalorder %s19, 0
      %p40 = por %p38, %p39
      %p41 = scmp.ne.s32.totalorder %s27, %s28
      %p42 = scmp.eq.s32.totalorder %s20, 1
      %p43 = por %p41, %p42
      %p45 = scmp.ne.s32.totalorder %s28, %s44
      %p46 = scmp.eq.s32.totalorder %s20, 0
      %p47 = por %p45, %p46
      %s49 = sadd.s32 %s48, 1
      %p52 = scmp.eq.s32.totalorder %s14, 1
      %p53 = scmp.ne.s32.totalorder %s48, %s50
      %p54 = scmp.eq.s32.totalorder %s14, 0
      %p55 = por %p53, %p54
      %p56 = scmp.ne.s32.totalorder %s48, %s50
      %p57 = scmp.eq.s32.totalorder %s19, 1
      %p58 = por %p56, %p57
      %p59 = scmp.ne.s32.totalorder %s50, %s51
      %p60 = scmp.eq.s32.totalorder %s19, 0
      %p61 = por %p59, %p60
      %p62 = scmp.ne.s32.totalorder %s50, %s51
      %p63 = scmp.eq.s32.totalorder %s20, 1
      %p64 = por %p62, %p63
      %p66 = scmp.ne.s32.totalorder %s51, %s65
      %p67 = scmp.eq.s32.totalorder %s20, 0
      %p68 = por %p66, %p67
      %s70 = sadd.s32 %s69, 1
      %p73 = scmp.eq.s32.totalorder %s14, 1
      %p74 = scmp.ne.s32.totalorder %s69, %s71
      %p75 = scmp.eq.s32.totalorder %s14, 0
      %p76 = por %p74, %p75
      %p77 = scmp.ne.s32.totalorder %s69, %s71
      %p78 = scmp.eq.s32.totalorder %s19, 1
      %p79 = por %p77, %p78
      %p80 = scmp.ne.s32.totalorder %s71, %s72
      %p81 = scmp.eq.s32.totalorder %s19, 0
      %p82 = por %p80, %p81
      %p83 = scmp.ne.s32.totalorder %s71, %s72
      %p84 = scmp.eq.s32.totalorder %s20, 1
      %p85 = por %p83, %p84
      %p87 = scmp.ne.s32.totalorder %s72, %s86
      %p88 = scmp.eq.s32.totalorder %s20, 0
      %p89 = por %p87, %p88
      %s91 = sadd.s32 %s90, 1
      %p94 = scmp.eq.s32.totalorder %s14, 1
      %p95 = scmp.ne.s32.totalorder %s90, %s92
      %p96 = scmp.eq.s32.totalorder %s14, 0
      %p97 = por %p95, %p96
      %p98 = scmp.ne.s32.totalorder %s90, %s92
      %p99 = scmp.eq.s32.totalorder %s19, 1
      %p100 = por %p98, %p99
      %p101 = scmp.ne.s32.totalorder %s92, %s93
      %p102 = scmp.eq.s32.totalorder %s19, 0
      %p103 = por %p101, %p102
      %p104 = scmp.ne.s32.totalorder %s92, %s93
      %p105 = scmp.eq.s32.totalorder %s20, 1
      %p106 = por %p104, %p105
      %p108 = scmp.ne.s32.totalorder %s93, %s107
      %p109 = scmp.eq.s32.totalorder %s20, 0
      %p110 = por %p108, %p109
      %s111 = ssub.s32 %s14, %s21
      %p112 = scmp.eq.s32.totalorder %s111, 0
      %s114 = sadd.s32 %s113, 1
      %s115 = scalar_select %p112, %s113, %s114
      %p118 = pneg %p112
      %p119 = scmp.eq.s32.totalorder %s14, 1
      %p120 = por %p118, %p119
      %p121 = scmp.ne.s32.totalorder %s113, %s116
      %p122 = scmp.eq.s32.totalorder %s14, 0
      %p123 = por %p121, %p122
      %p124 = scmp.ne.s32.totalorder %s113, %s116
      %p125 = scmp.eq.s32.totalorder %s19, 1
      %p126 = por %p124, %p125
      %p127 = scmp.ne.s32.totalorder %s116, %s117
      %p128 = scmp.eq.s32.totalorder %s19, 0
      %p129 = por %p127, %p128
      %p130 = scmp.ne.s32.totalorder %s116, %s117
      %p131 = scmp.eq.s32.totalorder %s20, 1
      %p132 = por %p130, %p131
      %p134 = scmp.ne.s32.totalorder %s117, %s133
      %p135 = scmp.eq.s32.totalorder %s20, 0
      %p136 = por %p134, %p135
      %p137 = scmp.le.s32.totalorder 1, %s14
      %p138 = scmp.lt.s32.totalorder %s14, 3
      %p139 = pnand %p137, %p138
      %p140 = pneg %p139
      // Predicated region
      $region9: #{tpu_custom_call.1} parent=5 // pred_check
        _
      $region10: #{tpu_custom_call.1} parent=5 // pred_check_branch
        %142 = sbr.rel (%p139) target = $region12
      $region11: #{tpu_custom_call.1} parent=5 // pred_region
        %s143 = ssub.s32 %s14, 1
        // Predicated region
        $region13: #{tpu_custom_call.1} parent=11 // pred_check
          %p144 = pneg %p61
        $region14: #{tpu_custom_call.1} parent=11 // pred_check_branch
          %146 = sbr.rel (%p144) target = $region16
        $region15: #{tpu_custom_call.1} parent=11 // pred_region
          %s148 = ssub.s32 256, 256
          %149 = vsyncadd [#allocation5], %s148
          %s150 = sshll.u32 [#allocation4], 4
          %s151 = int_to_ptr.vmem [resolvable:$true] %s150
          %156 = dma.hbm_to_vmem [thread:$0]  %s1, 256, %s151, [#allocation5], 128, 128, 8
        $region16: #{tpu_custom_call.1} parent=11 // pred_fallthru
          _
        // Predicated region
        $region17: #{tpu_custom_call.1} parent=11 // pred_check
          %p157 = pneg %p82
        $region18: #{tpu_custom_call.1} parent=11 // pred_check_branch
          %159 = sbr.rel (%p157) target = $region20
        $region19: #{tpu_custom_call.1} parent=11 // pred_region
          %s161 = ssub.s32 256, 256
          %162 = vsyncadd [#allocation5], %s161
          %s163 = sshll.u32 [#allocation6], 4
          %s164 = int_to_ptr.vmem [resolvable:$true] %s163
          %169 = dma.hbm_to_vmem [thread:$0]  %s2, 256, %s164, [#allocation5], 128, 128, 8
        $region20: #{tpu_custom_call.1} parent=11 // pred_fallthru
          _
        // Predicated region
        $region21: #{tpu_custom_call.1} parent=11 // pred_check
          %p170 = pneg %p103
        $region22: #{tpu_custom_call.1} parent=11 // pred_check_branch
          %172 = sbr.rel (%p170) target = $region24
        $region23: #{tpu_custom_call.1} parent=11 // pred_region
          _
        $region24: #{tpu_custom_call.1} parent=11 // pred_fallthru
          _
      $region12: #{tpu_custom_call.1} parent=5 // pred_fallthru
        _
      %p173 = scmp.lt.s32.totalorder %s14, 2
      // Predicated region
      $region25: #{tpu_custom_call.1} parent=5 // pred_check
        %p174 = pneg %p173
      $region26: #{tpu_custom_call.1} parent=5 // pred_check_branch
        %176 = sbr.rel (%p174) target = $region28
      $region27: #{tpu_custom_call.1} parent=5 // pred_region
        // Predicated region
        $region29: #{tpu_custom_call.1} parent=27 // pred_check
          %p177 = pneg %p34
        $region30: #{tpu_custom_call.1} parent=27 // pred_check_branch
          %179 = sbr.rel (%p177) target = $region32
        $region31: #{tpu_custom_call.1} parent=27 // pred_region
          %s180 = sand.u32 %s24, 1
          %s181 = scalar_lea.sflag [#allocation3], %s180
          %s182 = sand.u32 %s24, 1
          %s183 = smul.addr %s182, 256
          %s184 = scalar_lea.vmem [#allocation2], %s183
          %s185 = smul.u32 32, %s14
          %s187 = ssub.s32 4096, 4096
          %188 = vsyncadd %s181, %s187
          %s189 = smul.addr %s185, 128
          %s190 = scalar_lea.hbm %s0, %s189
          %s191 = sshll.u32 %s184, 4
          %s192 = int_to_ptr.vmem [resolvable:$true] %s191
          %197 = dma.hbm_to_vmem [thread:$0]  %s190, 4096, %s192, %s181, 128, 128, 8
        $region32: #{tpu_custom_call.1} parent=27 // pred_fallthru
          _
      $region28: #{tpu_custom_call.1} parent=5 // pred_fallthru
        _
      %p198 = scmp.le.s32.totalorder 1, %s14
      %p199 = scmp.lt.s32.totalorder %s14, 3
      %p200 = pnand %p198, %p199
      %p201 = pneg %p200
      // Predicated region
      $region33: #{tpu_custom_call.1} parent=5 // pred_check
        _
      $region34: #{tpu_custom_call.1} parent=5 // pred_check_branch
        %203 = sbr.rel (%p200) target = $region36
      $region35: #{tpu_custom_call.1} parent=5 // pred_region
        %s204 = ssub.s32 %s14, 1
        %s205 = sand.u32 %s27, 1
        %s206 = scalar_lea.sflag [#allocation3], %s205
        %s207 = sand.u32 %s27, 1
        %s208 = smul.addr %s207, 256
        %s209 = scalar_lea.vmem [#allocation2], %s208
        // Predicated region
        $region37: #{tpu_custom_call.1} parent=35 // pred_check
          %p210 = pneg %p40
        $region38: #{tpu_custom_call.1} parent=35 // pred_check_branch
          %212 = sbr.rel (%p210) target = $region40
        $region39: #{tpu_custom_call.1} parent=35 // pred_region
          %213 = dma.done %s206, 4096
        $region40: #{tpu_custom_call.1} parent=35 // pred_fallthru
          _
        // Predicated region
        $region41: #{tpu_custom_call.1} parent=35 // pred_check
          %p214 = pneg %p61
        $region42: #{tpu_custom_call.1} parent=35 // pred_check_branch
          %216 = sbr.rel (%p214) target = $region44
        $region43: #{tpu_custom_call.1} parent=35 // pred_region
          %217 = dma.done [#allocation5], 256
        $region44: #{tpu_custom_call.1} parent=35 // pred_fallthru
          _
        // Predicated region
        $region45: #{tpu_custom_call.1} parent=35 // pred_check
          %p218 = pneg %p82
        $region46: #{tpu_custom_call.1} parent=35 // pred_check_branch
          %220 = sbr.rel (%p218) target = $region48
        $region47: #{tpu_custom_call.1} parent=35 // pred_region
          %221 = dma.done [#allocation5], 256
        $region48: #{tpu_custom_call.1} parent=35 // pred_fallthru
          _
        %s222 = sand.u32 %s27, 1
        %s223 = scalar_lea.sflag [#allocation3], %s222
        %s224 = sand.u32 %s27, 1
        %s225 = smul.addr %s224, 256
        %s226 = scalar_lea.vmem [#allocation2], %s225
        %p227 = pneg %p40
        %p228 = pneg %p37
        %p229 = pneg %p61
        %p230 = pneg %p58
        %p231 = pneg %p82
        %p232 = pneg %p79
        %p233 = pneg %p103
        %p234 = pneg %p100
        %p235 = pneg %p129
        %p236 = pneg %p126
        %s237 = smul.u32 32, %s19
        %p238 = scmp.lt.s32.totalorder %s237, 63
        %s239 = scalar_select %p238, %s237, 63
        %s240 = smul.addr %s239, 8
        %s241 = scalar_lea.vmem %s4, %s240
        %s242 = smul.u32 32, %s19
        %s243 = smul.u32 32, %s19
        %p244 = scmp.lt.s32.totalorder %s243, 63
        %s245 = scalar_select %p244, %s243, 63
        %s246 = smul.addr %s245, 8
        %s247 = scalar_lea.vmem %s4, %s246
        %s248 = smul.u32 32, %s19
        %v249 = vld [vmem:[%s209] sm:$0xff]
        %v250 = vld [vmem:[%s209 + $0x8] sm:$0xff]
        %v251 = vld [vmem:[%s209 + $0x10] sm:$0xff]
        %v252 = vld [vmem:[%s209 + $0x18] sm:$0xff]
        %v253 = vld [vmem:[%s209 + $0x20] sm:$0xff]
        %v254 = vld [vmem:[%s209 + $0x28] sm:$0xff]
        %v255 = vld [vmem:[%s209 + $0x30] sm:$0xff]
        %v256 = vld [vmem:[%s209 + $0x38] sm:$0xff]
        %v257 = vld [vmem:[%s209 + $0x40] sm:$0xff]
        %v258 = vld [vmem:[%s209 + $0x48] sm:$0xff]
        %v259 = vld [vmem:[%s209 + $0x50] sm:$0xff]
        %v260 = vld [vmem:[%s209 + $0x58] sm:$0xff]
        %v261 = vld [vmem:[%s209 + $0x60] sm:$0xff]
        %v262 = vld [vmem:[%s209 + $0x68] sm:$0xff]
        %v263 = vld [vmem:[%s209 + $0x70] sm:$0xff]
        %v264 = vld [vmem:[%s209 + $0x78] sm:$0xff]
        %v265 = vld [vmem:[%s209 + $0x80] sm:$0xff]
        %v266 = vld [vmem:[%s209 + $0x88] sm:$0xff]
        %v267 = vld [vmem:[%s209 + $0x90] sm:$0xff]
        %v268 = vld [vmem:[%s209 + $0x98] sm:$0xff]
        %v269 = vld [vmem:[%s209 + $0xa0] sm:$0xff]
        %v270 = vld [vmem:[%s209 + $0xa8] sm:$0xff]
        %v271 = vld [vmem:[%s209 + $0xb0] sm:$0xff]
        %v272 = vld [vmem:[%s209 + $0xb8] sm:$0xff]
        %v273 = vld [vmem:[%s209 + $0xc0] sm:$0xff]
        %v274 = vld [vmem:[%s209 + $0xc8] sm:$0xff]
        %v275 = vld [vmem:[%s209 + $0xd0] sm:$0xff]
        %v276 = vld [vmem:[%s209 + $0xd8] sm:$0xff]
        %v277 = vld [vmem:[%s209 + $0xe0] sm:$0xff]
        %v278 = vld [vmem:[%s209 + $0xe8] sm:$0xff]
        %v279 = vld [vmem:[%s209 + $0xf0] sm:$0xff]
        %v280 = vld [vmem:[%s209 + $0xf8] sm:$0xff]
        %v281 = vmul.f32 %v249, %v249
        %v282 = vmul.f32 %v250, %v250
        %v283 = vmul.f32 %v251, %v251
        %v284 = vmul.f32 %v252, %v252
        %v285 = vmul.f32 %v253, %v253
        %v286 = vmul.f32 %v254, %v254
        %v287 = vmul.f32 %v255, %v255
        %v288 = vmul.f32 %v256, %v256
        %v289 = vmul.f32 %v257, %v257
        %v290 = vmul.f32 %v258, %v258
        %v291 = vmul.f32 %v259, %v259
        %v292 = vmul.f32 %v260, %v260
        %v293 = vmul.f32 %v261, %v261
        %v294 = vmul.f32 %v262, %v262
        %v295 = vmul.f32 %v263, %v263
        %v296 = vmul.f32 %v264, %v264
        %v297 = vmul.f32 %v265, %v265
        %v298 = vmul.f32 %v266, %v266
        %v299 = vmul.f32 %v267, %v267
        %v300 = vmul.f32 %v268, %v268
        %v301 = vmul.f32 %v269, %v269
        %v302 = vmul.f32 %v270, %v270
        %v303 = vmul.f32 %v271, %v271
        %v304 = vmul.f32 %v272, %v272
        %v305 = vmul.f32 %v273, %v273
        %v306 = vmul.f32 %v274, %v274
        %v307 = vmul.f32 %v275, %v275
        %v308 = vmul.f32 %v276, %v276
        %v309 = vmul.f32 %v277, %v277
        %v310 = vmul.f32 %v278, %v278
        %v311 = vmul.f32 %v279, %v279
        %v312 = vmul.f32 %v280, %v280
        %v313 = vld [vmem:[#allocation4] sm:$0xff]
        %v314 = vld [vmem:[#allocation4 + $0x8] sm:$0xff]
        %315 = vmatprep.subr.mxu0 0.0
        %316 = vmatpush1.xpose.msra.mxu0 0.0
        %317 = vmatprep.subr.mxu0 0.0
        %318 = vmatpush1.xpose.msra.mxu0 0.0
        %319 = vmatprep.subr.mxu0 0.0
        %320 = vmatpush1.xpose.msra.mxu0 0.0
        %321 = vmatprep.subr.mxu0 0.0
        %322 = vmatpush1.xpose.msra.mxu0 0.0
        %323 = vmatprep.subr.mxu0 0.0
        %324 = vmatpush1.xpose.msra.mxu0 0.0
        %325 = vmatprep.subr.mxu0 0.0
        %326 = vmatpush1.xpose.msra.mxu0 0.0
        %327 = vmatprep.subr.mxu0 0.0
        %328 = vmatpush1.xpose.msra.mxu0 0.0
        %329 = vmatprep.subr.mxu0 0.0
        %330 = vmatpush1.xpose.msra.mxu0 0.0
        %331 = vmatprep.subr.mxu0 0.0
        %332 = vmatpush1.xpose.msra.mxu0 0.0
        %333 = vmatprep.subr.mxu0 0.0
        %334 = vmatpush1.xpose.msra.mxu0 0.0
        %335 = vmatprep.subr.mxu0 0.0
        %336 = vmatpush1.xpose.msra.mxu0 0.0
        %337 = vmatprep.subr.mxu0 0.0
        %338 = vmatpush1.xpose.msra.mxu0 0.0
        %339 = vmatprep.subr.mxu0 0.0
        %340 = vmatpush1.xpose.msra.mxu0 0.0
        %341 = vmatprep.subr.mxu0 0.0
        %342 = vmatpush1.xpose.msra.mxu0 0.0
        %343 = vmatprep.subr.mxu0 0.0
        %v344 = vand.u32 %v314, 4294901760
        %345 = vmatpush1.xpose.msra.mxu0 %v344
        %346 = vmatprep.subr.mxu0 0.0
        %v347 = vand.u32 %v313, 4294901760
        %348 = vmatpush1.xpose.msra.mxu0 %v347
        %349 = vmatprep.subr.mxu0 0.0
        %350 = vmatpush2.xpose.msra.mxu0 0.0
        %351 = vmatprep.subr.mxu0 0.0
        %352 = vmatpush2.xpose.msra.mxu0 0.0
        %353 = vmatprep.subr.mxu0 0.0
        %354 = vmatpush2.xpose.msra.mxu0 0.0
        %355 = vmatprep.subr.mxu0 0.0
        %356 = vmatpush2.xpose.msra.mxu0 0.0
        %357 = vmatprep.subr.mxu0 0.0
        %358 = vmatpush2.xpose.msra.mxu0 0.0
        %359 = vmatprep.subr.mxu0 0.0
        %360 = vmatpush2.xpose.msra.mxu0 0.0
        %361 = vmatprep.subr.mxu0 0.0
        %362 = vmatpush2.xpose.msra.mxu0 0.0
        %363 = vmatprep.subr.mxu0 0.0
        %364 = vmatpush2.xpose.msra.mxu0 0.0
        %365 = vmatprep.subr.mxu0 0.0
        %366 = vmatpush2.xpose.msra.mxu0 0.0
        %367 = vmatprep.subr.mxu0 0.0
        %368 = vmatpush2.xpose.msra.mxu0 0.0
        %369 = vmatprep.subr.mxu0 0.0
        %370 = vmatpush2.xpose.msra.mxu0 0.0
        %371 = vmatprep.subr.mxu0 0.0
        %372 = vmatpush2.xpose.msra.mxu0 0.0
        %373 = vmatprep.subr.mxu0 0.0
        %374 = vmatpush2.xpose.msra.mxu0 0.0
        %375 = vmatprep.subr.mxu0 0.0
        %376 = vmatpush2.xpose.msra.mxu0 0.0
        %377 = vmatprep.subr.mxu0 0.0
        %378 = vmatpush2.xpose.msra.mxu0 0.0
        %379 = vmatprep.subr.mxu0 0.0
        %380 = vmatpush2.xpose.msra.mxu0 0.0
        %381 = vmatprep.mubr.f32.mxu0 0.0
        %v382 = vand.u32 %v281, 4294901760
        %v383 = vsub.f32 %v281, %v382
        %v384 = vand.u32 %v383, 4294901760
        %v385 = vsub.f32 %v383, %v384
        %v386 = vand.u32 %v385, 4294901760
        %387 = vmatmul.mubr.f32.gmra.mxu0 %v386
        %v388 = vpop.f32.mrf.mxu0
        %v389 = vadd.f32 0.0, %v388
        %v390 = vpop.f32.mrf.mxu0
        %391 = vmatprep.mubr.f32.mxu0 0.0
        %v392 = vand.u32 %v282, 4294901760
        %v393 = vsub.f32 %v282, %v392
        %v394 = vand.u32 %v393, 4294901760
        %v395 = vsub.f32 %v393, %v394
        %v396 = vand.u32 %v395, 4294901760
        %397 = vmatmul.mubr.f32.gmra.mxu0 %v396
        %v398 = vpop.f32.mrf.mxu0
        %v399 = vadd.f32 0.0, %v398
        %v400 = vpop.f32.mrf.mxu0
        %401 = vmatprep.mubr.f32.mxu0 0.0
        %v402 = vand.u32 %v283, 4294901760
        %v403 = vsub.f32 %v283, %v402
        %v404 = vand.u32 %v403, 4294901760
        %v405 = vsub.f32 %v403, %v404
        %v406 = vand.u32 %v405, 4294901760
        %407 = vmatmul.mubr.f32.gmra.mxu0 %v406
        %v408 = vpop.f32.mrf.mxu0
        %v409 = vadd.f32 0.0, %v408
        %v410 = vpop.f32.mrf.mxu0
        %411 = vmatprep.mubr.f32.mxu0 0.0
        %v412 = vand.u32 %v284, 4294901760
        %v413 = vsub.f32 %v284, %v412
        %v414 = vand.u32 %v413, 4294901760
        %v415 = vsub.f32 %v413, %v414
        %v416 = vand.u32 %v415, 4294901760
        %417 = vmatmul.mubr.f32.gmra.mxu0 %v416
        %v418 = vpop.f32.mrf.mxu0
        %v419 = vadd.f32 0.0, %v418
        %v420 = vpop.f32.mrf.mxu0
        %421 = vmatprep.mubr.f32.mxu0 0.0
        %v422 = vand.u32 %v285, 4294901760
        %v423 = vsub.f32 %v285, %v422
        %v424 = vand.u32 %v423, 4294901760
        %v425 = vsub.f32 %v423, %v424
        %v426 = vand.u32 %v425, 4294901760
        %427 = vmatmul.mubr.f32.gmra.mxu0 %v426
        %v428 = vpop.f32.mrf.mxu0
        %v429 = vadd.f32 0.0, %v428
        %v430 = vpop.f32.mrf.mxu0
        %431 = vmatprep.mubr.f32.mxu0 0.0
        %v432 = vand.u32 %v286, 4294901760
        %v433 = vsub.f32 %v286, %v432
        %v434 = vand.u32 %v433, 4294901760
        %v435 = vsub.f32 %v433, %v434
        %v436 = vand.u32 %v435, 4294901760
        %437 = vmatmul.mubr.f32.gmra.mxu0 %v436
        %v438 = vpop.f32.mrf.mxu0
        %v439 = vadd.f32 0.0, %v438
        %v440 = vpop.f32.mrf.mxu0
        %441 = vmatprep.mubr.f32.mxu0 0.0
        %v442 = vand.u32 %v287, 4294901760
        %v443 = vsub.f32 %v287, %v442
        %v444 = vand.u32 %v443, 4294901760
        %v445 = vsub.f32 %v443, %v444
        %v446 = vand.u32 %v445, 4294901760
        %447 = vmatmul.mubr.f32.gmra.mxu0 %v446
        %v448 = vpop.f32.mrf.mxu0
        %v449 = vadd.f32 0.0, %v448
        %v450 = vpop.f32.mrf.mxu0
        %451 = vmatprep.mubr.f32.mxu0 0.0
        %v452 = vand.u32 %v288, 4294901760
        %v453 = vsub.f32 %v288, %v452
        %v454 = vand.u32 %v453, 4294901760
        %v455 = vsub.f32 %v453, %v454
        %v456 = vand.u32 %v455, 4294901760
        %457 = vmatmul.mubr.f32.gmra.mxu0 %v456
        %v458 = vpop.f32.mrf.mxu0
        %v459 = vadd.f32 0.0, %v458
        %v460 = vpop.f32.mrf.mxu0
        %461 = vmatprep.mubr.f32.mxu0 0.0
        %v462 = vand.u32 %v289, 4294901760
        %v463 = vsub.f32 %v289, %v462
        %v464 = vand.u32 %v463, 4294901760
        %v465 = vsub.f32 %v463, %v464
        %v466 = vand.u32 %v465, 4294901760
        %467 = vmatmul.mubr.f32.gmra.mxu0 %v466
        %v468 = vpop.f32.mrf.mxu0
        %v469 = vadd.f32 0.0, %v468
        %v470 = vpop.f32.mrf.mxu0
        %471 = vmatprep.mubr.f32.mxu0 0.0
        %v472 = vand.u32 %v290, 4294901760
        %v473 = vsub.f32 %v290, %v472
        %v474 = vand.u32 %v473, 4294901760
        %v475 = vsub.f32 %v473, %v474
        %v476 = vand.u32 %v475, 4294901760
        %477 = vmatmul.mubr.f32.gmra.mxu0 %v476
        %v478 = vpop.f32.mrf.mxu0
        %v479 = vadd.f32 0.0, %v478
        %v480 = vpop.f32.mrf.mxu0
        %481 = vmatprep.mubr.f32.mxu0 0.0
        %v482 = vand.u32 %v291, 4294901760
        %v483 = vsub.f32 %v291, %v482
        %v484 = vand.u32 %v483, 4294901760
        %v485 = vsub.f32 %v483, %v484
        %v486 = vand.u32 %v485, 4294901760
        %487 = vmatmul.mubr.f32.gmra.mxu0 %v486
        %v488 = vpop.f32.mrf.mxu0
        %v489 = vadd.f32 0.0, %v488
        %v490 = vpop.f32.mrf.mxu0
        %491 = vmatprep.mubr.f32.mxu0 0.0
        %v492 = vand.u32 %v292, 4294901760
        %v493 = vsub.f32 %v292, %v492
        %v494 = vand.u32 %v493, 4294901760
        %v495 = vsub.f32 %v493, %v494
        %v496 = vand.u32 %v495, 4294901760
        %497 = vmatmul.mubr.f32.gmra.mxu0 %v496
        %v498 = vpop.f32.mrf.mxu0
        %v499 = vadd.f32 0.0, %v498
        %v500 = vpop.f32.mrf.mxu0
        %501 = vmatprep.mubr.f32.mxu0 0.0
        %v502 = vand.u32 %v293, 4294901760
        %v503 = vsub.f32 %v293, %v502
        %v504 = vand.u32 %v503, 4294901760
        %v505 = vsub.f32 %v503, %v504
        %v506 = vand.u32 %v505, 4294901760
        %507 = vmatmul.mubr.f32.gmra.mxu0 %v506
        %v508 = vpop.f32.mrf.mxu0
        %v509 = vadd.f32 0.0, %v508
        %v510 = vpop.f32.mrf.mxu0
        %511 = vmatprep.mubr.f32.mxu0 0.0
        %v512 = vand.u32 %v294, 4294901760
        %v513 = vsub.f32 %v294, %v512
        %v514 = vand.u32 %v513, 4294901760
        %v515 = vsub.f32 %v513, %v514
        %v516 = vand.u32 %v515, 4294901760
        %517 = vmatmul.mubr.f32.gmra.mxu0 %v516
        %v518 = vpop.f32.mrf.mxu0
        %v519 = vadd.f32 0.0, %v518
        %v520 = vpop.f32.mrf.mxu0
        %521 = vmatprep.mubr.f32.mxu0 0.0
        %v522 = vand.u32 %v295, 4294901760
        %v523 = vsub.f32 %v295, %v522
        %v524 = vand.u32 %v523, 4294901760
        %v525 = vsub.f32 %v523, %v524
        %v526 = vand.u32 %v525, 4294901760
        %527 = vmatmul.mubr.f32.gmra.mxu0 %v526
        %v528 = vpop.f32.mrf.mxu0
        %v529 = vadd.f32 0.0, %v528
        %v530 = vpop.f32.mrf.mxu0
        %531 = vmatprep.mubr.f32.mxu0 0.0
        %v532 = vand.u32 %v296, 4294901760
        %v533 = vsub.f32 %v296, %v532
        %v534 = vand.u32 %v533, 4294901760
        %v535 = vsub.f32 %v533, %v534
        %v536 = vand.u32 %v535, 4294901760
        %537 = vmatmul.mubr.f32.gmra.mxu0 %v536
        %v538 = vpop.f32.mrf.mxu0
        %v539 = vadd.f32 0.0, %v538
        %v540 = vpop.f32.mrf.mxu0
        %541 = vmatprep.mubr.f32.mxu0 0.0
        %v542 = vand.u32 %v297, 4294901760
        %v543 = vsub.f32 %v297, %v542
        %v544 = vand.u32 %v543, 4294901760
        %v545 = vsub.f32 %v543, %v544
        %v546 = vand.u32 %v545, 4294901760
        %547 = vmatmul.mubr.f32.gmra.mxu0 %v546
        %v548 = vpop.f32.mrf.mxu0
        %v549 = vadd.f32 0.0, %v548
        %v550 = vpop.f32.mrf.mxu0
        %551 = vmatprep.mubr.f32.mxu0 0.0
        %v552 = vand.u32 %v298, 4294901760
        %v553 = vsub.f32 %v298, %v552
        %v554 = vand.u32 %v553, 4294901760
        %v555 = vsub.f32 %v553, %v554
        %v556 = vand.u32 %v555, 4294901760
        %557 = vmatmul.mubr.f32.gmra.mxu0 %v556
        %v558 = vpop.f32.mrf.mxu0
        %v559 = vadd.f32 0.0, %v558
        %v560 = vpop.f32.mrf.mxu0
        %561 = vmatprep.mubr.f32.mxu0 0.0
        %v562 = vand.u32 %v299, 4294901760
        %v563 = vsub.f32 %v299, %v562
        %v564 = vand.u32 %v563, 4294901760
        %v565 = vsub.f32 %v563, %v564
        %v566 = vand.u32 %v565, 4294901760
        %567 = vmatmul.mubr.f32.gmra.mxu0 %v566
        %v568 = vpop.f32.mrf.mxu0
        %v569 = vadd.f32 0.0, %v568
        %v570 = vpop.f32.mrf.mxu0
        %571 = vmatprep.mubr.f32.mxu0 0.0
        %v572 = vand.u32 %v300, 4294901760
        %v573 = vsub.f32 %v300, %v572
        %v574 = vand.u32 %v573, 4294901760
        %v575 = vsub.f32 %v573, %v574
        %v576 = vand.u32 %v575, 4294901760
        %577 = vmatmul.mubr.f32.gmra.mxu0 %v576
        %v578 = vpop.f32.mrf.mxu0
        %v579 = vadd.f32 0.0, %v578
        %v580 = vpop.f32.mrf.mxu0
        %581 = vmatprep.mubr.f32.mxu0 0.0
        %v582 = vand.u32 %v301, 4294901760
        %v583 = vsub.f32 %v301, %v582
        %v584 = vand.u32 %v583, 4294901760
        %v585 = vsub.f32 %v583, %v584
        %v586 = vand.u32 %v585, 4294901760
        %587 = vmatmul.mubr.f32.gmra.mxu0 %v586
        %v588 = vpop.f32.mrf.mxu0
        %v589 = vadd.f32 0.0, %v588
        %v590 = vpop.f32.mrf.mxu0
        %591 = vmatprep.mubr.f32.mxu0 0.0
        %v592 = vand.u32 %v302, 4294901760
        %v593 = vsub.f32 %v302, %v592
        %v594 = vand.u32 %v593, 4294901760
        %v595 = vsub.f32 %v593, %v594
        %v596 = vand.u32 %v595, 4294901760
        %597 = vmatmul.mubr.f32.gmra.mxu0 %v596
        %v598 = vpop.f32.mrf.mxu0
        %v599 = vadd.f32 0.0, %v598
        %v600 = vpop.f32.mrf.mxu0
        %601 = vmatprep.mubr.f32.mxu0 0.0
        %v602 = vand.u32 %v303, 4294901760
        %v603 = vsub.f32 %v303, %v602
        %v604 = vand.u32 %v603, 4294901760
        %v605 = vsub.f32 %v603, %v604
        %v606 = vand.u32 %v605, 4294901760
        %607 = vmatmul.mubr.f32.gmra.mxu0 %v606
        %v608 = vpop.f32.mrf.mxu0
        %v609 = vadd.f32 0.0, %v608
        %v610 = vpop.f32.mrf.mxu0
        %611 = vmatprep.mubr.f32.mxu0 0.0
        %v612 = vand.u32 %v304, 4294901760
        %v613 = vsub.f32 %v304, %v612
        %v614 = vand.u32 %v613, 4294901760
        %v615 = vsub.f32 %v613, %v614
        %v616 = vand.u32 %v615, 4294901760
        %617 = vmatmul.mubr.f32.gmra.mxu0 %v616
        %v618 = vpop.f32.mrf.mxu0
        %v619 = vadd.f32 0.0, %v618
        %v620 = vpop.f32.mrf.mxu0
        %621 = vmatprep.mubr.f32.mxu0 0.0
        %v622 = vand.u32 %v305, 4294901760
        %v623 = vsub.f32 %v305, %v622
        %v624 = vand.u32 %v623, 4294901760
        %v625 = vsub.f32 %v623, %v624
        %v626 = vand.u32 %v625, 4294901760
        %627 = vmatmul.mubr.f32.gmra.mxu0 %v626
        %v628 = vpop.f32.mrf.mxu0
        %v629 = vadd.f32 0.0, %v628
        %v630 = vpop.f32.mrf.mxu0
        %631 = vmatprep.mubr.f32.mxu0 0.0
        %v632 = vand.u32 %v306, 4294901760
        %v633 = vsub.f32 %v306, %v632
        %v634 = vand.u32 %v633, 4294901760
        %v635 = vsub.f32 %v633, %v634
        %v636 = vand.u32 %v635, 4294901760
        %637 = vmatmul.mubr.f32.gmra.mxu0 %v636
        %v638 = vpop.f32.mrf.mxu0
        %v639 = vadd.f32 0.0, %v638
        %v640 = vpop.f32.mrf.mxu0
        %641 = vmatprep.mubr.f32.mxu0 0.0
        %v642 = vand.u32 %v307, 4294901760
        %v643 = vsub.f32 %v307, %v642
        %v644 = vand.u32 %v643, 4294901760
        %v645 = vsub.f32 %v643, %v644
        %v646 = vand.u32 %v645, 4294901760
        %647 = vmatmul.mubr.f32.gmra.mxu0 %v646
        %v648 = vpop.f32.mrf.mxu0
        %v649 = vadd.f32 0.0, %v648
        %v650 = vpop.f32.mrf.mxu0
        %651 = vmatprep.mubr.f32.mxu0 0.0
        %v652 = vand.u32 %v308, 4294901760
        %v653 = vsub.f32 %v308, %v652
        %v654 = vand.u32 %v653, 4294901760
        %v655 = vsub.f32 %v653, %v654
        %v656 = vand.u32 %v655, 4294901760
        %657 = vmatmul.mubr.f32.gmra.mxu0 %v656
        %v658 = vpop.f32.mrf.mxu0
        %v659 = vadd.f32 0.0, %v658
        %v660 = vpop.f32.mrf.mxu0
        %661 = vmatprep.mubr.f32.mxu0 0.0
        %v662 = vand.u32 %v309, 4294901760
        %v663 = vsub.f32 %v309, %v662
        %v664 = vand.u32 %v663, 4294901760
        %v665 = vsub.f32 %v663, %v664
        %v666 = vand.u32 %v665, 4294901760
        %667 = vmatmul.mubr.f32.gmra.mxu0 %v666
        %v668 = vpop.f32.mrf.mxu0
        %v669 = vadd.f32 0.0, %v668
        %v670 = vpop.f32.mrf.mxu0
        %671 = vmatprep.mubr.f32.mxu0 0.0
        %v672 = vand.u32 %v310, 4294901760
        %v673 = vsub.f32 %v310, %v672
        %v674 = vand.u32 %v673, 4294901760
        %v675 = vsub.f32 %v673, %v674
        %v676 = vand.u32 %v675, 4294901760
        %677 = vmatmul.mubr.f32.gmra.mxu0 %v676
        %v678 = vpop.f32.mrf.mxu0
        %v679 = vadd.f32 0.0, %v678
        %v680 = vpop.f32.mrf.mxu0
        %681 = vmatprep.mubr.f32.mxu0 0.0
        %v682 = vand.u32 %v311, 4294901760
        %v683 = vsub.f32 %v311, %v682
        %v684 = vand.u32 %v683, 4294901760
        %v685 = vsub.f32 %v683, %v684
        %v686 = vand.u32 %v685, 4294901760
        %687 = vmatmul.mubr.f32.gmra.mxu0 %v686
        %v688 = vpop.f32.mrf.mxu0
        %v689 = vadd.f32 0.0, %v688
        %v690 = vpop.f32.mrf.mxu0
        %691 = vmatprep.mubr.f32.mxu0 0.0
        %v692 = vand.u32 %v312, 4294901760
        %v693 = vsub.f32 %v312, %v692
        %v694 = vand.u32 %v693, 4294901760
        %v695 = vsub.f32 %v693, %v694
        %v696 = vand.u32 %v695, 4294901760
        %697 = vmatmul.mubr.f32.gmra.mxu0 %v696
        %v698 = vpop.f32.mrf.mxu0
        %v699 = vadd.f32 0.0, %v698
        %v700 = vpop.f32.mrf.mxu0
        %701 = vdwg.mxu0
        %702 = vmatprep.subr.mxu0 0.0
        %703 = vmatpush1.xpose.msra.mxu0 0.0
        %704 = vmatprep.subr.mxu0 0.0
        %705 = vmatpush1.xpose.msra.mxu0 0.0
        %706 = vmatprep.subr.mxu0 0.0
        %707 = vmatpush1.xpose.msra.mxu0 0.0
        %708 = vmatprep.subr.mxu0 0.0
        %709 = vmatpush1.xpose.msra.mxu0 0.0
        %710 = vmatprep.subr.mxu0 0.0
        %711 = vmatpush1.xpose.msra.mxu0 0.0
        %712 = vmatprep.subr.mxu0 0.0
        %713 = vmatpush1.xpose.msra.mxu0 0.0
        %714 = vmatprep.subr.mxu0 0.0
        %715 = vmatpush1.xpose.msra.mxu0 0.0
        %716 = vmatprep.subr.mxu0 0.0
        %717 = vmatpush1.xpose.msra.mxu0 0.0
        %718 = vmatprep.subr.mxu0 0.0
        %719 = vmatpush1.xpose.msra.mxu0 0.0
        %720 = vmatprep.subr.mxu0 0.0
        %721 = vmatpush1.xpose.msra.mxu0 0.0
        %722 = vmatprep.subr.mxu0 0.0
        %723 = vmatpush1.xpose.msra.mxu0 0.0
        %724 = vmatprep.subr.mxu0 0.0
        %725 = vmatpush1.xpose.msra.mxu0 0.0
        %726 = vmatprep.subr.mxu0 0.0
        %727 = vmatpush1.xpose.msra.mxu0 0.0
        %728 = vmatprep.subr.mxu0 0.0
        %729 = vmatpush1.xpose.msra.mxu0 0.0
        %730 = vmatprep.subr.mxu0 0.0
        %v731 = vand.u32 %v314, 4294901760
        %v732 = vsub.f32 %v314, %v731
        %v733 = vand.u32 %v732, 4294901760
        %v734 = vsub.f32 %v732, %v733
        %v735 = vand.u32 %v734, 4294901760
        %736 = vmatpush1.xpose.msra.mxu0 %v735
        %737 = vmatprep.subr.mxu0 0.0
        %v738 = vand.u32 %v313, 4294901760
        %v739 = vsub.f32 %v313, %v738
        %v740 = vand.u32 %v739, 4294901760
        %v741 = vsub.f32 %v739, %v740
        %v742 = vand.u32 %v741, 4294901760
        %743 = vmatpush1.xpose.msra.mxu0 %v742
        %744 = vmatprep.subr.mxu0 0.0
        %745 = vmatpush2.xpose.msra.mxu0 0.0
        %746 = vmatprep.subr.mxu0 0.0
        %747 = vmatpush2.xpose.msra.mxu0 0.0
        %748 = vmatprep.subr.mxu0 0.0
        %749 = vmatpush2.xpose.msra.mxu0 0.0
        %750 = vmatprep.subr.mxu0 0.0
        %751 = vmatpush2.xpose.msra.mxu0 0.0
        %752 = vmatprep.subr.mxu0 0.0
        %753 = vmatpush2.xpose.msra.mxu0 0.0
        %754 = vmatprep.subr.mxu0 0.0
        %755 = vmatpush2.xpose.msra.mxu0 0.0
        %756 = vmatprep.subr.mxu0 0.0
        %757 = vmatpush2.xpose.msra.mxu0 0.0
        %758 = vmatprep.subr.mxu0 0.0
        %759 = vmatpush2.xpose.msra.mxu0 0.0
        %760 = vmatprep.subr.mxu0 0.0
        %761 = vmatpush2.xpose.msra.mxu0 0.0
        %762 = vmatprep.subr.mxu0 0.0
        %763 = vmatpush2.xpose.msra.mxu0 0.0
        %764 = vmatprep.subr.mxu0 0.0
        %765 = vmatpush2.xpose.msra.mxu0 0.0
        %766 = vmatprep.subr.mxu0 0.0
        %767 = vmatpush2.xpose.msra.mxu0 0.0
        %768 = vmatprep.subr.mxu0 0.0
        %769 = vmatpush2.xpose.msra.mxu0 0.0
        %770 = vmatprep.subr.mxu0 0.0
        %771 = vmatpush2.xpose.msra.mxu0 0.0
        %772 = vmatprep.subr.mxu0 0.0
        %773 = vmatpush2.xpose.msra.mxu0 0.0
        %774 = vmatprep.subr.mxu0 0.0
        %775 = vmatpush2.xpose.msra.mxu0 0.0
        %776 = vmatprep.mubr.f32.mxu0 0.0
        %v777 = vand.u32 %v281, 4294901760
        %778 = vmatmul.mubr.f32.gmra.mxu0 %v777
        %v779 = vpop.f32.mrf.mxu0
        %v780 = vadd.f32 %v389, %v779
        %v781 = vpop.f32.mrf.mxu0
        %782 = vmatprep.mubr.f32.mxu0 0.0
        %v783 = vand.u32 %v282, 4294901760
        %784 = vmatmul.mubr.f32.gmra.mxu0 %v783
        %v785 = vpop.f32.mrf.mxu0
        %v786 = vadd.f32 %v399, %v785
        %v787 = vpop.f32.mrf.mxu0
        %788 = vmatprep.mubr.f32.mxu0 0.0
        %v789 = vand.u32 %v283, 4294901760
        %790 = vmatmul.mubr.f32.gmra.mxu0 %v789
        %v791 = vpop.f32.mrf.mxu0
        %v792 = vadd.f32 %v409, %v791
        %v793 = vpop.f32.mrf.mxu0
        %794 = vmatprep.mubr.f32.mxu0 0.0
        %v795 = vand.u32 %v284, 4294901760
        %796 = vmatmul.mubr.f32.gmra.mxu0 %v795
        %v797 = vpop.f32.mrf.mxu0
        %v798 = vadd.f32 %v419, %v797
        %v799 = vpop.f32.mrf.mxu0
        %800 = vmatprep.mubr.f32.mxu0 0.0
        %v801 = vand.u32 %v285, 4294901760
        %802 = vmatmul.mubr.f32.gmra.mxu0 %v801
        %v803 = vpop.f32.mrf.mxu0
        %v804 = vadd.f32 %v429, %v803
        %v805 = vpop.f32.mrf.mxu0
        %806 = vmatprep.mubr.f32.mxu0 0.0
        %v807 = vand.u32 %v286, 4294901760
        %808 = vmatmul.mubr.f32.gmra.mxu0 %v807
        %v809 = vpop.f32.mrf.mxu0
        %v810 = vadd.f32 %v439, %v809
        %v811 = vpop.f32.mrf.mxu0
        %812 = vmatprep.mubr.f32.mxu0 0.0
        %v813 = vand.u32 %v287, 4294901760
        %814 = vmatmul.mubr.f32.gmra.mxu0 %v813
        %v815 = vpop.f32.mrf.mxu0
        %v816 = vadd.f32 %v449, %v815
        %v817 = vpop.f32.mrf.mxu0
        %818 = vmatprep.mubr.f32.mxu0 0.0
        %v819 = vand.u32 %v288, 4294901760
        %820 = vmatmul.mubr.f32.gmra.mxu0 %v819
        %v821 = vpop.f32.mrf.mxu0
        %v822 = vadd.f32 %v459, %v821
        %v823 = vpop.f32.mrf.mxu0
        %824 = vmatprep.mubr.f32.mxu0 0.0
        %v825 = vand.u32 %v289, 4294901760
        %826 = vmatmul.mubr.f32.gmra.mxu0 %v825
        %v827 = vpop.f32.mrf.mxu0
        %v828 = vadd.f32 %v469, %v827
        %v829 = vpop.f32.mrf.mxu0
        %830 = vmatprep.mubr.f32.mxu0 0.0
        %v831 = vand.u32 %v290, 4294901760
        %832 = vmatmul.mubr.f32.gmra.mxu0 %v831
        %v833 = vpop.f32.mrf.mxu0
        %v834 = vadd.f32 %v479, %v833
        %v835 = vpop.f32.mrf.mxu0
        %836 = vmatprep.mubr.f32.mxu0 0.0
        %v837 = vand.u32 %v291, 4294901760
        %838 = vmatmul.mubr.f32.gmra.mxu0 %v837
        %v839 = vpop.f32.mrf.mxu0
        %v840 = vadd.f32 %v489, %v839
        %v841 = vpop.f32.mrf.mxu0
        %842 = vmatprep.mubr.f32.mxu0 0.0
        %v843 = vand.u32 %v292, 4294901760
        %844 = vmatmul.mubr.f32.gmra.mxu0 %v843
        %v845 = vpop.f32.mrf.mxu0
        %v846 = vadd.f32 %v499, %v845
        %v847 = vpop.f32.mrf.mxu0
        %848 = vmatprep.mubr.f32.mxu0 0.0
        %v849 = vand.u32 %v293, 4294901760
        %850 = vmatmul.mubr.f32.gmra.mxu0 %v849
        %v851 = vpop.f32.mrf.mxu0
        %v852 = vadd.f32 %v509, %v851
        %v853 = vpop.f32.mrf.mxu0
        %854 = vmatprep.mubr.f32.mxu0 0.0
        %v855 = vand.u32 %v294, 4294901760
        %856 = vmatmul.mubr.f32.gmra.mxu0 %v855
        %v857 = vpop.f32.mrf.mxu0
        %v858 = vadd.f32 %v519, %v857
        %v859 = vpop.f32.mrf.mxu0
        %860 = vmatprep.mubr.f32.mxu0 0.0
        %v861 = vand.u32 %v295, 4294901760
        %862 = vmatmul.mubr.f32.gmra.mxu0 %v861
        %v863 = vpop.f32.mrf.mxu0
        %v864 = vadd.f32 %v529, %v863
        %v865 = vpop.f32.mrf.mxu0
        %866 = vmatprep.mubr.f32.mxu0 0.0
        %v867 = vand.u32 %v296, 4294901760
        %868 = vmatmul.mubr.f32.gmra.mxu0 %v867
        %v869 = vpop.f32.mrf.mxu0
        %v870 = vadd.f32 %v539, %v869
        %v871 = vpop.f32.mrf.mxu0
        %872 = vmatprep.mubr.f32.mxu0 0.0
        %v873 = vand.u32 %v297, 4294901760
        %874 = vmatmul.mubr.f32.gmra.mxu0 %v873
        %v875 = vpop.f32.mrf.mxu0
        %v876 = vadd.f32 %v549, %v875
        %v877 = vpop.f32.mrf.mxu0
        %878 = vmatprep.mubr.f32.mxu0 0.0
        %v879 = vand.u32 %v298, 4294901760
        %880 = vmatmul.mubr.f32.gmra.mxu0 %v879
        %v881 = vpop.f32.mrf.mxu0
        %v882 = vadd.f32 %v559, %v881
        %v883 = vpop.f32.mrf.mxu0
        %884 = vmatprep.mubr.f32.mxu0 0.0
        %v885 = vand.u32 %v299, 4294901760
        %886 = vmatmul.mubr.f32.gmra.mxu0 %v885
        %v887 = vpop.f32.mrf.mxu0
        %v888 = vadd.f32 %v569, %v887
        %v889 = vpop.f32.mrf.mxu0
        %890 = vmatprep.mubr.f32.mxu0 0.0
        %v891 = vand.u32 %v300, 4294901760
        %892 = vmatmul.mubr.f32.gmra.mxu0 %v891
        %v893 = vpop.f32.mrf.mxu0
        %v894 = vadd.f32 %v579, %v893
        %v895 = vpop.f32.mrf.mxu0
        %896 = vmatprep.mubr.f32.mxu0 0.0
        %v897 = vand.u32 %v301, 4294901760
        %898 = vmatmul.mubr.f32.gmra.mxu0 %v897
        %v899 = vpop.f32.mrf.mxu0
        %v900 = vadd.f32 %v589, %v899
        %v901 = vpop.f32.mrf.mxu0
        %902 = vmatprep.mubr.f32.mxu0 0.0
        %v903 = vand.u32 %v302, 4294901760
        %904 = vmatmul.mubr.f32.gmra.mxu0 %v903
        %v905 = vpop.f32.mrf.mxu0
        %v906 = vadd.f32 %v599, %v905
        %v907 = vpop.f32.mrf.mxu0
        %908 = vmatprep.mubr.f32.mxu0 0.0
        %v909 = vand.u32 %v303, 4294901760
        %910 = vmatmul.mubr.f32.gmra.mxu0 %v909
        %v911 = vpop.f32.mrf.mxu0
        %v912 = vadd.f32 %v609, %v911
        %v913 = vpop.f32.mrf.mxu0
        %914 = vmatprep.mubr.f32.mxu0 0.0
        %v915 = vand.u32 %v304, 4294901760
        %916 = vmatmul.mubr.f32.gmra.mxu0 %v915
        %v917 = vpop.f32.mrf.mxu0
        %v918 = vadd.f32 %v619, %v917
        %v919 = vpop.f32.mrf.mxu0
        %920 = vmatprep.mubr.f32.mxu0 0.0
        %v921 = vand.u32 %v305, 4294901760
        %922 = vmatmul.mubr.f32.gmra.mxu0 %v921
        %v923 = vpop.f32.mrf.mxu0
        %v924 = vadd.f32 %v629, %v923
        %v925 = vpop.f32.mrf.mxu0
        %926 = vmatprep.mubr.f32.mxu0 0.0
        %v927 = vand.u32 %v306, 4294901760
        %928 = vmatmul.mubr.f32.gmra.mxu0 %v927
        %v929 = vpop.f32.mrf.mxu0
        %v930 = vadd.f32 %v639, %v929
        %v931 = vpop.f32.mrf.mxu0
        %932 = vmatprep.mubr.f32.mxu0 0.0
        %v933 = vand.u32 %v307, 4294901760
        %934 = vmatmul.mubr.f32.gmra.mxu0 %v933
        %v935 = vpop.f32.mrf.mxu0
        %v936 = vadd.f32 %v649, %v935
        %v937 = vpop.f32.mrf.mxu0
        %938 = vmatprep.mubr.f32.mxu0 0.0
        %v939 = vand.u32 %v308, 4294901760
        %940 = vmatmul.mubr.f32.gmra.mxu0 %v939
        %v941 = vpop.f32.mrf.mxu0
        %v942 = vadd.f32 %v659, %v941
        %v943 = vpop.f32.mrf.mxu0
        %944 = vmatprep.mubr.f32.mxu0 0.0
        %v945 = vand.u32 %v309, 4294901760
        %946 = vmatmul.mubr.f32.gmra.mxu0 %v945
        %v947 = vpop.f32.mrf.mxu0
        %v948 = vadd.f32 %v669, %v947
        %v949 = vpop.f32.mrf.mxu0
        %950 = vmatprep.mubr.f32.mxu0 0.0
        %v951 = vand.u32 %v310, 4294901760
        %952 = vmatmul.mubr.f32.gmra.mxu0 %v951
        %v953 = vpop.f32.mrf.mxu0
        %v954 = vadd.f32 %v679, %v953
        %v955 = vpop.f32.mrf.mxu0
        %956 = vmatprep.mubr.f32.mxu0 0.0
        %v957 = vand.u32 %v311, 4294901760
        %958 = vmatmul.mubr.f32.gmra.mxu0 %v957
        %v959 = vpop.f32.mrf.mxu0
        %v960 = vadd.f32 %v689, %v959
        %v961 = vpop.f32.mrf.mxu0
        %962 = vmatprep.mubr.f32.mxu0 0.0
        %v963 = vand.u32 %v312, 4294901760
        %964 = vmatmul.mubr.f32.gmra.mxu0 %v963
        %v965 = vpop.f32.mrf.mxu0
        %v966 = vadd.f32 %v699, %v965
        %v967 = vpop.f32.mrf.mxu0
        %968 = vdwg.mxu0
        %969 = vmatprep.subr.mxu0 0.0
        %970 = vmatpush1.xpose.msra.mxu0 0.0
        %971 = vmatprep.subr.mxu0 0.0
        %972 = vmatpush1.xpose.msra.mxu0 0.0
        %973 = vmatprep.subr.mxu0 0.0
        %974 = vmatpush1.xpose.msra.mxu0 0.0
        %975 = vmatprep.subr.mxu0 0.0
        %976 = vmatpush1.xpose.msra.mxu0 0.0
        %977 = vmatprep.subr.mxu0 0.0
        %978 = vmatpush1.xpose.msra.mxu0 0.0
        %979 = vmatprep.subr.mxu0 0.0
        %980 = vmatpush1.xpose.msra.mxu0 0.0
        %981 = vmatprep.subr.mxu0 0.0
        %982 = vmatpush1.xpose.msra.mxu0 0.0
        %983 = vmatprep.subr.mxu0 0.0
        %984 = vmatpush1.xpose.msra.mxu0 0.0
        %985 = vmatprep.subr.mxu0 0.0
        %986 = vmatpush1.xpose.msra.mxu0 0.0
        %987 = vmatprep.subr.mxu0 0.0
        %988 = vmatpush1.xpose.msra.mxu0 0.0
        %989 = vmatprep.subr.mxu0 0.0
        %990 = vmatpush1.xpose.msra.mxu0 0.0
        %991 = vmatprep.subr.mxu0 0.0
        %992 = vmatpush1.xpose.msra.mxu0 0.0
        %993 = vmatprep.subr.mxu0 0.0
        %994 = vmatpush1.xpose.msra.mxu0 0.0
        %995 = vmatprep.subr.mxu0 0.0
        %996 = vmatpush1.xpose.msra.mxu0 0.0
        %997 = vmatprep.subr.mxu0 0.0
        %v998 = vand.u32 %v314, 4294901760
        %v999 = vsub.f32 %v314, %v998
        %1000 = vmatpush1.xpose.msra.mxu0 %v999
        %1001 = vmatprep.subr.mxu0 0.0
        %v1002 = vand.u32 %v313, 4294901760
        %v1003 = vsub.f32 %v313, %v1002
        %1004 = vmatpush1.xpose.msra.mxu0 %v1003
        %1005 = vmatprep.subr.mxu0 0.0
        %1006 = vmatpush2.xpose.msra.mxu0 0.0
        %1007 = vmatprep.subr.mxu0 0.0
        %1008 = vmatpush2.xpose.msra.mxu0 0.0
        %1009 = vmatprep.subr.mxu0 0.0
        %1010 = vmatpush2.xpose.msra.mxu0 0.0
        %1011 = vmatprep.subr.mxu0 0.0
        %1012 = vmatpush2.xpose.msra.mxu0 0.0
        %1013 = vmatprep.subr.mxu0 0.0
        %1014 = vmatpush2.xpose.msra.mxu0 0.0
        %1015 = vmatprep.subr.mxu0 0.0
        %1016 = vmatpush2.xpose.msra.mxu0 0.0
        %1017 = vmatprep.subr.mxu0 0.0
        %1018 = vmatpush2.xpose.msra.mxu0 0.0
        %1019 = vmatprep.subr.mxu0 0.0
        %1020 = vmatpush2.xpose.msra.mxu0 0.0
        %1021 = vmatprep.subr.mxu0 0.0
        %1022 = vmatpush2.xpose.msra.mxu0 0.0
        %1023 = vmatprep.subr.mxu0 0.0
        %1024 = vmatpush2.xpose.msra.mxu0 0.0
        %1025 = vmatprep.subr.mxu0 0.0
        %1026 = vmatpush2.xpose.msra.mxu0 0.0
        %1027 = vmatprep.subr.mxu0 0.0
        %1028 = vmatpush2.xpose.msra.mxu0 0.0
        %1029 = vmatprep.subr.mxu0 0.0
        %1030 = vmatpush2.xpose.msra.mxu0 0.0
        %1031 = vmatprep.subr.mxu0 0.0
        %1032 = vmatpush2.xpose.msra.mxu0 0.0
        %1033 = vmatprep.subr.mxu0 0.0
        %1034 = vmatpush2.xpose.msra.mxu0 0.0
        %1035 = vmatprep.subr.mxu0 0.0
        %1036 = vmatpush2.xpose.msra.mxu0 0.0
        %1037 = vmatprep.mubr.f32.mxu0 0.0
        %v1038 = vand.u32 %v281, 4294901760
        %v1039 = vsub.f32 %v281, %v1038
        %1040 = vmatmul.mubr.f32.gmra.mxu0 %v1039
        %v1041 = vpop.f32.mrf.mxu0
        %v1042 = vadd.f32 %v780, %v1041
        %v1043 = vpop.f32.mrf.mxu0
        %1044 = vmatprep.mubr.f32.mxu0 0.0
        %v1045 = vand.u32 %v282, 4294901760
        %v1046 = vsub.f32 %v282, %v1045
        %1047 = vmatmul.mubr.f32.gmra.mxu0 %v1046
        %v1048 = vpop.f32.mrf.mxu0
        %v1049 = vadd.f32 %v786, %v1048
        %v1050 = vpop.f32.mrf.mxu0
        %1051 = vmatprep.mubr.f32.mxu0 0.0
        %v1052 = vand.u32 %v283, 4294901760
        %v1053 = vsub.f32 %v283, %v1052
        %1054 = vmatmul.mubr.f32.gmra.mxu0 %v1053
        %v1055 = vpop.f32.mrf.mxu0
        %v1056 = vadd.f32 %v792, %v1055
        %v1057 = vpop.f32.mrf.mxu0
        %1058 = vmatprep.mubr.f32.mxu0 0.0
        %v1059 = vand.u32 %v284, 4294901760
        %v1060 = vsub.f32 %v284, %v1059
        %1061 = vmatmul.mubr.f32.gmra.mxu0 %v1060
        %v1062 = vpop.f32.mrf.mxu0
        %v1063 = vadd.f32 %v798, %v1062
        %v1064 = vpop.f32.mrf.mxu0
        %1065 = vmatprep.mubr.f32.mxu0 0.0
        %v1066 = vand.u32 %v285, 4294901760
        %v1067 = vsub.f32 %v285, %v1066
        %1068 = vmatmul.mubr.f32.gmra.mxu0 %v1067
        %v1069 = vpop.f32.mrf.mxu0
        %v1070 = vadd.f32 %v804, %v1069
        %v1071 = vpop.f32.mrf.mxu0
        %1072 = vmatprep.mubr.f32.mxu0 0.0
        %v1073 = vand.u32 %v286, 4294901760
        %v1074 = vsub.f32 %v286, %v1073
        %1075 = vmatmul.mubr.f32.gmra.mxu0 %v1074
        %v1076 = vpop.f32.mrf.mxu0
        %v1077 = vadd.f32 %v810, %v1076
        %v1078 = vpop.f32.mrf.mxu0
        %1079 = vmatprep.mubr.f32.mxu0 0.0
        %v1080 = vand.u32 %v287, 4294901760
        %v1081 = vsub.f32 %v287, %v1080
        %1082 = vmatmul.mubr.f32.gmra.mxu0 %v1081
        %v1083 = vpop.f32.mrf.mxu0
        %v1084 = vadd.f32 %v816, %v1083
        %v1085 = vpop.f32.mrf.mxu0
        %1086 = vmatprep.mubr.f32.mxu0 0.0
        %v1087 = vand.u32 %v288, 4294901760
        %v1088 = vsub.f32 %v288, %v1087
        %1089 = vmatmul.mubr.f32.gmra.mxu0 %v1088
        %v1090 = vpop.f32.mrf.mxu0
        %v1091 = vadd.f32 %v822, %v1090
        %v1092 = vpop.f32.mrf.mxu0
        %1093 = vmatprep.mubr.f32.mxu0 0.0
        %v1094 = vand.u32 %v289, 4294901760
        %v1095 = vsub.f32 %v289, %v1094
        %1096 = vmatmul.mubr.f32.gmra.mxu0 %v1095
        %v1097 = vpop.f32.mrf.mxu0
        %v1098 = vadd.f32 %v828, %v1097
        %v1099 = vpop.f32.mrf.mxu0
        %1100 = vmatprep.mubr.f32.mxu0 0.0
        %v1101 = vand.u32 %v290, 4294901760
        %v1102 = vsub.f32 %v290, %v1101
        %1103 = vmatmul.mubr.f32.gmra.mxu0 %v1102
        %v1104 = vpop.f32.mrf.mxu0
        %v1105 = vadd.f32 %v834, %v1104
        %v1106 = vpop.f32.mrf.mxu0
        %1107 = vmatprep.mubr.f32.mxu0 0.0
        %v1108 = vand.u32 %v291, 4294901760
        %v1109 = vsub.f32 %v291, %v1108
        %1110 = vmatmul.mubr.f32.gmra.mxu0 %v1109
        %v1111 = vpop.f32.mrf.mxu0
        %v1112 = vadd.f32 %v840, %v1111
        %v1113 = vpop.f32.mrf.mxu0
        %1114 = vmatprep.mubr.f32.mxu0 0.0
        %v1115 = vand.u32 %v292, 4294901760
        %v1116 = vsub.f32 %v292, %v1115
        %1117 = vmatmul.mubr.f32.gmra.mxu0 %v1116
        %v1118 = vpop.f32.mrf.mxu0
        %v1119 = vadd.f32 %v846, %v1118
        %v1120 = vpop.f32.mrf.mxu0
        %1121 = vmatprep.mubr.f32.mxu0 0.0
        %v1122 = vand.u32 %v293, 4294901760
        %v1123 = vsub.f32 %v293, %v1122
        %1124 = vmatmul.mubr.f32.gmra.mxu0 %v1123
        %v1125 = vpop.f32.mrf.mxu0
        %v1126 = vadd.f32 %v852, %v1125
        %v1127 = vpop.f32.mrf.mxu0
        %1128 = vmatprep.mubr.f32.mxu0 0.0
        %v1129 = vand.u32 %v294, 4294901760
        %v1130 = vsub.f32 %v294, %v1129
        %1131 = vmatmul.mubr.f32.gmra.mxu0 %v1130
        %v1132 = vpop.f32.mrf.mxu0
        %v1133 = vadd.f32 %v858, %v1132
        %v1134 = vpop.f32.mrf.mxu0
        %1135 = vmatprep.mubr.f32.mxu0 0.0
        %v1136 = vand.u32 %v295, 4294901760
        %v1137 = vsub.f32 %v295, %v1136
        %1138 = vmatmul.mubr.f32.gmra.mxu0 %v1137
        %v1139 = vpop.f32.mrf.mxu0
        %v1140 = vadd.f32 %v864, %v1139
        %v1141 = vpop.f32.mrf.mxu0
        %1142 = vmatprep.mubr.f32.mxu0 0.0
        %v1143 = vand.u32 %v296, 4294901760
        %v1144 = vsub.f32 %v296, %v1143
        %1145 = vmatmul.mubr.f32.gmra.mxu0 %v1144
        %v1146 = vpop.f32.mrf.mxu0
        %v1147 = vadd.f32 %v870, %v1146
        %v1148 = vpop.f32.mrf.mxu0
        %1149 = vmatprep.mubr.f32.mxu0 0.0
        %v1150 = vand.u32 %v297, 4294901760
        %v1151 = vsub.f32 %v297, %v1150
        %1152 = vmatmul.mubr.f32.gmra.mxu0 %v1151
        %v1153 = vpop.f32.mrf.mxu0
        %v1154 = vadd.f32 %v876, %v1153
        %v1155 = vpop.f32.mrf.mxu0
        %1156 = vmatprep.mubr.f32.mxu0 0.0
        %v1157 = vand.u32 %v298, 4294901760
        %v1158 = vsub.f32 %v298, %v1157
        %1159 = vmatmul.mubr.f32.gmra.mxu0 %v1158
        %v1160 = vpop.f32.mrf.mxu0
        %v1161 = vadd.f32 %v882, %v1160
        %v1162 = vpop.f32.mrf.mxu0
        %1163 = vmatprep.mubr.f32.mxu0 0.0
        %v1164 = vand.u32 %v299, 4294901760
        %v1165 = vsub.f32 %v299, %v1164
        %1166 = vmatmul.mubr.f32.gmra.mxu0 %v1165
        %v1167 = vpop.f32.mrf.mxu0
        %v1168 = vadd.f32 %v888, %v1167
        %v1169 = vpop.f32.mrf.mxu0
        %1170 = vmatprep.mubr.f32.mxu0 0.0
        %v1171 = vand.u32 %v300, 4294901760
        %v1172 = vsub.f32 %v300, %v1171
        %1173 = vmatmul.mubr.f32.gmra.mxu0 %v1172
        %v1174 = vpop.f32.mrf.mxu0
        %v1175 = vadd.f32 %v894, %v1174
        %v1176 = vpop.f32.mrf.mxu0
        %1177 = vmatprep.mubr.f32.mxu0 0.0
        %v1178 = vand.u32 %v301, 4294901760
        %v1179 = vsub.f32 %v301, %v1178
        %1180 = vmatmul.mubr.f32.gmra.mxu0 %v1179
        %v1181 = vpop.f32.mrf.mxu0
        %v1182 = vadd.f32 %v900, %v1181
        %v1183 = vpop.f32.mrf.mxu0
        %1184 = vmatprep.mubr.f32.mxu0 0.0
        %v1185 = vand.u32 %v302, 4294901760
        %v1186 = vsub.f32 %v302, %v1185
        %1187 = vmatmul.mubr.f32.gmra.mxu0 %v1186
        %v1188 = vpop.f32.mrf.mxu0
        %v1189 = vadd.f32 %v906, %v1188
        %v1190 = vpop.f32.mrf.mxu0
        %1191 = vmatprep.mubr.f32.mxu0 0.0
        %v1192 = vand.u32 %v303, 4294901760
        %v1193 = vsub.f32 %v303, %v1192
        %1194 = vmatmul.mubr.f32.gmra.mxu0 %v1193
        %v1195 = vpop.f32.mrf.mxu0
        %v1196 = vadd.f32 %v912, %v1195
        %v1197 = vpop.f32.mrf.mxu0
        %1198 = vmatprep.mubr.f32.mxu0 0.0
        %v1199 = vand.u32 %v304, 4294901760
        %v1200 = vsub.f32 %v304, %v1199
        %1201 = vmatmul.mubr.f32.gmra.mxu0 %v1200
        %v1202 = vpop.f32.mrf.mxu0
        %v1203 = vadd.f32 %v918, %v1202
        %v1204 = vpop.f32.mrf.mxu0
        %1205 = vmatprep.mubr.f32.mxu0 0.0
        %v1206 = vand.u32 %v305, 4294901760
        %v1207 = vsub.f32 %v305, %v1206
        %1208 = vmatmul.mubr.f32.gmra.mxu0 %v1207
        %v1209 = vpop.f32.mrf.mxu0
        %v1210 = vadd.f32 %v924, %v1209
        %v1211 = vpop.f32.mrf.mxu0
        %1212 = vmatprep.mubr.f32.mxu0 0.0
        %v1213 = vand.u32 %v306, 4294901760
        %v1214 = vsub.f32 %v306, %v1213
        %1215 = vmatmul.mubr.f32.gmra.mxu0 %v1214
        %v1216 = vpop.f32.mrf.mxu0
        %v1217 = vadd.f32 %v930, %v1216
        %v1218 = vpop.f32.mrf.mxu0
        %1219 = vmatprep.mubr.f32.mxu0 0.0
        %v1220 = vand.u32 %v307, 4294901760
        %v1221 = vsub.f32 %v307, %v1220
        %1222 = vmatmul.mubr.f32.gmra.mxu0 %v1221
        %v1223 = vpop.f32.mrf.mxu0
        %v1224 = vadd.f32 %v936, %v1223
        %v1225 = vpop.f32.mrf.mxu0
        %1226 = vmatprep.mubr.f32.mxu0 0.0
        %v1227 = vand.u32 %v308, 4294901760
        %v1228 = vsub.f32 %v308, %v1227
        %1229 = vmatmul.mubr.f32.gmra.mxu0 %v1228
        %v1230 = vpop.f32.mrf.mxu0
        %v1231 = vadd.f32 %v942, %v1230
        %v1232 = vpop.f32.mrf.mxu0
        %1233 = vmatprep.mubr.f32.mxu0 0.0
        %v1234 = vand.u32 %v309, 4294901760
        %v1235 = vsub.f32 %v309, %v1234
        %1236 = vmatmul.mubr.f32.gmra.mxu0 %v1235
        %v1237 = vpop.f32.mrf.mxu0
        %v1238 = vadd.f32 %v948, %v1237
        %v1239 = vpop.f32.mrf.mxu0
        %1240 = vmatprep.mubr.f32.mxu0 0.0
        %v1241 = vand.u32 %v310, 4294901760
        %v1242 = vsub.f32 %v310, %v1241
        %1243 = vmatmul.mubr.f32.gmra.mxu0 %v1242
        %v1244 = vpop.f32.mrf.mxu0
        %v1245 = vadd.f32 %v954, %v1244
        %v1246 = vpop.f32.mrf.mxu0
        %1247 = vmatprep.mubr.f32.mxu0 0.0
        %v1248 = vand.u32 %v311, 4294901760
        %v1249 = vsub.f32 %v311, %v1248
        %1250 = vmatmul.mubr.f32.gmra.mxu0 %v1249
        %v1251 = vpop.f32.mrf.mxu0
        %v1252 = vadd.f32 %v960, %v1251
        %v1253 = vpop.f32.mrf.mxu0
        %1254 = vmatprep.mubr.f32.mxu0 0.0
        %v1255 = vand.u32 %v312, 4294901760
        %v1256 = vsub.f32 %v312, %v1255
        %1257 = vmatmul.mubr.f32.gmra.mxu0 %v1256
        %v1258 = vpop.f32.mrf.mxu0
        %v1259 = vadd.f32 %v966, %v1258
        %v1260 = vpop.f32.mrf.mxu0
        %1261 = vdwg.mxu0
        %1262 = vmatprep.subr.mxu0 0.0
        %1263 = vmatpush1.xpose.msra.mxu0 0.0
        %1264 = vmatprep.subr.mxu0 0.0
        %1265 = vmatpush1.xpose.msra.mxu0 0.0
        %1266 = vmatprep.subr.mxu0 0.0
        %1267 = vmatpush1.xpose.msra.mxu0 0.0
        %1268 = vmatprep.subr.mxu0 0.0
        %1269 = vmatpush1.xpose.msra.mxu0 0.0
        %1270 = vmatprep.subr.mxu0 0.0
        %1271 = vmatpush1.xpose.msra.mxu0 0.0
        %1272 = vmatprep.subr.mxu0 0.0
        %1273 = vmatpush1.xpose.msra.mxu0 0.0
        %1274 = vmatprep.subr.mxu0 0.0
        %1275 = vmatpush1.xpose.msra.mxu0 0.0
        %1276 = vmatprep.subr.mxu0 0.0
        %1277 = vmatpush1.xpose.msra.mxu0 0.0
        %1278 = vmatprep.subr.mxu0 0.0
        %1279 = vmatpush1.xpose.msra.mxu0 0.0
        %1280 = vmatprep.subr.mxu0 0.0
        %1281 = vmatpush1.xpose.msra.mxu0 0.0
        %1282 = vmatprep.subr.mxu0 0.0
        %1283 = vmatpush1.xpose.msra.mxu0 0.0
        %1284 = vmatprep.subr.mxu0 0.0
        %1285 = vmatpush1.xpose.msra.mxu0 0.0
        %1286 = vmatprep.subr.mxu0 0.0
        %1287 = vmatpush1.xpose.msra.mxu0 0.0
        %1288 = vmatprep.subr.mxu0 0.0
        %1289 = vmatpush1.xpose.msra.mxu0 0.0
        %1290 = vmatprep.subr.mxu0 0.0
        %v1291 = vand.u32 %v314, 4294901760
        %1292 = vmatpush1.xpose.msra.mxu0 %v1291
        %1293 = vmatprep.subr.mxu0 0.0
        %v1294 = vand.u32 %v313, 4294901760
        %1295 = vmatpush1.xpose.msra.mxu0 %v1294
        %1296 = vmatprep.subr.mxu0 0.0
        %1297 = vmatpush2.xpose.msra.mxu0 0.0
        %1298 = vmatprep.subr.mxu0 0.0
        %1299 = vmatpush2.xpose.msra.mxu0 0.0
        %1300 = vmatprep.subr.mxu0 0.0
        %1301 = vmatpush2.xpose.msra.mxu0 0.0
        %1302 = vmatprep.subr.mxu0 0.0
        %1303 = vmatpush2.xpose.msra.mxu0 0.0
        %1304 = vmatprep.subr.mxu0 0.0
        %1305 = vmatpush2.xpose.msra.mxu0 0.0
        %1306 = vmatprep.subr.mxu0 0.0
        %1307 = vmatpush2.xpose.msra.mxu0 0.0
        %1308 = vmatprep.subr.mxu0 0.0
        %1309 = vmatpush2.xpose.msra.mxu0 0.0
        %1310 = vmatprep.subr.mxu0 0.0
        %1311 = vmatpush2.xpose.msra.mxu0 0.0
        %1312 = vmatprep.subr.mxu0 0.0
        %1313 = vmatpush2.xpose.msra.mxu0 0.0
        %1314 = vmatprep.subr.mxu0 0.0
        %1315 = vmatpush2.xpose.msra.mxu0 0.0
        %1316 = vmatprep.subr.mxu0 0.0
        %1317 = vmatpush2.xpose.msra.mxu0 0.0
        %1318 = vmatprep.subr.mxu0 0.0
        %1319 = vmatpush2.xpose.msra.mxu0 0.0
        %1320 = vmatprep.subr.mxu0 0.0
        %1321 = vmatpush2.xpose.msra.mxu0 0.0
        %1322 = vmatprep.subr.mxu0 0.0
        %1323 = vmatpush2.xpose.msra.mxu0 0.0
        %1324 = vmatprep.subr.mxu0 0.0
        %1325 = vmatpush2.xpose.msra.mxu0 0.0
        %1326 = vmatprep.subr.mxu0 0.0
        %1327 = vmatpush2.xpose.msra.mxu0 0.0
        %1328 = vmatprep.mubr.f32.mxu0 0.0
        %v1329 = vand.u32 %v281, 4294901760
        %v1330 = vsub.f32 %v281, %v1329
        %v1331 = vand.u32 %v1330, 4294901760
        %1332 = vmatmul.mubr.f32.gmra.mxu0 %v1331
        %v1333 = vpop.f32.mrf.mxu0
        %v1334 = vadd.f32 %v1042, %v1333
        %v1335 = vpop.f32.mrf.mxu0
        %1336 = vmatprep.mubr.f32.mxu0 0.0
        %v1337 = vand.u32 %v282, 4294901760
        %v1338 = vsub.f32 %v282, %v1337
        %v1339 = vand.u32 %v1338, 4294901760
        %1340 = vmatmul.mubr.f32.gmra.mxu0 %v1339
        %v1341 = vpop.f32.mrf.mxu0
        %v1342 = vadd.f32 %v1049, %v1341
        %v1343 = vpop.f32.mrf.mxu0
        %1344 = vmatprep.mubr.f32.mxu0 0.0
        %v1345 = vand.u32 %v283, 4294901760
        %v1346 = vsub.f32 %v283, %v1345
        %v1347 = vand.u32 %v1346, 4294901760
        %1348 = vmatmul.mubr.f32.gmra.mxu0 %v1347
        %v1349 = vpop.f32.mrf.mxu0
        %v1350 = vadd.f32 %v1056, %v1349
        %v1351 = vpop.f32.mrf.mxu0
        %1352 = vmatprep.mubr.f32.mxu0 0.0
        %v1353 = vand.u32 %v284, 4294901760
        %v1354 = vsub.f32 %v284, %v1353
        %v1355 = vand.u32 %v1354, 4294901760
        %1356 = vmatmul.mubr.f32.gmra.mxu0 %v1355
        %v1357 = vpop.f32.mrf.mxu0
        %v1358 = vadd.f32 %v1063, %v1357
        %v1359 = vpop.f32.mrf.mxu0
        %1360 = vmatprep.mubr.f32.mxu0 0.0
        %v1361 = vand.u32 %v285, 4294901760
        %v1362 = vsub.f32 %v285, %v1361
        %v1363 = vand.u32 %v1362, 4294901760
        %1364 = vmatmul.mubr.f32.gmra.mxu0 %v1363
        %v1365 = vpop.f32.mrf.mxu0
        %v1366 = vadd.f32 %v1070, %v1365
        %v1367 = vpop.f32.mrf.mxu0
        %1368 = vmatprep.mubr.f32.mxu0 0.0
        %v1369 = vand.u32 %v286, 4294901760
        %v1370 = vsub.f32 %v286, %v1369
        %v1371 = vand.u32 %v1370, 4294901760
        %1372 = vmatmul.mubr.f32.gmra.mxu0 %v1371
        %v1373 = vpop.f32.mrf.mxu0
        %v1374 = vadd.f32 %v1077, %v1373
        %v1375 = vpop.f32.mrf.mxu0
        %1376 = vmatprep.mubr.f32.mxu0 0.0
        %v1377 = vand.u32 %v287, 4294901760
        %v1378 = vsub.f32 %v287, %v1377
        %v1379 = vand.u32 %v1378, 4294901760
        %1380 = vmatmul.mubr.f32.gmra.mxu0 %v1379
        %v1381 = vpop.f32.mrf.mxu0
        %v1382 = vadd.f32 %v1084, %v1381
        %v1383 = vpop.f32.mrf.mxu0
        %1384 = vmatprep.mubr.f32.mxu0 0.0
        %v1385 = vand.u32 %v288, 4294901760
        %v1386 = vsub.f32 %v288, %v1385
        %v1387 = vand.u32 %v1386, 4294901760
        %1388 = vmatmul.mubr.f32.gmra.mxu0 %v1387
        %v1389 = vpop.f32.mrf.mxu0
        %v1390 = vadd.f32 %v1091, %v1389
        %v1391 = vpop.f32.mrf.mxu0
        %1392 = vmatprep.mubr.f32.mxu0 0.0
        %v1393 = vand.u32 %v289, 4294901760
        %v1394 = vsub.f32 %v289, %v1393
        %v1395 = vand.u32 %v1394, 4294901760
        %1396 = vmatmul.mubr.f32.gmra.mxu0 %v1395
        %v1397 = vpop.f32.mrf.mxu0
        %v1398 = vadd.f32 %v1098, %v1397
        %v1399 = vpop.f32.mrf.mxu0
        %1400 = vmatprep.mubr.f32.mxu0 0.0
        %v1401 = vand.u32 %v290, 4294901760
        %v1402 = vsub.f32 %v290, %v1401
        %v1403 = vand.u32 %v1402, 4294901760
        %1404 = vmatmul.mubr.f32.gmra.mxu0 %v1403
        %v1405 = vpop.f32.mrf.mxu0
        %v1406 = vadd.f32 %v1105, %v1405
        %v1407 = vpop.f32.mrf.mxu0
        %1408 = vmatprep.mubr.f32.mxu0 0.0
        %v1409 = vand.u32 %v291, 4294901760
        %v1410 = vsub.f32 %v291, %v1409
        %v1411 = vand.u32 %v1410, 4294901760
        %1412 = vmatmul.mubr.f32.gmra.mxu0 %v1411
        %v1413 = vpop.f32.mrf.mxu0
        %v1414 = vadd.f32 %v1112, %v1413
        %v1415 = vpop.f32.mrf.mxu0
        %1416 = vmatprep.mubr.f32.mxu0 0.0
        %v1417 = vand.u32 %v292, 4294901760
        %v1418 = vsub.f32 %v292, %v1417
        %v1419 = vand.u32 %v1418, 4294901760
        %1420 = vmatmul.mubr.f32.gmra.mxu0 %v1419
        %v1421 = vpop.f32.mrf.mxu0
        %v1422 = vadd.f32 %v1119, %v1421
        %v1423 = vpop.f32.mrf.mxu0
        %1424 = vmatprep.mubr.f32.mxu0 0.0
        %v1425 = vand.u32 %v293, 4294901760
        %v1426 = vsub.f32 %v293, %v1425
        %v1427 = vand.u32 %v1426, 4294901760
        %1428 = vmatmul.mubr.f32.gmra.mxu0 %v1427
        %v1429 = vpop.f32.mrf.mxu0
        %v1430 = vadd.f32 %v1126, %v1429
        %v1431 = vpop.f32.mrf.mxu0
        %1432 = vmatprep.mubr.f32.mxu0 0.0
        %v1433 = vand.u32 %v294, 4294901760
        %v1434 = vsub.f32 %v294, %v1433
        %v1435 = vand.u32 %v1434, 4294901760
        %1436 = vmatmul.mubr.f32.gmra.mxu0 %v1435
        %v1437 = vpop.f32.mrf.mxu0
        %v1438 = vadd.f32 %v1133, %v1437
        %v1439 = vpop.f32.mrf.mxu0
        %1440 = vmatprep.mubr.f32.mxu0 0.0
        %v1441 = vand.u32 %v295, 4294901760
        %v1442 = vsub.f32 %v295, %v1441
        %v1443 = vand.u32 %v1442, 4294901760
        %1444 = vmatmul.mubr.f32.gmra.mxu0 %v1443
        %v1445 = vpop.f32.mrf.mxu0
        %v1446 = vadd.f32 %v1140, %v1445
        %v1447 = vpop.f32.mrf.mxu0
        %1448 = vmatprep.mubr.f32.mxu0 0.0
        %v1449 = vand.u32 %v296, 4294901760
        %v1450 = vsub.f32 %v296, %v1449
        %v1451 = vand.u32 %v1450, 4294901760
        %1452 = vmatmul.mubr.f32.gmra.mxu0 %v1451
        %v1453 = vpop.f32.mrf.mxu0
        %v1454 = vadd.f32 %v1147, %v1453
        %v1455 = vpop.f32.mrf.mxu0
        %1456 = vmatprep.mubr.f32.mxu0 0.0
        %v1457 = vand.u32 %v297, 4294901760
        %v1458 = vsub.f32 %v297, %v1457
        %v1459 = vand.u32 %v1458, 4294901760
        %1460 = vmatmul.mubr.f32.gmra.mxu0 %v1459
        %v1461 = vpop.f32.mrf.mxu0
        %v1462 = vadd.f32 %v1154, %v1461
        %v1463 = vpop.f32.mrf.mxu0
        %1464 = vmatprep.mubr.f32.mxu0 0.0
        %v1465 = vand.u32 %v298, 4294901760
        %v1466 = vsub.f32 %v298, %v1465
        %v1467 = vand.u32 %v1466, 4294901760
        %1468 = vmatmul.mubr.f32.gmra.mxu0 %v1467
        %v1469 = vpop.f32.mrf.mxu0
        %v1470 = vadd.f32 %v1161, %v1469
        %v1471 = vpop.f32.mrf.mxu0
        %1472 = vmatprep.mubr.f32.mxu0 0.0
        %v1473 = vand.u32 %v299, 4294901760
        %v1474 = vsub.f32 %v299, %v1473
        %v1475 = vand.u32 %v1474, 4294901760
        %1476 = vmatmul.mubr.f32.gmra.mxu0 %v1475
        %v1477 = vpop.f32.mrf.mxu0
        %v1478 = vadd.f32 %v1168, %v1477
        %v1479 = vpop.f32.mrf.mxu0
        %1480 = vmatprep.mubr.f32.mxu0 0.0
        %v1481 = vand.u32 %v300, 4294901760
        %v1482 = vsub.f32 %v300, %v1481
        %v1483 = vand.u32 %v1482, 4294901760
        %1484 = vmatmul.mubr.f32.gmra.mxu0 %v1483
        %v1485 = vpop.f32.mrf.mxu0
        %v1486 = vadd.f32 %v1175, %v1485
        %v1487 = vpop.f32.mrf.mxu0
        %1488 = vmatprep.mubr.f32.mxu0 0.0
        %v1489 = vand.u32 %v301, 4294901760
        %v1490 = vsub.f32 %v301, %v1489
        %v1491 = vand.u32 %v1490, 4294901760
        %1492 = vmatmul.mubr.f32.gmra.mxu0 %v1491
        %v1493 = vpop.f32.mrf.mxu0
        %v1494 = vadd.f32 %v1182, %v1493
        %v1495 = vpop.f32.mrf.mxu0
        %1496 = vmatprep.mubr.f32.mxu0 0.0
        %v1497 = vand.u32 %v302, 4294901760
        %v1498 = vsub.f32 %v302, %v1497
        %v1499 = vand.u32 %v1498, 4294901760
        %1500 = vmatmul.mubr.f32.gmra.mxu0 %v1499
        %v1501 = vpop.f32.mrf.mxu0
        %v1502 = vadd.f32 %v1189, %v1501
        %v1503 = vpop.f32.mrf.mxu0
        %1504 = vmatprep.mubr.f32.mxu0 0.0
        %v1505 = vand.u32 %v303, 4294901760
        %v1506 = vsub.f32 %v303, %v1505
        %v1507 = vand.u32 %v1506, 4294901760
        %1508 = vmatmul.mubr.f32.gmra.mxu0 %v1507
        %v1509 = vpop.f32.mrf.mxu0
        %v1510 = vadd.f32 %v1196, %v1509
        %v1511 = vpop.f32.mrf.mxu0
        %1512 = vmatprep.mubr.f32.mxu0 0.0
        %v1513 = vand.u32 %v304, 4294901760
        %v1514 = vsub.f32 %v304, %v1513
        %v1515 = vand.u32 %v1514, 4294901760
        %1516 = vmatmul.mubr.f32.gmra.mxu0 %v1515
        %v1517 = vpop.f32.mrf.mxu0
        %v1518 = vadd.f32 %v1203, %v1517
        %v1519 = vpop.f32.mrf.mxu0
        %1520 = vmatprep.mubr.f32.mxu0 0.0
        %v1521 = vand.u32 %v305, 4294901760
        %v1522 = vsub.f32 %v305, %v1521
        %v1523 = vand.u32 %v1522, 4294901760
        %1524 = vmatmul.mubr.f32.gmra.mxu0 %v1523
        %v1525 = vpop.f32.mrf.mxu0
        %v1526 = vadd.f32 %v1210, %v1525
        %v1527 = vpop.f32.mrf.mxu0
        %1528 = vmatprep.mubr.f32.mxu0 0.0
        %v1529 = vand.u32 %v306, 4294901760
        %v1530 = vsub.f32 %v306, %v1529
        %v1531 = vand.u32 %v1530, 4294901760
        %1532 = vmatmul.mubr.f32.gmra.mxu0 %v1531
        %v1533 = vpop.f32.mrf.mxu0
        %v1534 = vadd.f32 %v1217, %v1533
        %v1535 = vpop.f32.mrf.mxu0
        %1536 = vmatprep.mubr.f32.mxu0 0.0
        %v1537 = vand.u32 %v307, 4294901760
        %v1538 = vsub.f32 %v307, %v1537
        %v1539 = vand.u32 %v1538, 4294901760
        %1540 = vmatmul.mubr.f32.gmra.mxu0 %v1539
        %v1541 = vpop.f32.mrf.mxu0
        %v1542 = vadd.f32 %v1224, %v1541
        %v1543 = vpop.f32.mrf.mxu0
        %1544 = vmatprep.mubr.f32.mxu0 0.0
        %v1545 = vand.u32 %v308, 4294901760
        %v1546 = vsub.f32 %v308, %v1545
        %v1547 = vand.u32 %v1546, 4294901760
        %1548 = vmatmul.mubr.f32.gmra.mxu0 %v1547
        %v1549 = vpop.f32.mrf.mxu0
        %v1550 = vadd.f32 %v1231, %v1549
        %v1551 = vpop.f32.mrf.mxu0
        %1552 = vmatprep.mubr.f32.mxu0 0.0
        %v1553 = vand.u32 %v309, 4294901760
        %v1554 = vsub.f32 %v309, %v1553
        %v1555 = vand.u32 %v1554, 4294901760
        %1556 = vmatmul.mubr.f32.gmra.mxu0 %v1555
        %v1557 = vpop.f32.mrf.mxu0
        %v1558 = vadd.f32 %v1238, %v1557
        %v1559 = vpop.f32.mrf.mxu0
        %1560 = vmatprep.mubr.f32.mxu0 0.0
        %v1561 = vand.u32 %v310, 4294901760
        %v1562 = vsub.f32 %v310, %v1561
        %v1563 = vand.u32 %v1562, 4294901760
        %1564 = vmatmul.mubr.f32.gmra.mxu0 %v1563
        %v1565 = vpop.f32.mrf.mxu0
        %v1566 = vadd.f32 %v1245, %v1565
        %v1567 = vpop.f32.mrf.mxu0
        %1568 = vmatprep.mubr.f32.mxu0 0.0
        %v1569 = vand.u32 %v311, 4294901760
        %v1570 = vsub.f32 %v311, %v1569
        %v1571 = vand.u32 %v1570, 4294901760
        %1572 = vmatmul.mubr.f32.gmra.mxu0 %v1571
        %v1573 = vpop.f32.mrf.mxu0
        %v1574 = vadd.f32 %v1252, %v1573
        %v1575 = vpop.f32.mrf.mxu0
        %1576 = vmatprep.mubr.f32.mxu0 0.0
        %v1577 = vand.u32 %v312, 4294901760
        %v1578 = vsub.f32 %v312, %v1577
        %v1579 = vand.u32 %v1578, 4294901760
        %1580 = vmatmul.mubr.f32.gmra.mxu0 %v1579
        %v1581 = vpop.f32.mrf.mxu0
        %v1582 = vadd.f32 %v1259, %v1581
        %v1583 = vpop.f32.mrf.mxu0
        %1584 = vdwg.mxu0
        %1585 = vmatprep.subr.mxu0 0.0
        %1586 = vmatpush1.xpose.msra.mxu0 0.0
        %1587 = vmatprep.subr.mxu0 0.0
        %1588 = vmatpush1.xpose.msra.mxu0 0.0
        %1589 = vmatprep.subr.mxu0 0.0
        %1590 = vmatpush1.xpose.msra.mxu0 0.0
        %1591 = vmatprep.subr.mxu0 0.0
        %1592 = vmatpush1.xpose.msra.mxu0 0.0
        %1593 = vmatprep.subr.mxu0 0.0
        %1594 = vmatpush1.xpose.msra.mxu0 0.0
        %1595 = vmatprep.subr.mxu0 0.0
        %1596 = vmatpush1.xpose.msra.mxu0 0.0
        %1597 = vmatprep.subr.mxu0 0.0
        %1598 = vmatpush1.xpose.msra.mxu0 0.0
        %1599 = vmatprep.subr.mxu0 0.0
        %1600 = vmatpush1.xpose.msra.mxu0 0.0
        %1601 = vmatprep.subr.mxu0 0.0
        %1602 = vmatpush1.xpose.msra.mxu0 0.0
        %1603 = vmatprep.subr.mxu0 0.0
        %1604 = vmatpush1.xpose.msra.mxu0 0.0
        %1605 = vmatprep.subr.mxu0 0.0
        %1606 = vmatpush1.xpose.msra.mxu0 0.0
        %1607 = vmatprep.subr.mxu0 0.0
        %1608 = vmatpush1.xpose.msra.mxu0 0.0
        %1609 = vmatprep.subr.mxu0 0.0
        %1610 = vmatpush1.xpose.msra.mxu0 0.0
        %1611 = vmatprep.subr.mxu0 0.0
        %1612 = vmatpush1.xpose.msra.mxu0 0.0
        %1613 = vmatprep.subr.mxu0 0.0
        %v1614 = vand.u32 %v314, 4294901760
        %v1615 = vsub.f32 %v314, %v1614
        %v1616 = vand.u32 %v1615, 4294901760
        %1617 = vmatpush1.xpose.msra.mxu0 %v1616
        %1618 = vmatprep.subr.mxu0 0.0
        %v1619 = vand.u32 %v313, 4294901760
        %v1620 = vsub.f32 %v313, %v1619
        %v1621 = vand.u32 %v1620, 4294901760
        %1622 = vmatpush1.xpose.msra.mxu0 %v1621
        %1623 = vmatprep.subr.mxu0 0.0
        %1624 = vmatpush2.xpose.msra.mxu0 0.0
        %1625 = vmatprep.subr.mxu0 0.0
        %1626 = vmatpush2.xpose.msra.mxu0 0.0
        %1627 = vmatprep.subr.mxu0 0.0
        %1628 = vmatpush2.xpose.msra.mxu0 0.0
        %1629 = vmatprep.subr.mxu0 0.0
        %1630 = vmatpush2.xpose.msra.mxu0 0.0
        %1631 = vmatprep.subr.mxu0 0.0
        %1632 = vmatpush2.xpose.msra.mxu0 0.0
        %1633 = vmatprep.subr.mxu0 0.0
        %1634 = vmatpush2.xpose.msra.mxu0 0.0
        %1635 = vmatprep.subr.mxu0 0.0
        %1636 = vmatpush2.xpose.msra.mxu0 0.0
        %1637 = vmatprep.subr.mxu0 0.0
        %1638 = vmatpush2.xpose.msra.mxu0 0.0
        %1639 = vmatprep.subr.mxu0 0.0
        %1640 = vmatpush2.xpose.msra.mxu0 0.0
        %1641 = vmatprep.subr.mxu0 0.0
        %1642 = vmatpush2.xpose.msra.mxu0 0.0
        %1643 = vmatprep.subr.mxu0 0.0
        %1644 = vmatpush2.xpose.msra.mxu0 0.0
        %1645 = vmatprep.subr.mxu0 0.0
        %1646 = vmatpush2.xpose.msra.mxu0 0.0
        %1647 = vmatprep.subr.mxu0 0.0
        %1648 = vmatpush2.xpose.msra.mxu0 0.0
        %1649 = vmatprep.subr.mxu0 0.0
        %1650 = vmatpush2.xpose.msra.mxu0 0.0
        %1651 = vmatprep.subr.mxu0 0.0
        %1652 = vmatpush2.xpose.msra.mxu0 0.0
        %1653 = vmatprep.subr.mxu0 0.0
        %1654 = vmatpush2.xpose.msra.mxu0 0.0
        %1655 = vmatprep.mubr.f32.mxu0 0.0
        %v1656 = vand.u32 %v281, 4294901760
        %1657 = vmatmul.mubr.f32.gmra.mxu0 %v1656
        %v1658 = vpop.f32.mrf.mxu0
        %v1659 = vadd.f32 %v1334, %v1658
        %v1660 = vpop.f32.mrf.mxu0
        %1661 = vmatprep.mubr.f32.mxu0 0.0
        %v1662 = vand.u32 %v282, 4294901760
        %1663 = vmatmul.mubr.f32.gmra.mxu0 %v1662
        %v1664 = vpop.f32.mrf.mxu0
        %v1665 = vadd.f32 %v1342, %v1664
        %v1666 = vpop.f32.mrf.mxu0
        %1667 = vmatprep.mubr.f32.mxu0 0.0
        %v1668 = vand.u32 %v283, 4294901760
        %1669 = vmatmul.mubr.f32.gmra.mxu0 %v1668
        %v1670 = vpop.f32.mrf.mxu0
        %v1671 = vadd.f32 %v1350, %v1670
        %v1672 = vpop.f32.mrf.mxu0
        %1673 = vmatprep.mubr.f32.mxu0 0.0
        %v1674 = vand.u32 %v284, 4294901760
        %1675 = vmatmul.mubr.f32.gmra.mxu0 %v1674
        %v1676 = vpop.f32.mrf.mxu0
        %v1677 = vadd.f32 %v1358, %v1676
        %v1678 = vpop.f32.mrf.mxu0
        %1679 = vmatprep.mubr.f32.mxu0 0.0
        %v1680 = vand.u32 %v285, 4294901760
        %1681 = vmatmul.mubr.f32.gmra.mxu0 %v1680
        %v1682 = vpop.f32.mrf.mxu0
        %v1683 = vadd.f32 %v1366, %v1682
        %v1684 = vpop.f32.mrf.mxu0
        %1685 = vmatprep.mubr.f32.mxu0 0.0
        %v1686 = vand.u32 %v286, 4294901760
        %1687 = vmatmul.mubr.f32.gmra.mxu0 %v1686
        %v1688 = vpop.f32.mrf.mxu0
        %v1689 = vadd.f32 %v1374, %v1688
        %v1690 = vpop.f32.mrf.mxu0
        %1691 = vmatprep.mubr.f32.mxu0 0.0
        %v1692 = vand.u32 %v287, 4294901760
        %1693 = vmatmul.mubr.f32.gmra.mxu0 %v1692
        %v1694 = vpop.f32.mrf.mxu0
        %v1695 = vadd.f32 %v1382, %v1694
        %v1696 = vpop.f32.mrf.mxu0
        %1697 = vmatprep.mubr.f32.mxu0 0.0
        %v1698 = vand.u32 %v288, 4294901760
        %1699 = vmatmul.mubr.f32.gmra.mxu0 %v1698
        %v1700 = vpop.f32.mrf.mxu0
        %v1701 = vadd.f32 %v1390, %v1700
        %v1702 = vpop.f32.mrf.mxu0
        %1703 = vmatprep.mubr.f32.mxu0 0.0
        %v1704 = vand.u32 %v289, 4294901760
        %1705 = vmatmul.mubr.f32.gmra.mxu0 %v1704
        %v1706 = vpop.f32.mrf.mxu0
        %v1707 = vadd.f32 %v1398, %v1706
        %v1708 = vpop.f32.mrf.mxu0
        %1709 = vmatprep.mubr.f32.mxu0 0.0
        %v1710 = vand.u32 %v290, 4294901760
        %1711 = vmatmul.mubr.f32.gmra.mxu0 %v1710
        %v1712 = vpop.f32.mrf.mxu0
        %v1713 = vadd.f32 %v1406, %v1712
        %v1714 = vpop.f32.mrf.mxu0
        %1715 = vmatprep.mubr.f32.mxu0 0.0
        %v1716 = vand.u32 %v291, 4294901760
        %1717 = vmatmul.mubr.f32.gmra.mxu0 %v1716
        %v1718 = vpop.f32.mrf.mxu0
        %v1719 = vadd.f32 %v1414, %v1718
        %v1720 = vpop.f32.mrf.mxu0
        %1721 = vmatprep.mubr.f32.mxu0 0.0
        %v1722 = vand.u32 %v292, 4294901760
        %1723 = vmatmul.mubr.f32.gmra.mxu0 %v1722
        %v1724 = vpop.f32.mrf.mxu0
        %v1725 = vadd.f32 %v1422, %v1724
        %v1726 = vpop.f32.mrf.mxu0
        %1727 = vmatprep.mubr.f32.mxu0 0.0
        %v1728 = vand.u32 %v293, 4294901760
        %1729 = vmatmul.mubr.f32.gmra.mxu0 %v1728
        %v1730 = vpop.f32.mrf.mxu0
        %v1731 = vadd.f32 %v1430, %v1730
        %v1732 = vpop.f32.mrf.mxu0
        %1733 = vmatprep.mubr.f32.mxu0 0.0
        %v1734 = vand.u32 %v294, 4294901760
        %1735 = vmatmul.mubr.f32.gmra.mxu0 %v1734
        %v1736 = vpop.f32.mrf.mxu0
        %v1737 = vadd.f32 %v1438, %v1736
        %v1738 = vpop.f32.mrf.mxu0
        %1739 = vmatprep.mubr.f32.mxu0 0.0
        %v1740 = vand.u32 %v295, 4294901760
        %1741 = vmatmul.mubr.f32.gmra.mxu0 %v1740
        %v1742 = vpop.f32.mrf.mxu0
        %v1743 = vadd.f32 %v1446, %v1742
        %v1744 = vpop.f32.mrf.mxu0
        %1745 = vmatprep.mubr.f32.mxu0 0.0
        %v1746 = vand.u32 %v296, 4294901760
        %1747 = vmatmul.mubr.f32.gmra.mxu0 %v1746
        %v1748 = vpop.f32.mrf.mxu0
        %v1749 = vadd.f32 %v1454, %v1748
        %v1750 = vpop.f32.mrf.mxu0
        %1751 = vmatprep.mubr.f32.mxu0 0.0
        %v1752 = vand.u32 %v297, 4294901760
        %1753 = vmatmul.mubr.f32.gmra.mxu0 %v1752
        %v1754 = vpop.f32.mrf.mxu0
        %v1755 = vadd.f32 %v1462, %v1754
        %v1756 = vpop.f32.mrf.mxu0
        %1757 = vmatprep.mubr.f32.mxu0 0.0
        %v1758 = vand.u32 %v298, 4294901760
        %1759 = vmatmul.mubr.f32.gmra.mxu0 %v1758
        %v1760 = vpop.f32.mrf.mxu0
        %v1761 = vadd.f32 %v1470, %v1760
        %v1762 = vpop.f32.mrf.mxu0
        %1763 = vmatprep.mubr.f32.mxu0 0.0
        %v1764 = vand.u32 %v299, 4294901760
        %1765 = vmatmul.mubr.f32.gmra.mxu0 %v1764
        %v1766 = vpop.f32.mrf.mxu0
        %v1767 = vadd.f32 %v1478, %v1766
        %v1768 = vpop.f32.mrf.mxu0
        %1769 = vmatprep.mubr.f32.mxu0 0.0
        %v1770 = vand.u32 %v300, 4294901760
        %1771 = vmatmul.mubr.f32.gmra.mxu0 %v1770
        %v1772 = vpop.f32.mrf.mxu0
        %v1773 = vadd.f32 %v1486, %v1772
        %v1774 = vpop.f32.mrf.mxu0
        %1775 = vmatprep.mubr.f32.mxu0 0.0
        %v1776 = vand.u32 %v301, 4294901760
        %1777 = vmatmul.mubr.f32.gmra.mxu0 %v1776
        %v1778 = vpop.f32.mrf.mxu0
        %v1779 = vadd.f32 %v1494, %v1778
        %v1780 = vpop.f32.mrf.mxu0
        %1781 = vmatprep.mubr.f32.mxu0 0.0
        %v1782 = vand.u32 %v302, 4294901760
        %1783 = vmatmul.mubr.f32.gmra.mxu0 %v1782
        %v1784 = vpop.f32.mrf.mxu0
        %v1785 = vadd.f32 %v1502, %v1784
        %v1786 = vpop.f32.mrf.mxu0
        %1787 = vmatprep.mubr.f32.mxu0 0.0
        %v1788 = vand.u32 %v303, 4294901760
        %1789 = vmatmul.mubr.f32.gmra.mxu0 %v1788
        %v1790 = vpop.f32.mrf.mxu0
        %v1791 = vadd.f32 %v1510, %v1790
        %v1792 = vpop.f32.mrf.mxu0
        %1793 = vmatprep.mubr.f32.mxu0 0.0
        %v1794 = vand.u32 %v304, 4294901760
        %1795 = vmatmul.mubr.f32.gmra.mxu0 %v1794
        %v1796 = vpop.f32.mrf.mxu0
        %v1797 = vadd.f32 %v1518, %v1796
        %v1798 = vpop.f32.mrf.mxu0
        %1799 = vmatprep.mubr.f32.mxu0 0.0
        %v1800 = vand.u32 %v305, 4294901760
        %1801 = vmatmul.mubr.f32.gmra.mxu0 %v1800
        %v1802 = vpop.f32.mrf.mxu0
        %v1803 = vadd.f32 %v1526, %v1802
        %v1804 = vpop.f32.mrf.mxu0
        %1805 = vmatprep.mubr.f32.mxu0 0.0
        %v1806 = vand.u32 %v306, 4294901760
        %1807 = vmatmul.mubr.f32.gmra.mxu0 %v1806
        %v1808 = vpop.f32.mrf.mxu0
        %v1809 = vadd.f32 %v1534, %v1808
        %v1810 = vpop.f32.mrf.mxu0
        %1811 = vmatprep.mubr.f32.mxu0 0.0
        %v1812 = vand.u32 %v307, 4294901760
        %1813 = vmatmul.mubr.f32.gmra.mxu0 %v1812
        %v1814 = vpop.f32.mrf.mxu0
        %v1815 = vadd.f32 %v1542, %v1814
        %v1816 = vpop.f32.mrf.mxu0
        %1817 = vmatprep.mubr.f32.mxu0 0.0
        %v1818 = vand.u32 %v308, 4294901760
        %1819 = vmatmul.mubr.f32.gmra.mxu0 %v1818
        %v1820 = vpop.f32.mrf.mxu0
        %v1821 = vadd.f32 %v1550, %v1820
        %v1822 = vpop.f32.mrf.mxu0
        %1823 = vmatprep.mubr.f32.mxu0 0.0
        %v1824 = vand.u32 %v309, 4294901760
        %1825 = vmatmul.mubr.f32.gmra.mxu0 %v1824
        %v1826 = vpop.f32.mrf.mxu0
        %v1827 = vadd.f32 %v1558, %v1826
        %v1828 = vpop.f32.mrf.mxu0
        %1829 = vmatprep.mubr.f32.mxu0 0.0
        %v1830 = vand.u32 %v310, 4294901760
        %1831 = vmatmul.mubr.f32.gmra.mxu0 %v1830
        %v1832 = vpop.f32.mrf.mxu0
        %v1833 = vadd.f32 %v1566, %v1832
        %v1834 = vpop.f32.mrf.mxu0
        %1835 = vmatprep.mubr.f32.mxu0 0.0
        %v1836 = vand.u32 %v311, 4294901760
        %1837 = vmatmul.mubr.f32.gmra.mxu0 %v1836
        %v1838 = vpop.f32.mrf.mxu0
        %v1839 = vadd.f32 %v1574, %v1838
        %v1840 = vpop.f32.mrf.mxu0
        %1841 = vmatprep.mubr.f32.mxu0 0.0
        %v1842 = vand.u32 %v312, 4294901760
        %1843 = vmatmul.mubr.f32.gmra.mxu0 %v1842
        %v1844 = vpop.f32.mrf.mxu0
        %v1845 = vadd.f32 %v1582, %v1844
        %v1846 = vpop.f32.mrf.mxu0
        %1847 = vdwg.mxu0
        %1848 = vmatprep.subr.mxu0 0.0
        %1849 = vmatpush1.xpose.msra.mxu0 0.0
        %1850 = vmatprep.subr.mxu0 0.0
        %1851 = vmatpush1.xpose.msra.mxu0 0.0
        %1852 = vmatprep.subr.mxu0 0.0
        %1853 = vmatpush1.xpose.msra.mxu0 0.0
        %1854 = vmatprep.subr.mxu0 0.0
        %1855 = vmatpush1.xpose.msra.mxu0 0.0
        %1856 = vmatprep.subr.mxu0 0.0
        %1857 = vmatpush1.xpose.msra.mxu0 0.0
        %1858 = vmatprep.subr.mxu0 0.0
        %1859 = vmatpush1.xpose.msra.mxu0 0.0
        %1860 = vmatprep.subr.mxu0 0.0
        %1861 = vmatpush1.xpose.msra.mxu0 0.0
        %1862 = vmatprep.subr.mxu0 0.0
        %1863 = vmatpush1.xpose.msra.mxu0 0.0
        %1864 = vmatprep.subr.mxu0 0.0
        %1865 = vmatpush1.xpose.msra.mxu0 0.0
        %1866 = vmatprep.subr.mxu0 0.0
        %1867 = vmatpush1.xpose.msra.mxu0 0.0
        %1868 = vmatprep.subr.mxu0 0.0
        %1869 = vmatpush1.xpose.msra.mxu0 0.0
        %1870 = vmatprep.subr.mxu0 0.0
        %1871 = vmatpush1.xpose.msra.mxu0 0.0
        %1872 = vmatprep.subr.mxu0 0.0
        %1873 = vmatpush1.xpose.msra.mxu0 0.0
        %1874 = vmatprep.subr.mxu0 0.0
        %1875 = vmatpush1.xpose.msra.mxu0 0.0
        %1876 = vmatprep.subr.mxu0 0.0
        %v1877 = vand.u32 %v314, 4294901760
        %1878 = vmatpush1.xpose.msra.mxu0 %v1877
        %1879 = vmatprep.subr.mxu0 0.0
        %v1880 = vand.u32 %v313, 4294901760
        %1881 = vmatpush1.xpose.msra.mxu0 %v1880
        %1882 = vmatprep.subr.mxu0 0.0
        %1883 = vmatpush2.xpose.msra.mxu0 0.0
        %1884 = vmatprep.subr.mxu0 0.0
        %1885 = vmatpush2.xpose.msra.mxu0 0.0
        %1886 = vmatprep.subr.mxu0 0.0
        %1887 = vmatpush2.xpose.msra.mxu0 0.0
        %1888 = vmatprep.subr.mxu0 0.0
        %1889 = vmatpush2.xpose.msra.mxu0 0.0
        %1890 = vmatprep.subr.mxu0 0.0
        %1891 = vmatpush2.xpose.msra.mxu0 0.0
        %1892 = vmatprep.subr.mxu0 0.0
        %1893 = vmatpush2.xpose.msra.mxu0 0.0
        %1894 = vmatprep.subr.mxu0 0.0
        %1895 = vmatpush2.xpose.msra.mxu0 0.0
        %1896 = vmatprep.subr.mxu0 0.0
        %1897 = vmatpush2.xpose.msra.mxu0 0.0
        %1898 = vmatprep.subr.mxu0 0.0
        %1899 = vmatpush2.xpose.msra.mxu0 0.0
        %1900 = vmatprep.subr.mxu0 0.0
        %1901 = vmatpush2.xpose.msra.mxu0 0.0
        %1902 = vmatprep.subr.mxu0 0.0
        %1903 = vmatpush2.xpose.msra.mxu0 0.0
        %1904 = vmatprep.subr.mxu0 0.0
        %1905 = vmatpush2.xpose.msra.mxu0 0.0
        %1906 = vmatprep.subr.mxu0 0.0
        %1907 = vmatpush2.xpose.msra.mxu0 0.0
        %1908 = vmatprep.subr.mxu0 0.0
        %1909 = vmatpush2.xpose.msra.mxu0 0.0
        %1910 = vmatprep.subr.mxu0 0.0
        %1911 = vmatpush2.xpose.msra.mxu0 0.0
        %1912 = vmatprep.subr.mxu0 0.0
        %1913 = vmatpush2.xpose.msra.mxu0 0.0
        %1914 = vmatprep.mubr.f32.mxu0 0.0
        %v1915 = vand.u32 %v281, 4294901760
        %1916 = vmatmul.mubr.f32.gmra.mxu0 %v1915
        %v1917 = vpop.f32.mrf.mxu0
        %v1918 = vadd.f32 %v1659, %v1917
        %v1919 = vpop.f32.mrf.mxu0
        %1920 = vmatprep.mubr.f32.mxu0 0.0
        %v1921 = vand.u32 %v282, 4294901760
        %1922 = vmatmul.mubr.f32.gmra.mxu0 %v1921
        %v1923 = vpop.f32.mrf.mxu0
        %v1924 = vadd.f32 %v1665, %v1923
        %v1925 = vpop.f32.mrf.mxu0
        %1926 = vmatprep.mubr.f32.mxu0 0.0
        %v1927 = vand.u32 %v283, 4294901760
        %1928 = vmatmul.mubr.f32.gmra.mxu0 %v1927
        %v1929 = vpop.f32.mrf.mxu0
        %v1930 = vadd.f32 %v1671, %v1929
        %v1931 = vpop.f32.mrf.mxu0
        %1932 = vmatprep.mubr.f32.mxu0 0.0
        %v1933 = vand.u32 %v284, 4294901760
        %1934 = vmatmul.mubr.f32.gmra.mxu0 %v1933
        %v1935 = vpop.f32.mrf.mxu0
        %v1936 = vadd.f32 %v1677, %v1935
        %v1937 = vpop.f32.mrf.mxu0
        %1938 = vmatprep.mubr.f32.mxu0 0.0
        %v1939 = vand.u32 %v285, 4294901760
        %1940 = vmatmul.mubr.f32.gmra.mxu0 %v1939
        %v1941 = vpop.f32.mrf.mxu0
        %v1942 = vadd.f32 %v1683, %v1941
        %v1943 = vpop.f32.mrf.mxu0
        %1944 = vmatprep.mubr.f32.mxu0 0.0
        %v1945 = vand.u32 %v286, 4294901760
        %1946 = vmatmul.mubr.f32.gmra.mxu0 %v1945
        %v1947 = vpop.f32.mrf.mxu0
        %v1948 = vadd.f32 %v1689, %v1947
        %v1949 = vpop.f32.mrf.mxu0
        %1950 = vmatprep.mubr.f32.mxu0 0.0
        %v1951 = vand.u32 %v287, 4294901760
        %1952 = vmatmul.mubr.f32.gmra.mxu0 %v1951
        %v1953 = vpop.f32.mrf.mxu0
        %v1954 = vadd.f32 %v1695, %v1953
        %v1955 = vpop.f32.mrf.mxu0
        %1956 = vmatprep.mubr.f32.mxu0 0.0
        %v1957 = vand.u32 %v288, 4294901760
        %1958 = vmatmul.mubr.f32.gmra.mxu0 %v1957
        %v1959 = vpop.f32.mrf.mxu0
        %v1960 = vadd.f32 %v1701, %v1959
        %v1961 = vpop.f32.mrf.mxu0
        %1962 = vmatprep.mubr.f32.mxu0 0.0
        %v1963 = vand.u32 %v289, 4294901760
        %1964 = vmatmul.mubr.f32.gmra.mxu0 %v1963
        %v1965 = vpop.f32.mrf.mxu0
        %v1966 = vadd.f32 %v1707, %v1965
        %v1967 = vpop.f32.mrf.mxu0
        %1968 = vmatprep.mubr.f32.mxu0 0.0
        %v1969 = vand.u32 %v290, 4294901760
        %1970 = vmatmul.mubr.f32.gmra.mxu0 %v1969
        %v1971 = vpop.f32.mrf.mxu0
        %v1972 = vadd.f32 %v1713, %v1971
        %v1973 = vpop.f32.mrf.mxu0
        %1974 = vmatprep.mubr.f32.mxu0 0.0
        %v1975 = vand.u32 %v291, 4294901760
        %1976 = vmatmul.mubr.f32.gmra.mxu0 %v1975
        %v1977 = vpop.f32.mrf.mxu0
        %v1978 = vadd.f32 %v1719, %v1977
        %v1979 = vpop.f32.mrf.mxu0
        %1980 = vmatprep.mubr.f32.mxu0 0.0
        %v1981 = vand.u32 %v292, 4294901760
        %1982 = vmatmul.mubr.f32.gmra.mxu0 %v1981
        %v1983 = vpop.f32.mrf.mxu0
        %v1984 = vadd.f32 %v1725, %v1983
        %v1985 = vpop.f32.mrf.mxu0
        %1986 = vmatprep.mubr.f32.mxu0 0.0
        %v1987 = vand.u32 %v293, 4294901760
        %1988 = vmatmul.mubr.f32.gmra.mxu0 %v1987
        %v1989 = vpop.f32.mrf.mxu0
        %v1990 = vadd.f32 %v1731, %v1989
        %v1991 = vpop.f32.mrf.mxu0
        %1992 = vmatprep.mubr.f32.mxu0 0.0
        %v1993 = vand.u32 %v294, 4294901760
        %1994 = vmatmul.mubr.f32.gmra.mxu0 %v1993
        %v1995 = vpop.f32.mrf.mxu0
        %v1996 = vadd.f32 %v1737, %v1995
        %v1997 = vpop.f32.mrf.mxu0
        %1998 = vmatprep.mubr.f32.mxu0 0.0
        %v1999 = vand.u32 %v295, 4294901760
        %2000 = vmatmul.mubr.f32.gmra.mxu0 %v1999
        %v2001 = vpop.f32.mrf.mxu0
        %v2002 = vadd.f32 %v1743, %v2001
        %v2003 = vpop.f32.mrf.mxu0
        %2004 = vmatprep.mubr.f32.mxu0 0.0
        %v2005 = vand.u32 %v296, 4294901760
        %2006 = vmatmul.mubr.f32.gmra.mxu0 %v2005
        %v2007 = vpop.f32.mrf.mxu0
        %v2008 = vadd.f32 %v1749, %v2007
        %v2009 = vpop.f32.mrf.mxu0
        %2010 = vmatprep.mubr.f32.mxu0 0.0
        %v2011 = vand.u32 %v297, 4294901760
        %2012 = vmatmul.mubr.f32.gmra.mxu0 %v2011
        %v2013 = vpop.f32.mrf.mxu0
        %v2014 = vadd.f32 %v1755, %v2013
        %v2015 = vpop.f32.mrf.mxu0
        %2016 = vmatprep.mubr.f32.mxu0 0.0
        %v2017 = vand.u32 %v298, 4294901760
        %2018 = vmatmul.mubr.f32.gmra.mxu0 %v2017
        %v2019 = vpop.f32.mrf.mxu0
        %v2020 = vadd.f32 %v1761, %v2019
        %v2021 = vpop.f32.mrf.mxu0
        %2022 = vmatprep.mubr.f32.mxu0 0.0
        %v2023 = vand.u32 %v299, 4294901760
        %2024 = vmatmul.mubr.f32.gmra.mxu0 %v2023
        %v2025 = vpop.f32.mrf.mxu0
        %v2026 = vadd.f32 %v1767, %v2025
        %v2027 = vpop.f32.mrf.mxu0
        %2028 = vmatprep.mubr.f32.mxu0 0.0
        %v2029 = vand.u32 %v300, 4294901760
        %2030 = vmatmul.mubr.f32.gmra.mxu0 %v2029
        %v2031 = vpop.f32.mrf.mxu0
        %v2032 = vadd.f32 %v1773, %v2031
        %v2033 = vpop.f32.mrf.mxu0
        %2034 = vmatprep.mubr.f32.mxu0 0.0
        %v2035 = vand.u32 %v301, 4294901760
        %2036 = vmatmul.mubr.f32.gmra.mxu0 %v2035
        %v2037 = vpop.f32.mrf.mxu0
        %v2038 = vadd.f32 %v1779, %v2037
        %v2039 = vpop.f32.mrf.mxu0
        %2040 = vmatprep.mubr.f32.mxu0 0.0
        %v2041 = vand.u32 %v302, 4294901760
        %2042 = vmatmul.mubr.f32.gmra.mxu0 %v2041
        %v2043 = vpop.f32.mrf.mxu0
        %v2044 = vadd.f32 %v1785, %v2043
        %v2045 = vpop.f32.mrf.mxu0
        %2046 = vmatprep.mubr.f32.mxu0 0.0
        %v2047 = vand.u32 %v303, 4294901760
        %2048 = vmatmul.mubr.f32.gmra.mxu0 %v2047
        %v2049 = vpop.f32.mrf.mxu0
        %v2050 = vadd.f32 %v1791, %v2049
        %v2051 = vpop.f32.mrf.mxu0
        %2052 = vmatprep.mubr.f32.mxu0 0.0
        %v2053 = vand.u32 %v304, 4294901760
        %2054 = vmatmul.mubr.f32.gmra.mxu0 %v2053
        %v2055 = vpop.f32.mrf.mxu0
        %v2056 = vadd.f32 %v1797, %v2055
        %v2057 = vpop.f32.mrf.mxu0
        %2058 = vmatprep.mubr.f32.mxu0 0.0
        %v2059 = vand.u32 %v305, 4294901760
        %2060 = vmatmul.mubr.f32.gmra.mxu0 %v2059
        %v2061 = vpop.f32.mrf.mxu0
        %v2062 = vadd.f32 %v1803, %v2061
        %v2063 = vpop.f32.mrf.mxu0
        %2064 = vmatprep.mubr.f32.mxu0 0.0
        %v2065 = vand.u32 %v306, 4294901760
        %2066 = vmatmul.mubr.f32.gmra.mxu0 %v2065
        %v2067 = vpop.f32.mrf.mxu0
        %v2068 = vadd.f32 %v1809, %v2067
        %v2069 = vpop.f32.mrf.mxu0
        %2070 = vmatprep.mubr.f32.mxu0 0.0
        %v2071 = vand.u32 %v307, 4294901760
        %2072 = vmatmul.mubr.f32.gmra.mxu0 %v2071
        %v2073 = vpop.f32.mrf.mxu0
        %v2074 = vadd.f32 %v1815, %v2073
        %v2075 = vpop.f32.mrf.mxu0
        %2076 = vmatprep.mubr.f32.mxu0 0.0
        %v2077 = vand.u32 %v308, 4294901760
        %2078 = vmatmul.mubr.f32.gmra.mxu0 %v2077
        %v2079 = vpop.f32.mrf.mxu0
        %v2080 = vadd.f32 %v1821, %v2079
        %v2081 = vpop.f32.mrf.mxu0
        %2082 = vmatprep.mubr.f32.mxu0 0.0
        %v2083 = vand.u32 %v309, 4294901760
        %2084 = vmatmul.mubr.f32.gmra.mxu0 %v2083
        %v2085 = vpop.f32.mrf.mxu0
        %v2086 = vadd.f32 %v1827, %v2085
        %v2087 = vpop.f32.mrf.mxu0
        %2088 = vmatprep.mubr.f32.mxu0 0.0
        %v2089 = vand.u32 %v310, 4294901760
        %2090 = vmatmul.mubr.f32.gmra.mxu0 %v2089
        %v2091 = vpop.f32.mrf.mxu0
        %v2092 = vadd.f32 %v1833, %v2091
        %v2093 = vpop.f32.mrf.mxu0
        %2094 = vmatprep.mubr.f32.mxu0 0.0
        %v2095 = vand.u32 %v311, 4294901760
        %2096 = vmatmul.mubr.f32.gmra.mxu0 %v2095
        %v2097 = vpop.f32.mrf.mxu0
        %v2098 = vadd.f32 %v1839, %v2097
        %v2099 = vpop.f32.mrf.mxu0
        %2100 = vmatprep.mubr.f32.mxu0 0.0
        %v2101 = vand.u32 %v312, 4294901760
        %2102 = vmatmul.mubr.f32.gmra.mxu0 %v2101
        %v2103 = vpop.f32.mrf.mxu0
        %v2104 = vadd.f32 %v1845, %v2103
        %v2105 = vpop.f32.mrf.mxu0
        %2106 = vdwg.mxu0
        %v2107 = vld [vmem:[#allocation6] sm:$0xff]
        %v2108 = vld [vmem:[#allocation6 + $0x8] sm:$0xff]
        %2109 = vmatprep.subr.mxu0 0.0
        %2110 = vmatpush1.xpose.msra.mxu0 0.0
        %2111 = vmatprep.subr.mxu0 0.0
        %2112 = vmatpush1.xpose.msra.mxu0 0.0
        %2113 = vmatprep.subr.mxu0 0.0
        %2114 = vmatpush1.xpose.msra.mxu0 0.0
        %2115 = vmatprep.subr.mxu0 0.0
        %2116 = vmatpush1.xpose.msra.mxu0 0.0
        %2117 = vmatprep.subr.mxu0 0.0
        %2118 = vmatpush1.xpose.msra.mxu0 0.0
        %2119 = vmatprep.subr.mxu0 0.0
        %2120 = vmatpush1.xpose.msra.mxu0 0.0
        %2121 = vmatprep.subr.mxu0 0.0
        %2122 = vmatpush1.xpose.msra.mxu0 0.0
        %2123 = vmatprep.subr.mxu0 0.0
        %2124 = vmatpush1.xpose.msra.mxu0 0.0
        %2125 = vmatprep.subr.mxu0 0.0
        %2126 = vmatpush1.xpose.msra.mxu0 0.0
        %2127 = vmatprep.subr.mxu0 0.0
        %2128 = vmatpush1.xpose.msra.mxu0 0.0
        %2129 = vmatprep.subr.mxu0 0.0
        %2130 = vmatpush1.xpose.msra.mxu0 0.0
        %2131 = vmatprep.subr.mxu0 0.0
        %2132 = vmatpush1.xpose.msra.mxu0 0.0
        %2133 = vmatprep.subr.mxu0 0.0
        %2134 = vmatpush1.xpose.msra.mxu0 0.0
        %2135 = vmatprep.subr.mxu0 0.0
        %2136 = vmatpush1.xpose.msra.mxu0 0.0
        %2137 = vmatprep.subr.mxu0 0.0
        %v2138 = vand.u32 %v2108, 4294901760
        %2139 = vmatpush1.xpose.msra.mxu0 %v2138
        %2140 = vmatprep.subr.mxu0 0.0
        %v2141 = vand.u32 %v2107, 4294901760
        %2142 = vmatpush1.xpose.msra.mxu0 %v2141
        %2143 = vmatprep.subr.mxu0 0.0
        %2144 = vmatpush2.xpose.msra.mxu0 0.0
        %2145 = vmatprep.subr.mxu0 0.0
        %2146 = vmatpush2.xpose.msra.mxu0 0.0
        %2147 = vmatprep.subr.mxu0 0.0
        %2148 = vmatpush2.xpose.msra.mxu0 0.0
        %2149 = vmatprep.subr.mxu0 0.0
        %2150 = vmatpush2.xpose.msra.mxu0 0.0
        %2151 = vmatprep.subr.mxu0 0.0
        %2152 = vmatpush2.xpose.msra.mxu0 0.0
        %2153 = vmatprep.subr.mxu0 0.0
        %2154 = vmatpush2.xpose.msra.mxu0 0.0
        %2155 = vmatprep.subr.mxu0 0.0
        %2156 = vmatpush2.xpose.msra.mxu0 0.0
        %2157 = vmatprep.subr.mxu0 0.0
        %2158 = vmatpush2.xpose.msra.mxu0 0.0
        %2159 = vmatprep.subr.mxu0 0.0
        %2160 = vmatpush2.xpose.msra.mxu0 0.0
        %2161 = vmatprep.subr.mxu0 0.0
        %2162 = vmatpush2.xpose.msra.mxu0 0.0
        %2163 = vmatprep.subr.mxu0 0.0
        %2164 = vmatpush2.xpose.msra.mxu0 0.0
        %2165 = vmatprep.subr.mxu0 0.0
        %2166 = vmatpush2.xpose.msra.mxu0 0.0
        %2167 = vmatprep.subr.mxu0 0.0
        %2168 = vmatpush2.xpose.msra.mxu0 0.0
        %2169 = vmatprep.subr.mxu0 0.0
        %2170 = vmatpush2.xpose.msra.mxu0 0.0
        %2171 = vmatprep.subr.mxu0 0.0
        %2172 = vmatpush2.xpose.msra.mxu0 0.0
        %2173 = vmatprep.subr.mxu0 0.0
        %2174 = vmatpush2.xpose.msra.mxu0 0.0
        %2175 = vmatprep.mubr.f32.mxu0 0.0
        %v2176 = vand.u32 %v249, 4294901760
        %v2177 = vsub.f32 %v249, %v2176
        %v2178 = vand.u32 %v2177, 4294901760
        %v2179 = vsub.f32 %v2177, %v2178
        %v2180 = vand.u32 %v2179, 4294901760
        %2181 = vmatmul.mubr.f32.gmra.mxu0 %v2180
        %v2182 = vpop.f32.mrf.mxu0
        %v2183 = vadd.f32 0.0, %v2182
        %v2184 = vpop.f32.mrf.mxu0
        %2185 = vmatprep.mubr.f32.mxu0 0.0
        %v2186 = vand.u32 %v250, 4294901760
        %v2187 = vsub.f32 %v250, %v2186
        %v2188 = vand.u32 %v2187, 4294901760
        %v2189 = vsub.f32 %v2187, %v2188
        %v2190 = vand.u32 %v2189, 4294901760
        %2191 = vmatmul.mubr.f32.gmra.mxu0 %v2190
        %v2192 = vpop.f32.mrf.mxu0
        %v2193 = vadd.f32 0.0, %v2192
        %v2194 = vpop.f32.mrf.mxu0
        %2195 = vmatprep.mubr.f32.mxu0 0.0
        %v2196 = vand.u32 %v251, 4294901760
        %v2197 = vsub.f32 %v251, %v2196
        %v2198 = vand.u32 %v2197, 4294901760
        %v2199 = vsub.f32 %v2197, %v2198
        %v2200 = vand.u32 %v2199, 4294901760
        %2201 = vmatmul.mubr.f32.gmra.mxu0 %v2200
        %v2202 = vpop.f32.mrf.mxu0
        %v2203 = vadd.f32 0.0, %v2202
        %v2204 = vpop.f32.mrf.mxu0
        %2205 = vmatprep.mubr.f32.mxu0 0.0
        %v2206 = vand.u32 %v252, 4294901760
        %v2207 = vsub.f32 %v252, %v2206
        %v2208 = vand.u32 %v2207, 4294901760
        %v2209 = vsub.f32 %v2207, %v2208
        %v2210 = vand.u32 %v2209, 4294901760
        %2211 = vmatmul.mubr.f32.gmra.mxu0 %v2210
        %v2212 = vpop.f32.mrf.mxu0
        %v2213 = vadd.f32 0.0, %v2212
        %v2214 = vpop.f32.mrf.mxu0
        %2215 = vmatprep.mubr.f32.mxu0 0.0
        %v2216 = vand.u32 %v253, 4294901760
        %v2217 = vsub.f32 %v253, %v2216
        %v2218 = vand.u32 %v2217, 4294901760
        %v2219 = vsub.f32 %v2217, %v2218
        %v2220 = vand.u32 %v2219, 4294901760
        %2221 = vmatmul.mubr.f32.gmra.mxu0 %v2220
        %v2222 = vpop.f32.mrf.mxu0
        %v2223 = vadd.f32 0.0, %v2222
        %v2224 = vpop.f32.mrf.mxu0
        %2225 = vmatprep.mubr.f32.mxu0 0.0
        %v2226 = vand.u32 %v254, 4294901760
        %v2227 = vsub.f32 %v254, %v2226
        %v2228 = vand.u32 %v2227, 4294901760
        %v2229 = vsub.f32 %v2227, %v2228
        %v2230 = vand.u32 %v2229, 4294901760
        %2231 = vmatmul.mubr.f32.gmra.mxu0 %v2230
        %v2232 = vpop.f32.mrf.mxu0
        %v2233 = vadd.f32 0.0, %v2232
        %v2234 = vpop.f32.mrf.mxu0
        %2235 = vmatprep.mubr.f32.mxu0 0.0
        %v2236 = vand.u32 %v255, 4294901760
        %v2237 = vsub.f32 %v255, %v2236
        %v2238 = vand.u32 %v2237, 4294901760
        %v2239 = vsub.f32 %v2237, %v2238
        %v2240 = vand.u32 %v2239, 4294901760
        %2241 = vmatmul.mubr.f32.gmra.mxu0 %v2240
        %v2242 = vpop.f32.mrf.mxu0
        %v2243 = vadd.f32 0.0, %v2242
        %v2244 = vpop.f32.mrf.mxu0
        %2245 = vmatprep.mubr.f32.mxu0 0.0
        %v2246 = vand.u32 %v256, 4294901760
        %v2247 = vsub.f32 %v256, %v2246
        %v2248 = vand.u32 %v2247, 4294901760
        %v2249 = vsub.f32 %v2247, %v2248
        %v2250 = vand.u32 %v2249, 4294901760
        %2251 = vmatmul.mubr.f32.gmra.mxu0 %v2250
        %v2252 = vpop.f32.mrf.mxu0
        %v2253 = vadd.f32 0.0, %v2252
        %v2254 = vpop.f32.mrf.mxu0
        %2255 = vmatprep.mubr.f32.mxu0 0.0
        %v2256 = vand.u32 %v257, 4294901760
        %v2257 = vsub.f32 %v257, %v2256
        %v2258 = vand.u32 %v2257, 4294901760
        %v2259 = vsub.f32 %v2257, %v2258
        %v2260 = vand.u32 %v2259, 4294901760
        %2261 = vmatmul.mubr.f32.gmra.mxu0 %v2260
        %v2262 = vpop.f32.mrf.mxu0
        %v2263 = vadd.f32 0.0, %v2262
        %v2264 = vpop.f32.mrf.mxu0
        %2265 = vmatprep.mubr.f32.mxu0 0.0
        %v2266 = vand.u32 %v258, 4294901760
        %v2267 = vsub.f32 %v258, %v2266
        %v2268 = vand.u32 %v2267, 4294901760
        %v2269 = vsub.f32 %v2267, %v2268
        %v2270 = vand.u32 %v2269, 4294901760
        %2271 = vmatmul.mubr.f32.gmra.mxu0 %v2270
        %v2272 = vpop.f32.mrf.mxu0
        %v2273 = vadd.f32 0.0, %v2272
        %v2274 = vpop.f32.mrf.mxu0
        %2275 = vmatprep.mubr.f32.mxu0 0.0
        %v2276 = vand.u32 %v259, 4294901760
        %v2277 = vsub.f32 %v259, %v2276
        %v2278 = vand.u32 %v2277, 4294901760
        %v2279 = vsub.f32 %v2277, %v2278
        %v2280 = vand.u32 %v2279, 4294901760
        %2281 = vmatmul.mubr.f32.gmra.mxu0 %v2280
        %v2282 = vpop.f32.mrf.mxu0
        %v2283 = vadd.f32 0.0, %v2282
        %v2284 = vpop.f32.mrf.mxu0
        %2285 = vmatprep.mubr.f32.mxu0 0.0
        %v2286 = vand.u32 %v260, 4294901760
        %v2287 = vsub.f32 %v260, %v2286
        %v2288 = vand.u32 %v2287, 4294901760
        %v2289 = vsub.f32 %v2287, %v2288
        %v2290 = vand.u32 %v2289, 4294901760
        %2291 = vmatmul.mubr.f32.gmra.mxu0 %v2290
        %v2292 = vpop.f32.mrf.mxu0
        %v2293 = vadd.f32 0.0, %v2292
        %v2294 = vpop.f32.mrf.mxu0
        %2295 = vmatprep.mubr.f32.mxu0 0.0
        %v2296 = vand.u32 %v261, 4294901760
        %v2297 = vsub.f32 %v261, %v2296
        %v2298 = vand.u32 %v2297, 4294901760
        %v2299 = vsub.f32 %v2297, %v2298
        %v2300 = vand.u32 %v2299, 4294901760
        %2301 = vmatmul.mubr.f32.gmra.mxu0 %v2300
        %v2302 = vpop.f32.mrf.mxu0
        %v2303 = vadd.f32 0.0, %v2302
        %v2304 = vpop.f32.mrf.mxu0
        %2305 = vmatprep.mubr.f32.mxu0 0.0
        %v2306 = vand.u32 %v262, 4294901760
        %v2307 = vsub.f32 %v262, %v2306
        %v2308 = vand.u32 %v2307, 4294901760
        %v2309 = vsub.f32 %v2307, %v2308
        %v2310 = vand.u32 %v2309, 4294901760
        %2311 = vmatmul.mubr.f32.gmra.mxu0 %v2310
        %v2312 = vpop.f32.mrf.mxu0
        %v2313 = vadd.f32 0.0, %v2312
        %v2314 = vpop.f32.mrf.mxu0
        %2315 = vmatprep.mubr.f32.mxu0 0.0
        %v2316 = vand.u32 %v263, 4294901760
        %v2317 = vsub.f32 %v263, %v2316
        %v2318 = vand.u32 %v2317, 4294901760
        %v2319 = vsub.f32 %v2317, %v2318
        %v2320 = vand.u32 %v2319, 4294901760
        %2321 = vmatmul.mubr.f32.gmra.mxu0 %v2320
        %v2322 = vpop.f32.mrf.mxu0
        %v2323 = vadd.f32 0.0, %v2322
        %v2324 = vpop.f32.mrf.mxu0
        %2325 = vmatprep.mubr.f32.mxu0 0.0
        %v2326 = vand.u32 %v264, 4294901760
        %v2327 = vsub.f32 %v264, %v2326
        %v2328 = vand.u32 %v2327, 4294901760
        %v2329 = vsub.f32 %v2327, %v2328
        %v2330 = vand.u32 %v2329, 4294901760
        %2331 = vmatmul.mubr.f32.gmra.mxu0 %v2330
        %v2332 = vpop.f32.mrf.mxu0
        %v2333 = vadd.f32 0.0, %v2332
        %v2334 = vpop.f32.mrf.mxu0
        %2335 = vmatprep.mubr.f32.mxu0 0.0
        %v2336 = vand.u32 %v265, 4294901760
        %v2337 = vsub.f32 %v265, %v2336
        %v2338 = vand.u32 %v2337, 4294901760
        %v2339 = vsub.f32 %v2337, %v2338
        %v2340 = vand.u32 %v2339, 4294901760
        %2341 = vmatmul.mubr.f32.gmra.mxu0 %v2340
        %v2342 = vpop.f32.mrf.mxu0
        %v2343 = vadd.f32 0.0, %v2342
        %v2344 = vpop.f32.mrf.mxu0
        %2345 = vmatprep.mubr.f32.mxu0 0.0
        %v2346 = vand.u32 %v266, 4294901760
        %v2347 = vsub.f32 %v266, %v2346
        %v2348 = vand.u32 %v2347, 4294901760
        %v2349 = vsub.f32 %v2347, %v2348
        %v2350 = vand.u32 %v2349, 4294901760
        %2351 = vmatmul.mubr.f32.gmra.mxu0 %v2350
        %v2352 = vpop.f32.mrf.mxu0
        %v2353 = vadd.f32 0.0, %v2352
        %v2354 = vpop.f32.mrf.mxu0
        %2355 = vmatprep.mubr.f32.mxu0 0.0
        %v2356 = vand.u32 %v267, 4294901760
        %v2357 = vsub.f32 %v267, %v2356
        %v2358 = vand.u32 %v2357, 4294901760
        %v2359 = vsub.f32 %v2357, %v2358
        %v2360 = vand.u32 %v2359, 4294901760
        %2361 = vmatmul.mubr.f32.gmra.mxu0 %v2360
        %v2362 = vpop.f32.mrf.mxu0
        %v2363 = vadd.f32 0.0, %v2362
        %v2364 = vpop.f32.mrf.mxu0
        %2365 = vmatprep.mubr.f32.mxu0 0.0
        %v2366 = vand.u32 %v268, 4294901760
        %v2367 = vsub.f32 %v268, %v2366
        %v2368 = vand.u32 %v2367, 4294901760
        %v2369 = vsub.f32 %v2367, %v2368
        %v2370 = vand.u32 %v2369, 4294901760
        %2371 = vmatmul.mubr.f32.gmra.mxu0 %v2370
        %v2372 = vpop.f32.mrf.mxu0
        %v2373 = vadd.f32 0.0, %v2372
        %v2374 = vpop.f32.mrf.mxu0
        %2375 = vmatprep.mubr.f32.mxu0 0.0
        %v2376 = vand.u32 %v269, 4294901760
        %v2377 = vsub.f32 %v269, %v2376
        %v2378 = vand.u32 %v2377, 4294901760
        %v2379 = vsub.f32 %v2377, %v2378
        %v2380 = vand.u32 %v2379, 4294901760
        %2381 = vmatmul.mubr.f32.gmra.mxu0 %v2380
        %v2382 = vpop.f32.mrf.mxu0
        %v2383 = vadd.f32 0.0, %v2382
        %v2384 = vpop.f32.mrf.mxu0
        %2385 = vmatprep.mubr.f32.mxu0 0.0
        %v2386 = vand.u32 %v270, 4294901760
        %v2387 = vsub.f32 %v270, %v2386
        %v2388 = vand.u32 %v2387, 4294901760
        %v2389 = vsub.f32 %v2387, %v2388
        %v2390 = vand.u32 %v2389, 4294901760
        %2391 = vmatmul.mubr.f32.gmra.mxu0 %v2390
        %v2392 = vpop.f32.mrf.mxu0
        %v2393 = vadd.f32 0.0, %v2392
        %v2394 = vpop.f32.mrf.mxu0
        %2395 = vmatprep.mubr.f32.mxu0 0.0
        %v2396 = vand.u32 %v271, 4294901760
        %v2397 = vsub.f32 %v271, %v2396
        %v2398 = vand.u32 %v2397, 4294901760
        %v2399 = vsub.f32 %v2397, %v2398
        %v2400 = vand.u32 %v2399, 4294901760
        %2401 = vmatmul.mubr.f32.gmra.mxu0 %v2400
        %v2402 = vpop.f32.mrf.mxu0
        %v2403 = vadd.f32 0.0, %v2402
        %v2404 = vpop.f32.mrf.mxu0
        %2405 = vmatprep.mubr.f32.mxu0 0.0
        %v2406 = vand.u32 %v272, 4294901760
        %v2407 = vsub.f32 %v272, %v2406
        %v2408 = vand.u32 %v2407, 4294901760
        %v2409 = vsub.f32 %v2407, %v2408
        %v2410 = vand.u32 %v2409, 4294901760
        %2411 = vmatmul.mubr.f32.gmra.mxu0 %v2410
        %v2412 = vpop.f32.mrf.mxu0
        %v2413 = vadd.f32 0.0, %v2412
        %v2414 = vpop.f32.mrf.mxu0
        %2415 = vmatprep.mubr.f32.mxu0 0.0
        %v2416 = vand.u32 %v273, 4294901760
        %v2417 = vsub.f32 %v273, %v2416
        %v2418 = vand.u32 %v2417, 4294901760
        %v2419 = vsub.f32 %v2417, %v2418
        %v2420 = vand.u32 %v2419, 4294901760
        %2421 = vmatmul.mubr.f32.gmra.mxu0 %v2420
        %v2422 = vpop.f32.mrf.mxu0
        %v2423 = vadd.f32 0.0, %v2422
        %v2424 = vpop.f32.mrf.mxu0
        %2425 = vmatprep.mubr.f32.mxu0 0.0
        %v2426 = vand.u32 %v274, 4294901760
        %v2427 = vsub.f32 %v274, %v2426
        %v2428 = vand.u32 %v2427, 4294901760
        %v2429 = vsub.f32 %v2427, %v2428
        %v2430 = vand.u32 %v2429, 4294901760
        %2431 = vmatmul.mubr.f32.gmra.mxu0 %v2430
        %v2432 = vpop.f32.mrf.mxu0
        %v2433 = vadd.f32 0.0, %v2432
        %v2434 = vpop.f32.mrf.mxu0
        %2435 = vmatprep.mubr.f32.mxu0 0.0
        %v2436 = vand.u32 %v275, 4294901760
        %v2437 = vsub.f32 %v275, %v2436
        %v2438 = vand.u32 %v2437, 4294901760
        %v2439 = vsub.f32 %v2437, %v2438
        %v2440 = vand.u32 %v2439, 4294901760
        %2441 = vmatmul.mubr.f32.gmra.mxu0 %v2440
        %v2442 = vpop.f32.mrf.mxu0
        %v2443 = vadd.f32 0.0, %v2442
        %v2444 = vpop.f32.mrf.mxu0
        %2445 = vmatprep.mubr.f32.mxu0 0.0
        %v2446 = vand.u32 %v276, 4294901760
        %v2447 = vsub.f32 %v276, %v2446
        %v2448 = vand.u32 %v2447, 4294901760
        %v2449 = vsub.f32 %v2447, %v2448
        %v2450 = vand.u32 %v2449, 4294901760
        %2451 = vmatmul.mubr.f32.gmra.mxu0 %v2450
        %v2452 = vpop.f32.mrf.mxu0
        %v2453 = vadd.f32 0.0, %v2452
        %v2454 = vpop.f32.mrf.mxu0
        %2455 = vmatprep.mubr.f32.mxu0 0.0
        %v2456 = vand.u32 %v277, 4294901760
        %v2457 = vsub.f32 %v277, %v2456
        %v2458 = vand.u32 %v2457, 4294901760
        %v2459 = vsub.f32 %v2457, %v2458
        %v2460 = vand.u32 %v2459, 4294901760
        %2461 = vmatmul.mubr.f32.gmra.mxu0 %v2460
        %v2462 = vpop.f32.mrf.mxu0
        %v2463 = vadd.f32 0.0, %v2462
        %v2464 = vpop.f32.mrf.mxu0
        %2465 = vmatprep.mubr.f32.mxu0 0.0
        %v2466 = vand.u32 %v278, 4294901760
        %v2467 = vsub.f32 %v278, %v2466
        %v2468 = vand.u32 %v2467, 4294901760
        %v2469 = vsub.f32 %v2467, %v2468
        %v2470 = vand.u32 %v2469, 4294901760
        %2471 = vmatmul.mubr.f32.gmra.mxu0 %v2470
        %v2472 = vpop.f32.mrf.mxu0
        %v2473 = vadd.f32 0.0, %v2472
        %v2474 = vpop.f32.mrf.mxu0
        %2475 = vmatprep.mubr.f32.mxu0 0.0
        %v2476 = vand.u32 %v279, 4294901760
        %v2477 = vsub.f32 %v279, %v2476
        %v2478 = vand.u32 %v2477, 4294901760
        %v2479 = vsub.f32 %v2477, %v2478
        %v2480 = vand.u32 %v2479, 4294901760
        %2481 = vmatmul.mubr.f32.gmra.mxu0 %v2480
        %v2482 = vpop.f32.mrf.mxu0
        %v2483 = vadd.f32 0.0, %v2482
        %v2484 = vpop.f32.mrf.mxu0
        %2485 = vmatprep.mubr.f32.mxu0 0.0
        %v2486 = vand.u32 %v280, 4294901760
        %v2487 = vsub.f32 %v280, %v2486
        %v2488 = vand.u32 %v2487, 4294901760
        %v2489 = vsub.f32 %v2487, %v2488
        %v2490 = vand.u32 %v2489, 4294901760
        %2491 = vmatmul.mubr.f32.gmra.mxu0 %v2490
        %v2492 = vpop.f32.mrf.mxu0
        %v2493 = vadd.f32 0.0, %v2492
        %v2494 = vpop.f32.mrf.mxu0
        %2495 = vdwg.mxu0
        %2496 = vmatprep.subr.mxu0 0.0
        %2497 = vmatpush1.xpose.msra.mxu0 0.0
        %2498 = vmatprep.subr.mxu0 0.0
        %2499 = vmatpush1.xpose.msra.mxu0 0.0
        %2500 = vmatprep.subr.mxu0 0.0
        %2501 = vmatpush1.xpose.msra.mxu0 0.0
        %2502 = vmatprep.subr.mxu0 0.0
        %2503 = vmatpush1.xpose.msra.mxu0 0.0
        %2504 = vmatprep.subr.mxu0 0.0
        %2505 = vmatpush1.xpose.msra.mxu0 0.0
        %2506 = vmatprep.subr.mxu0 0.0
        %2507 = vmatpush1.xpose.msra.mxu0 0.0
        %2508 = vmatprep.subr.mxu0 0.0
        %2509 = vmatpush1.xpose.msra.mxu0 0.0
        %2510 = vmatprep.subr.mxu0 0.0
        %2511 = vmatpush1.xpose.msra.mxu0 0.0
        %2512 = vmatprep.subr.mxu0 0.0
        %2513 = vmatpush1.xpose.msra.mxu0 0.0
        %2514 = vmatprep.subr.mxu0 0.0
        %2515 = vmatpush1.xpose.msra.mxu0 0.0
        %2516 = vmatprep.subr.mxu0 0.0
        %2517 = vmatpush1.xpose.msra.mxu0 0.0
        %2518 = vmatprep.subr.mxu0 0.0
        %2519 = vmatpush1.xpose.msra.mxu0 0.0
        %2520 = vmatprep.subr.mxu0 0.0
        %2521 = vmatpush1.xpose.msra.mxu0 0.0
        %2522 = vmatprep.subr.mxu0 0.0
        %2523 = vmatpush1.xpose.msra.mxu0 0.0
        %2524 = vmatprep.subr.mxu0 0.0
        %v2525 = vand.u32 %v2108, 4294901760
        %v2526 = vsub.f32 %v2108, %v2525
        %v2527 = vand.u32 %v2526, 4294901760
        %v2528 = vsub.f32 %v2526, %v2527
        %v2529 = vand.u32 %v2528, 4294901760
        %2530 = vmatpush1.xpose.msra.mxu0 %v2529
        %2531 = vmatprep.subr.mxu0 0.0
        %v2532 = vand.u32 %v2107, 4294901760
        %v2533 = vsub.f32 %v2107, %v2532
        %v2534 = vand.u32 %v2533, 4294901760
        %v2535 = vsub.f32 %v2533, %v2534
        %v2536 = vand.u32 %v2535, 4294901760
        %2537 = vmatpush1.xpose.msra.mxu0 %v2536
        %2538 = vmatprep.subr.mxu0 0.0
        %2539 = vmatpush2.xpose.msra.mxu0 0.0
        %2540 = vmatprep.subr.mxu0 0.0
        %2541 = vmatpush2.xpose.msra.mxu0 0.0
        %2542 = vmatprep.subr.mxu0 0.0
        %2543 = vmatpush2.xpose.msra.mxu0 0.0
        %2544 = vmatprep.subr.mxu0 0.0
        %2545 = vmatpush2.xpose.msra.mxu0 0.0
        %2546 = vmatprep.subr.mxu0 0.0
        %2547 = vmatpush2.xpose.msra.mxu0 0.0
        %2548 = vmatprep.subr.mxu0 0.0
        %2549 = vmatpush2.xpose.msra.mxu0 0.0
        %2550 = vmatprep.subr.mxu0 0.0
        %2551 = vmatpush2.xpose.msra.mxu0 0.0
        %2552 = vmatprep.subr.mxu0 0.0
        %2553 = vmatpush2.xpose.msra.mxu0 0.0
        %2554 = vmatprep.subr.mxu0 0.0
        %2555 = vmatpush2.xpose.msra.mxu0 0.0
        %2556 = vmatprep.subr.mxu0 0.0
        %2557 = vmatpush2.xpose.msra.mxu0 0.0
        %2558 = vmatprep.subr.mxu0 0.0
        %2559 = vmatpush2.xpose.msra.mxu0 0.0
        %2560 = vmatprep.subr.mxu0 0.0
        %2561 = vmatpush2.xpose.msra.mxu0 0.0
        %2562 = vmatprep.subr.mxu0 0.0
        %2563 = vmatpush2.xpose.msra.mxu0 0.0
        %2564 = vmatprep.subr.mxu0 0.0
        %2565 = vmatpush2.xpose.msra.mxu0 0.0
        %2566 = vmatprep.subr.mxu0 0.0
        %2567 = vmatpush2.xpose.msra.mxu0 0.0
        %2568 = vmatprep.subr.mxu0 0.0
        %2569 = vmatpush2.xpose.msra.mxu0 0.0
        %2570 = vmatprep.mubr.f32.mxu0 0.0
        %v2571 = vand.u32 %v249, 4294901760
        %2572 = vmatmul.mubr.f32.gmra.mxu0 %v2571
        %v2573 = vpop.f32.mrf.mxu0
        %v2574 = vadd.f32 %v2183, %v2573
        %v2575 = vpop.f32.mrf.mxu0
        %2576 = vmatprep.mubr.f32.mxu0 0.0
        %v2577 = vand.u32 %v250, 4294901760
        %2578 = vmatmul.mubr.f32.gmra.mxu0 %v2577
        %v2579 = vpop.f32.mrf.mxu0
        %v2580 = vadd.f32 %v2193, %v2579
        %v2581 = vpop.f32.mrf.mxu0
        %2582 = vmatprep.mubr.f32.mxu0 0.0
        %v2583 = vand.u32 %v251, 4294901760
        %2584 = vmatmul.mubr.f32.gmra.mxu0 %v2583
        %v2585 = vpop.f32.mrf.mxu0
        %v2586 = vadd.f32 %v2203, %v2585
        %v2587 = vpop.f32.mrf.mxu0
        %2588 = vmatprep.mubr.f32.mxu0 0.0
        %v2589 = vand.u32 %v252, 4294901760
        %2590 = vmatmul.mubr.f32.gmra.mxu0 %v2589
        %v2591 = vpop.f32.mrf.mxu0
        %v2592 = vadd.f32 %v2213, %v2591
        %v2593 = vpop.f32.mrf.mxu0
        %2594 = vmatprep.mubr.f32.mxu0 0.0
        %v2595 = vand.u32 %v253, 4294901760
        %2596 = vmatmul.mubr.f32.gmra.mxu0 %v2595
        %v2597 = vpop.f32.mrf.mxu0
        %v2598 = vadd.f32 %v2223, %v2597
        %v2599 = vpop.f32.mrf.mxu0
        %2600 = vmatprep.mubr.f32.mxu0 0.0
        %v2601 = vand.u32 %v254, 4294901760
        %2602 = vmatmul.mubr.f32.gmra.mxu0 %v2601
        %v2603 = vpop.f32.mrf.mxu0
        %v2604 = vadd.f32 %v2233, %v2603
        %v2605 = vpop.f32.mrf.mxu0
        %2606 = vmatprep.mubr.f32.mxu0 0.0
        %v2607 = vand.u32 %v255, 4294901760
        %2608 = vmatmul.mubr.f32.gmra.mxu0 %v2607
        %v2609 = vpop.f32.mrf.mxu0
        %v2610 = vadd.f32 %v2243, %v2609
        %v2611 = vpop.f32.mrf.mxu0
        %2612 = vmatprep.mubr.f32.mxu0 0.0
        %v2613 = vand.u32 %v256, 4294901760
        %2614 = vmatmul.mubr.f32.gmra.mxu0 %v2613
        %v2615 = vpop.f32.mrf.mxu0
        %v2616 = vadd.f32 %v2253, %v2615
        %v2617 = vpop.f32.mrf.mxu0
        %2618 = vmatprep.mubr.f32.mxu0 0.0
        %v2619 = vand.u32 %v257, 4294901760
        %2620 = vmatmul.mubr.f32.gmra.mxu0 %v2619
        %v2621 = vpop.f32.mrf.mxu0
        %v2622 = vadd.f32 %v2263, %v2621
        %v2623 = vpop.f32.mrf.mxu0
        %2624 = vmatprep.mubr.f32.mxu0 0.0
        %v2625 = vand.u32 %v258, 4294901760
        %2626 = vmatmul.mubr.f32.gmra.mxu0 %v2625
        %v2627 = vpop.f32.mrf.mxu0
        %v2628 = vadd.f32 %v2273, %v2627
        %v2629 = vpop.f32.mrf.mxu0
        %2630 = vmatprep.mubr.f32.mxu0 0.0
        %v2631 = vand.u32 %v259, 4294901760
        %2632 = vmatmul.mubr.f32.gmra.mxu0 %v2631
        %v2633 = vpop.f32.mrf.mxu0
        %v2634 = vadd.f32 %v2283, %v2633
        %v2635 = vpop.f32.mrf.mxu0
        %2636 = vmatprep.mubr.f32.mxu0 0.0
        %v2637 = vand.u32 %v260, 4294901760
        %2638 = vmatmul.mubr.f32.gmra.mxu0 %v2637
        %v2639 = vpop.f32.mrf.mxu0
        %v2640 = vadd.f32 %v2293, %v2639
        %v2641 = vpop.f32.mrf.mxu0
        %2642 = vmatprep.mubr.f32.mxu0 0.0
        %v2643 = vand.u32 %v261, 4294901760
        %2644 = vmatmul.mubr.f32.gmra.mxu0 %v2643
        %v2645 = vpop.f32.mrf.mxu0
        %v2646 = vadd.f32 %v2303, %v2645
        %v2647 = vpop.f32.mrf.mxu0
        %2648 = vmatprep.mubr.f32.mxu0 0.0
        %v2649 = vand.u32 %v262, 4294901760
        %2650 = vmatmul.mubr.f32.gmra.mxu0 %v2649
        %v2651 = vpop.f32.mrf.mxu0
        %v2652 = vadd.f32 %v2313, %v2651
        %v2653 = vpop.f32.mrf.mxu0
        %2654 = vmatprep.mubr.f32.mxu0 0.0
        %v2655 = vand.u32 %v263, 4294901760
        %2656 = vmatmul.mubr.f32.gmra.mxu0 %v2655
        %v2657 = vpop.f32.mrf.mxu0
        %v2658 = vadd.f32 %v2323, %v2657
        %v2659 = vpop.f32.mrf.mxu0
        %2660 = vmatprep.mubr.f32.mxu0 0.0
        %v2661 = vand.u32 %v264, 4294901760
        %2662 = vmatmul.mubr.f32.gmra.mxu0 %v2661
        %v2663 = vpop.f32.mrf.mxu0
        %v2664 = vadd.f32 %v2333, %v2663
        %v2665 = vpop.f32.mrf.mxu0
        %2666 = vmatprep.mubr.f32.mxu0 0.0
        %v2667 = vand.u32 %v265, 4294901760
        %2668 = vmatmul.mubr.f32.gmra.mxu0 %v2667
        %v2669 = vpop.f32.mrf.mxu0
        %v2670 = vadd.f32 %v2343, %v2669
        %v2671 = vpop.f32.mrf.mxu0
        %2672 = vmatprep.mubr.f32.mxu0 0.0
        %v2673 = vand.u32 %v266, 4294901760
        %2674 = vmatmul.mubr.f32.gmra.mxu0 %v2673
        %v2675 = vpop.f32.mrf.mxu0
        %v2676 = vadd.f32 %v2353, %v2675
        %v2677 = vpop.f32.mrf.mxu0
        %2678 = vmatprep.mubr.f32.mxu0 0.0
        %v2679 = vand.u32 %v267, 4294901760
        %2680 = vmatmul.mubr.f32.gmra.mxu0 %v2679
        %v2681 = vpop.f32.mrf.mxu0
        %v2682 = vadd.f32 %v2363, %v2681
        %v2683 = vpop.f32.mrf.mxu0
        %2684 = vmatprep.mubr.f32.mxu0 0.0
        %v2685 = vand.u32 %v268, 4294901760
        %2686 = vmatmul.mubr.f32.gmra.mxu0 %v2685
        %v2687 = vpop.f32.mrf.mxu0
        %v2688 = vadd.f32 %v2373, %v2687
        %v2689 = vpop.f32.mrf.mxu0
        %2690 = vmatprep.mubr.f32.mxu0 0.0
        %v2691 = vand.u32 %v269, 4294901760
        %2692 = vmatmul.mubr.f32.gmra.mxu0 %v2691
        %v2693 = vpop.f32.mrf.mxu0
        %v2694 = vadd.f32 %v2383, %v2693
        %v2695 = vpop.f32.mrf.mxu0
        %2696 = vmatprep.mubr.f32.mxu0 0.0
        %v2697 = vand.u32 %v270, 4294901760
        %2698 = vmatmul.mubr.f32.gmra.mxu0 %v2697
        %v2699 = vpop.f32.mrf.mxu0
        %v2700 = vadd.f32 %v2393, %v2699
        %v2701 = vpop.f32.mrf.mxu0
        %2702 = vmatprep.mubr.f32.mxu0 0.0
        %v2703 = vand.u32 %v271, 4294901760
        %2704 = vmatmul.mubr.f32.gmra.mxu0 %v2703
        %v2705 = vpop.f32.mrf.mxu0
        %v2706 = vadd.f32 %v2403, %v2705
        %v2707 = vpop.f32.mrf.mxu0
        %2708 = vmatprep.mubr.f32.mxu0 0.0
        %v2709 = vand.u32 %v272, 4294901760
        %2710 = vmatmul.mubr.f32.gmra.mxu0 %v2709
        %v2711 = vpop.f32.mrf.mxu0
        %v2712 = vadd.f32 %v2413, %v2711
        %v2713 = vpop.f32.mrf.mxu0
        %2714 = vmatprep.mubr.f32.mxu0 0.0
        %v2715 = vand.u32 %v273, 4294901760
        %2716 = vmatmul.mubr.f32.gmra.mxu0 %v2715
        %v2717 = vpop.f32.mrf.mxu0
        %v2718 = vadd.f32 %v2423, %v2717
        %v2719 = vpop.f32.mrf.mxu0
        %2720 = vmatprep.mubr.f32.mxu0 0.0
        %v2721 = vand.u32 %v274, 4294901760
        %2722 = vmatmul.mubr.f32.gmra.mxu0 %v2721
        %v2723 = vpop.f32.mrf.mxu0
        %v2724 = vadd.f32 %v2433, %v2723
        %v2725 = vpop.f32.mrf.mxu0
        %2726 = vmatprep.mubr.f32.mxu0 0.0
        %v2727 = vand.u32 %v275, 4294901760
        %2728 = vmatmul.mubr.f32.gmra.mxu0 %v2727
        %v2729 = vpop.f32.mrf.mxu0
        %v2730 = vadd.f32 %v2443, %v2729
        %v2731 = vpop.f32.mrf.mxu0
        %2732 = vmatprep.mubr.f32.mxu0 0.0
        %v2733 = vand.u32 %v276, 4294901760
        %2734 = vmatmul.mubr.f32.gmra.mxu0 %v2733
        %v2735 = vpop.f32.mrf.mxu0
        %v2736 = vadd.f32 %v2453, %v2735
        %v2737 = vpop.f32.mrf.mxu0
        %2738 = vmatprep.mubr.f32.mxu0 0.0
        %v2739 = vand.u32 %v277, 4294901760
        %2740 = vmatmul.mubr.f32.gmra.mxu0 %v2739
        %v2741 = vpop.f32.mrf.mxu0
        %v2742 = vadd.f32 %v2463, %v2741
        %v2743 = vpop.f32.mrf.mxu0
        %2744 = vmatprep.mubr.f32.mxu0 0.0
        %v2745 = vand.u32 %v278, 4294901760
        %2746 = vmatmul.mubr.f32.gmra.mxu0 %v2745
        %v2747 = vpop.f32.mrf.mxu0
        %v2748 = vadd.f32 %v2473, %v2747
        %v2749 = vpop.f32.mrf.mxu0
        %2750 = vmatprep.mubr.f32.mxu0 0.0
        %v2751 = vand.u32 %v279, 4294901760
        %2752 = vmatmul.mubr.f32.gmra.mxu0 %v2751
        %v2753 = vpop.f32.mrf.mxu0
        %v2754 = vadd.f32 %v2483, %v2753
        %v2755 = vpop.f32.mrf.mxu0
        %2756 = vmatprep.mubr.f32.mxu0 0.0
        %v2757 = vand.u32 %v280, 4294901760
        %2758 = vmatmul.mubr.f32.gmra.mxu0 %v2757
        %v2759 = vpop.f32.mrf.mxu0
        %v2760 = vadd.f32 %v2493, %v2759
        %v2761 = vpop.f32.mrf.mxu0
        %2762 = vdwg.mxu0
        %2763 = vmatprep.subr.mxu0 0.0
        %2764 = vmatpush1.xpose.msra.mxu0 0.0
        %2765 = vmatprep.subr.mxu0 0.0
        %2766 = vmatpush1.xpose.msra.mxu0 0.0
        %2767 = vmatprep.subr.mxu0 0.0
        %2768 = vmatpush1.xpose.msra.mxu0 0.0
        %2769 = vmatprep.subr.mxu0 0.0
        %2770 = vmatpush1.xpose.msra.mxu0 0.0
        %2771 = vmatprep.subr.mxu0 0.0
        %2772 = vmatpush1.xpose.msra.mxu0 0.0
        %2773 = vmatprep.subr.mxu0 0.0
        %2774 = vmatpush1.xpose.msra.mxu0 0.0
        %2775 = vmatprep.subr.mxu0 0.0
        %2776 = vmatpush1.xpose.msra.mxu0 0.0
        %2777 = vmatprep.subr.mxu0 0.0
        %2778 = vmatpush1.xpose.msra.mxu0 0.0
        %2779 = vmatprep.subr.mxu0 0.0
        %2780 = vmatpush1.xpose.msra.mxu0 0.0
        %2781 = vmatprep.subr.mxu0 0.0
        %2782 = vmatpush1.xpose.msra.mxu0 0.0
        %2783 = vmatprep.subr.mxu0 0.0
        %2784 = vmatpush1.xpose.msra.mxu0 0.0
        %2785 = vmatprep.subr.mxu0 0.0
        %2786 = vmatpush1.xpose.msra.mxu0 0.0
        %2787 = vmatprep.subr.mxu0 0.0
        %2788 = vmatpush1.xpose.msra.mxu0 0.0
        %2789 = vmatprep.subr.mxu0 0.0
        %2790 = vmatpush1.xpose.msra.mxu0 0.0
        %2791 = vmatprep.subr.mxu0 0.0
        %v2792 = vand.u32 %v2108, 4294901760
        %v2793 = vsub.f32 %v2108, %v2792
        %2794 = vmatpush1.xpose.msra.mxu0 %v2793
        %2795 = vmatprep.subr.mxu0 0.0
        %v2796 = vand.u32 %v2107, 4294901760
        %v2797 = vsub.f32 %v2107, %v2796
        %2798 = vmatpush1.xpose.msra.mxu0 %v2797
        %2799 = vmatprep.subr.mxu0 0.0
        %2800 = vmatpush2.xpose.msra.mxu0 0.0
        %2801 = vmatprep.subr.mxu0 0.0
        %2802 = vmatpush2.xpose.msra.mxu0 0.0
        %2803 = vmatprep.subr.mxu0 0.0
        %2804 = vmatpush2.xpose.msra.mxu0 0.0
        %2805 = vmatprep.subr.mxu0 0.0
        %2806 = vmatpush2.xpose.msra.mxu0 0.0
        %2807 = vmatprep.subr.mxu0 0.0
        %2808 = vmatpush2.xpose.msra.mxu0 0.0
        %2809 = vmatprep.subr.mxu0 0.0
        %2810 = vmatpush2.xpose.msra.mxu0 0.0
        %2811 = vmatprep.subr.mxu0 0.0
        %2812 = vmatpush2.xpose.msra.mxu0 0.0
        %2813 = vmatprep.subr.mxu0 0.0
        %2814 = vmatpush2.xpose.msra.mxu0 0.0
        %2815 = vmatprep.subr.mxu0 0.0
        %2816 = vmatpush2.xpose.msra.mxu0 0.0
        %2817 = vmatprep.subr.mxu0 0.0
        %2818 = vmatpush2.xpose.msra.mxu0 0.0
        %2819 = vmatprep.subr.mxu0 0.0
        %2820 = vmatpush2.xpose.msra.mxu0 0.0
        %2821 = vmatprep.subr.mxu0 0.0
        %2822 = vmatpush2.xpose.msra.mxu0 0.0
        %2823 = vmatprep.subr.mxu0 0.0
        %2824 = vmatpush2.xpose.msra.mxu0 0.0
        %2825 = vmatprep.subr.mxu0 0.0
        %2826 = vmatpush2.xpose.msra.mxu0 0.0
        %2827 = vmatprep.subr.mxu0 0.0
        %2828 = vmatpush2.xpose.msra.mxu0 0.0
        %2829 = vmatprep.subr.mxu0 0.0
        %2830 = vmatpush2.xpose.msra.mxu0 0.0
        %2831 = vmatprep.mubr.f32.mxu0 0.0
        %v2832 = vand.u32 %v249, 4294901760
        %v2833 = vsub.f32 %v249, %v2832
        %2834 = vmatmul.mubr.f32.gmra.mxu0 %v2833
        %v2835 = vpop.f32.mrf.mxu0
        %v2836 = vadd.f32 %v2574, %v2835
        %v2837 = vpop.f32.mrf.mxu0
        %2838 = vmatprep.mubr.f32.mxu0 0.0
        %v2839 = vand.u32 %v250, 4294901760
        %v2840 = vsub.f32 %v250, %v2839
        %2841 = vmatmul.mubr.f32.gmra.mxu0 %v2840
        %v2842 = vpop.f32.mrf.mxu0
        %v2843 = vadd.f32 %v2580, %v2842
        %v2844 = vpop.f32.mrf.mxu0
        %2845 = vmatprep.mubr.f32.mxu0 0.0
        %v2846 = vand.u32 %v251, 4294901760
        %v2847 = vsub.f32 %v251, %v2846
        %2848 = vmatmul.mubr.f32.gmra.mxu0 %v2847
        %v2849 = vpop.f32.mrf.mxu0
        %v2850 = vadd.f32 %v2586, %v2849
        %v2851 = vpop.f32.mrf.mxu0
        %2852 = vmatprep.mubr.f32.mxu0 0.0
        %v2853 = vand.u32 %v252, 4294901760
        %v2854 = vsub.f32 %v252, %v2853
        %2855 = vmatmul.mubr.f32.gmra.mxu0 %v2854
        %v2856 = vpop.f32.mrf.mxu0
        %v2857 = vadd.f32 %v2592, %v2856
        %v2858 = vpop.f32.mrf.mxu0
        %2859 = vmatprep.mubr.f32.mxu0 0.0
        %v2860 = vand.u32 %v253, 4294901760
        %v2861 = vsub.f32 %v253, %v2860
        %2862 = vmatmul.mubr.f32.gmra.mxu0 %v2861
        %v2863 = vpop.f32.mrf.mxu0
        %v2864 = vadd.f32 %v2598, %v2863
        %v2865 = vpop.f32.mrf.mxu0
        %2866 = vmatprep.mubr.f32.mxu0 0.0
        %v2867 = vand.u32 %v254, 4294901760
        %v2868 = vsub.f32 %v254, %v2867
        %2869 = vmatmul.mubr.f32.gmra.mxu0 %v2868
        %v2870 = vpop.f32.mrf.mxu0
        %v2871 = vadd.f32 %v2604, %v2870
        %v2872 = vpop.f32.mrf.mxu0
        %2873 = vmatprep.mubr.f32.mxu0 0.0
        %v2874 = vand.u32 %v255, 4294901760
        %v2875 = vsub.f32 %v255, %v2874
        %2876 = vmatmul.mubr.f32.gmra.mxu0 %v2875
        %v2877 = vpop.f32.mrf.mxu0
        %v2878 = vadd.f32 %v2610, %v2877
        %v2879 = vpop.f32.mrf.mxu0
        %2880 = vmatprep.mubr.f32.mxu0 0.0
        %v2881 = vand.u32 %v256, 4294901760
        %v2882 = vsub.f32 %v256, %v2881
        %2883 = vmatmul.mubr.f32.gmra.mxu0 %v2882
        %v2884 = vpop.f32.mrf.mxu0
        %v2885 = vadd.f32 %v2616, %v2884
        %v2886 = vpop.f32.mrf.mxu0
        %2887 = vmatprep.mubr.f32.mxu0 0.0
        %v2888 = vand.u32 %v257, 4294901760
        %v2889 = vsub.f32 %v257, %v2888
        %2890 = vmatmul.mubr.f32.gmra.mxu0 %v2889
        %v2891 = vpop.f32.mrf.mxu0
        %v2892 = vadd.f32 %v2622, %v2891
        %v2893 = vpop.f32.mrf.mxu0
        %2894 = vmatprep.mubr.f32.mxu0 0.0
        %v2895 = vand.u32 %v258, 4294901760
        %v2896 = vsub.f32 %v258, %v2895
        %2897 = vmatmul.mubr.f32.gmra.mxu0 %v2896
        %v2898 = vpop.f32.mrf.mxu0
        %v2899 = vadd.f32 %v2628, %v2898
        %v2900 = vpop.f32.mrf.mxu0
        %2901 = vmatprep.mubr.f32.mxu0 0.0
        %v2902 = vand.u32 %v259, 4294901760
        %v2903 = vsub.f32 %v259, %v2902
        %2904 = vmatmul.mubr.f32.gmra.mxu0 %v2903
        %v2905 = vpop.f32.mrf.mxu0
        %v2906 = vadd.f32 %v2634, %v2905
        %v2907 = vpop.f32.mrf.mxu0
        %2908 = vmatprep.mubr.f32.mxu0 0.0
        %v2909 = vand.u32 %v260, 4294901760
        %v2910 = vsub.f32 %v260, %v2909
        %2911 = vmatmul.mubr.f32.gmra.mxu0 %v2910
        %v2912 = vpop.f32.mrf.mxu0
        %v2913 = vadd.f32 %v2640, %v2912
        %v2914 = vpop.f32.mrf.mxu0
        %2915 = vmatprep.mubr.f32.mxu0 0.0
        %v2916 = vand.u32 %v261, 4294901760
        %v2917 = vsub.f32 %v261, %v2916
        %2918 = vmatmul.mubr.f32.gmra.mxu0 %v2917
        %v2919 = vpop.f32.mrf.mxu0
        %v2920 = vadd.f32 %v2646, %v2919
        %v2921 = vpop.f32.mrf.mxu0
        %2922 = vmatprep.mubr.f32.mxu0 0.0
        %v2923 = vand.u32 %v262, 4294901760
        %v2924 = vsub.f32 %v262, %v2923
        %2925 = vmatmul.mubr.f32.gmra.mxu0 %v2924
        %v2926 = vpop.f32.mrf.mxu0
        %v2927 = vadd.f32 %v2652, %v2926
        %v2928 = vpop.f32.mrf.mxu0
        %2929 = vmatprep.mubr.f32.mxu0 0.0
        %v2930 = vand.u32 %v263, 4294901760
        %v2931 = vsub.f32 %v263, %v2930
        %2932 = vmatmul.mubr.f32.gmra.mxu0 %v2931
        %v2933 = vpop.f32.mrf.mxu0
        %v2934 = vadd.f32 %v2658, %v2933
        %v2935 = vpop.f32.mrf.mxu0
        %2936 = vmatprep.mubr.f32.mxu0 0.0
        %v2937 = vand.u32 %v264, 4294901760
        %v2938 = vsub.f32 %v264, %v2937
        %2939 = vmatmul.mubr.f32.gmra.mxu0 %v2938
        %v2940 = vpop.f32.mrf.mxu0
        %v2941 = vadd.f32 %v2664, %v2940
        %v2942 = vpop.f32.mrf.mxu0
        %2943 = vmatprep.mubr.f32.mxu0 0.0
        %v2944 = vand.u32 %v265, 4294901760
        %v2945 = vsub.f32 %v265, %v2944
        %2946 = vmatmul.mubr.f32.gmra.mxu0 %v2945
        %v2947 = vpop.f32.mrf.mxu0
        %v2948 = vadd.f32 %v2670, %v2947
        %v2949 = vpop.f32.mrf.mxu0
        %2950 = vmatprep.mubr.f32.mxu0 0.0
        %v2951 = vand.u32 %v266, 4294901760
        %v2952 = vsub.f32 %v266, %v2951
        %2953 = vmatmul.mubr.f32.gmra.mxu0 %v2952
        %v2954 = vpop.f32.mrf.mxu0
        %v2955 = vadd.f32 %v2676, %v2954
        %v2956 = vpop.f32.mrf.mxu0
        %2957 = vmatprep.mubr.f32.mxu0 0.0
        %v2958 = vand.u32 %v267, 4294901760
        %v2959 = vsub.f32 %v267, %v2958
        %2960 = vmatmul.mubr.f32.gmra.mxu0 %v2959
        %v2961 = vpop.f32.mrf.mxu0
        %v2962 = vadd.f32 %v2682, %v2961
        %v2963 = vpop.f32.mrf.mxu0
        %2964 = vmatprep.mubr.f32.mxu0 0.0
        %v2965 = vand.u32 %v268, 4294901760
        %v2966 = vsub.f32 %v268, %v2965
        %2967 = vmatmul.mubr.f32.gmra.mxu0 %v2966
        %v2968 = vpop.f32.mrf.mxu0
        %v2969 = vadd.f32 %v2688, %v2968
        %v2970 = vpop.f32.mrf.mxu0
        %2971 = vmatprep.mubr.f32.mxu0 0.0
        %v2972 = vand.u32 %v269, 4294901760
        %v2973 = vsub.f32 %v269, %v2972
        %2974 = vmatmul.mubr.f32.gmra.mxu0 %v2973
        %v2975 = vpop.f32.mrf.mxu0
        %v2976 = vadd.f32 %v2694, %v2975
        %v2977 = vpop.f32.mrf.mxu0
        %2978 = vmatprep.mubr.f32.mxu0 0.0
        %v2979 = vand.u32 %v270, 4294901760
        %v2980 = vsub.f32 %v270, %v2979
        %2981 = vmatmul.mubr.f32.gmra.mxu0 %v2980
        %v2982 = vpop.f32.mrf.mxu0
        %v2983 = vadd.f32 %v2700, %v2982
        %v2984 = vpop.f32.mrf.mxu0
        %2985 = vmatprep.mubr.f32.mxu0 0.0
        %v2986 = vand.u32 %v271, 4294901760
        %v2987 = vsub.f32 %v271, %v2986
        %2988 = vmatmul.mubr.f32.gmra.mxu0 %v2987
        %v2989 = vpop.f32.mrf.mxu0
        %v2990 = vadd.f32 %v2706, %v2989
        %v2991 = vpop.f32.mrf.mxu0
        %2992 = vmatprep.mubr.f32.mxu0 0.0
        %v2993 = vand.u32 %v272, 4294901760
        %v2994 = vsub.f32 %v272, %v2993
        %2995 = vmatmul.mubr.f32.gmra.mxu0 %v2994
        %v2996 = vpop.f32.mrf.mxu0
        %v2997 = vadd.f32 %v2712, %v2996
        %v2998 = vpop.f32.mrf.mxu0
        %2999 = vmatprep.mubr.f32.mxu0 0.0
        %v3000 = vand.u32 %v273, 4294901760
        %v3001 = vsub.f32 %v273, %v3000
        %3002 = vmatmul.mubr.f32.gmra.mxu0 %v3001
        %v3003 = vpop.f32.mrf.mxu0
        %v3004 = vadd.f32 %v2718, %v3003
        %v3005 = vpop.f32.mrf.mxu0
        %3006 = vmatprep.mubr.f32.mxu0 0.0
        %v3007 = vand.u32 %v274, 4294901760
        %v3008 = vsub.f32 %v274, %v3007
        %3009 = vmatmul.mubr.f32.gmra.mxu0 %v3008
        %v3010 = vpop.f32.mrf.mxu0
        %v3011 = vadd.f32 %v2724, %v3010
        %v3012 = vpop.f32.mrf.mxu0
        %3013 = vmatprep.mubr.f32.mxu0 0.0
        %v3014 = vand.u32 %v275, 4294901760
        %v3015 = vsub.f32 %v275, %v3014
        %3016 = vmatmul.mubr.f32.gmra.mxu0 %v3015
        %v3017 = vpop.f32.mrf.mxu0
        %v3018 = vadd.f32 %v2730, %v3017
        %v3019 = vpop.f32.mrf.mxu0
        %3020 = vmatprep.mubr.f32.mxu0 0.0
        %v3021 = vand.u32 %v276, 4294901760
        %v3022 = vsub.f32 %v276, %v3021
        %3023 = vmatmul.mubr.f32.gmra.mxu0 %v3022
        %v3024 = vpop.f32.mrf.mxu0
        %v3025 = vadd.f32 %v2736, %v3024
        %v3026 = vpop.f32.mrf.mxu0
        %3027 = vmatprep.mubr.f32.mxu0 0.0
        %v3028 = vand.u32 %v277, 4294901760
        %v3029 = vsub.f32 %v277, %v3028
        %3030 = vmatmul.mubr.f32.gmra.mxu0 %v3029
        %v3031 = vpop.f32.mrf.mxu0
        %v3032 = vadd.f32 %v2742, %v3031
        %v3033 = vpop.f32.mrf.mxu0
        %3034 = vmatprep.mubr.f32.mxu0 0.0
        %v3035 = vand.u32 %v278, 4294901760
        %v3036 = vsub.f32 %v278, %v3035
        %3037 = vmatmul.mubr.f32.gmra.mxu0 %v3036
        %v3038 = vpop.f32.mrf.mxu0
        %v3039 = vadd.f32 %v2748, %v3038
        %v3040 = vpop.f32.mrf.mxu0
        %3041 = vmatprep.mubr.f32.mxu0 0.0
        %v3042 = vand.u32 %v279, 4294901760
        %v3043 = vsub.f32 %v279, %v3042
        %3044 = vmatmul.mubr.f32.gmra.mxu0 %v3043
        %v3045 = vpop.f32.mrf.mxu0
        %v3046 = vadd.f32 %v2754, %v3045
        %v3047 = vpop.f32.mrf.mxu0
        %3048 = vmatprep.mubr.f32.mxu0 0.0
        %v3049 = vand.u32 %v280, 4294901760
        %v3050 = vsub.f32 %v280, %v3049
        %3051 = vmatmul.mubr.f32.gmra.mxu0 %v3050
        %v3052 = vpop.f32.mrf.mxu0
        %v3053 = vadd.f32 %v2760, %v3052
        %v3054 = vpop.f32.mrf.mxu0
        %3055 = vdwg.mxu0
        %3056 = vmatprep.subr.mxu0 0.0
        %3057 = vmatpush1.xpose.msra.mxu0 0.0
        %3058 = vmatprep.subr.mxu0 0.0
        %3059 = vmatpush1.xpose.msra.mxu0 0.0
        %3060 = vmatprep.subr.mxu0 0.0
        %3061 = vmatpush1.xpose.msra.mxu0 0.0
        %3062 = vmatprep.subr.mxu0 0.0
        %3063 = vmatpush1.xpose.msra.mxu0 0.0
        %3064 = vmatprep.subr.mxu0 0.0
        %3065 = vmatpush1.xpose.msra.mxu0 0.0
        %3066 = vmatprep.subr.mxu0 0.0
        %3067 = vmatpush1.xpose.msra.mxu0 0.0
        %3068 = vmatprep.subr.mxu0 0.0
        %3069 = vmatpush1.xpose.msra.mxu0 0.0
        %3070 = vmatprep.subr.mxu0 0.0
        %3071 = vmatpush1.xpose.msra.mxu0 0.0
        %3072 = vmatprep.subr.mxu0 0.0
        %3073 = vmatpush1.xpose.msra.mxu0 0.0
        %3074 = vmatprep.subr.mxu0 0.0
        %3075 = vmatpush1.xpose.msra.mxu0 0.0
        %3076 = vmatprep.subr.mxu0 0.0
        %3077 = vmatpush1.xpose.msra.mxu0 0.0
        %3078 = vmatprep.subr.mxu0 0.0
        %3079 = vmatpush1.xpose.msra.mxu0 0.0
        %3080 = vmatprep.subr.mxu0 0.0
        %3081 = vmatpush1.xpose.msra.mxu0 0.0
        %3082 = vmatprep.subr.mxu0 0.0
        %3083 = vmatpush1.xpose.msra.mxu0 0.0
        %3084 = vmatprep.subr.mxu0 0.0
        %v3085 = vand.u32 %v2108, 4294901760
        %3086 = vmatpush1.xpose.msra.mxu0 %v3085
        %3087 = vmatprep.subr.mxu0 0.0
        %v3088 = vand.u32 %v2107, 4294901760
        %3089 = vmatpush1.xpose.msra.mxu0 %v3088
        %3090 = vmatprep.subr.mxu0 0.0
        %3091 = vmatpush2.xpose.msra.mxu0 0.0
        %3092 = vmatprep.subr.mxu0 0.0
        %3093 = vmatpush2.xpose.msra.mxu0 0.0
        %3094 = vmatprep.subr.mxu0 0.0
        %3095 = vmatpush2.xpose.msra.mxu0 0.0
        %3096 = vmatprep.subr.mxu0 0.0
        %3097 = vmatpush2.xpose.msra.mxu0 0.0
        %3098 = vmatprep.subr.mxu0 0.0
        %3099 = vmatpush2.xpose.msra.mxu0 0.0
        %3100 = vmatprep.subr.mxu0 0.0
        %3101 = vmatpush2.xpose.msra.mxu0 0.0
        %3102 = vmatprep.subr.mxu0 0.0
        %3103 = vmatpush2.xpose.msra.mxu0 0.0
        %3104 = vmatprep.subr.mxu0 0.0
        %3105 = vmatpush2.xpose.msra.mxu0 0.0
        %3106 = vmatprep.subr.mxu0 0.0
        %3107 = vmatpush2.xpose.msra.mxu0 0.0
        %3108 = vmatprep.subr.mxu0 0.0
        %3109 = vmatpush2.xpose.msra.mxu0 0.0
        %3110 = vmatprep.subr.mxu0 0.0
        %3111 = vmatpush2.xpose.msra.mxu0 0.0
        %3112 = vmatprep.subr.mxu0 0.0
        %3113 = vmatpush2.xpose.msra.mxu0 0.0
        %3114 = vmatprep.subr.mxu0 0.0
        %3115 = vmatpush2.xpose.msra.mxu0 0.0
        %3116 = vmatprep.subr.mxu0 0.0
        %3117 = vmatpush2.xpose.msra.mxu0 0.0
        %3118 = vmatprep.subr.mxu0 0.0
        %3119 = vmatpush2.xpose.msra.mxu0 0.0
        %3120 = vmatprep.subr.mxu0 0.0
        %3121 = vmatpush2.xpose.msra.mxu0 0.0
        %3122 = vmatprep.mubr.f32.mxu0 0.0
        %v3123 = vand.u32 %v249, 4294901760
        %v3124 = vsub.f32 %v249, %v3123
        %v3125 = vand.u32 %v3124, 4294901760
        %3126 = vmatmul.mubr.f32.gmra.mxu0 %v3125
        %v3127 = vpop.f32.mrf.mxu0
        %v3128 = vadd.f32 %v2836, %v3127
        %v3129 = vpop.f32.mrf.mxu0
        %3130 = vmatprep.mubr.f32.mxu0 0.0
        %v3131 = vand.u32 %v250, 4294901760
        %v3132 = vsub.f32 %v250, %v3131
        %v3133 = vand.u32 %v3132, 4294901760
        %3134 = vmatmul.mubr.f32.gmra.mxu0 %v3133
        %v3135 = vpop.f32.mrf.mxu0
        %v3136 = vadd.f32 %v2843, %v3135
        %v3137 = vpop.f32.mrf.mxu0
        %3138 = vmatprep.mubr.f32.mxu0 0.0
        %v3139 = vand.u32 %v251, 4294901760
        %v3140 = vsub.f32 %v251, %v3139
        %v3141 = vand.u32 %v3140, 4294901760
        %3142 = vmatmul.mubr.f32.gmra.mxu0 %v3141
        %v3143 = vpop.f32.mrf.mxu0
        %v3144 = vadd.f32 %v2850, %v3143
        %v3145 = vpop.f32.mrf.mxu0
        %3146 = vmatprep.mubr.f32.mxu0 0.0
        %v3147 = vand.u32 %v252, 4294901760
        %v3148 = vsub.f32 %v252, %v3147
        %v3149 = vand.u32 %v3148, 4294901760
        %3150 = vmatmul.mubr.f32.gmra.mxu0 %v3149
        %v3151 = vpop.f32.mrf.mxu0
        %v3152 = vadd.f32 %v2857, %v3151
        %v3153 = vpop.f32.mrf.mxu0
        %3154 = vmatprep.mubr.f32.mxu0 0.0
        %v3155 = vand.u32 %v253, 4294901760
        %v3156 = vsub.f32 %v253, %v3155
        %v3157 = vand.u32 %v3156, 4294901760
        %3158 = vmatmul.mubr.f32.gmra.mxu0 %v3157
        %v3159 = vpop.f32.mrf.mxu0
        %v3160 = vadd.f32 %v2864, %v3159
        %v3161 = vpop.f32.mrf.mxu0
        %3162 = vmatprep.mubr.f32.mxu0 0.0
        %v3163 = vand.u32 %v254, 4294901760
        %v3164 = vsub.f32 %v254, %v3163
        %v3165 = vand.u32 %v3164, 4294901760
        %3166 = vmatmul.mubr.f32.gmra.mxu0 %v3165
        %v3167 = vpop.f32.mrf.mxu0
        %v3168 = vadd.f32 %v2871, %v3167
        %v3169 = vpop.f32.mrf.mxu0
        %3170 = vmatprep.mubr.f32.mxu0 0.0
        %v3171 = vand.u32 %v255, 4294901760
        %v3172 = vsub.f32 %v255, %v3171
        %v3173 = vand.u32 %v3172, 4294901760
        %3174 = vmatmul.mubr.f32.gmra.mxu0 %v3173
        %v3175 = vpop.f32.mrf.mxu0
        %v3176 = vadd.f32 %v2878, %v3175
        %v3177 = vpop.f32.mrf.mxu0
        %3178 = vmatprep.mubr.f32.mxu0 0.0
        %v3179 = vand.u32 %v256, 4294901760
        %v3180 = vsub.f32 %v256, %v3179
        %v3181 = vand.u32 %v3180, 4294901760
        %3182 = vmatmul.mubr.f32.gmra.mxu0 %v3181
        %v3183 = vpop.f32.mrf.mxu0
        %v3184 = vadd.f32 %v2885, %v3183
        %v3185 = vpop.f32.mrf.mxu0
        %3186 = vmatprep.mubr.f32.mxu0 0.0
        %v3187 = vand.u32 %v257, 4294901760
        %v3188 = vsub.f32 %v257, %v3187
        %v3189 = vand.u32 %v3188, 4294901760
        %3190 = vmatmul.mubr.f32.gmra.mxu0 %v3189
        %v3191 = vpop.f32.mrf.mxu0
        %v3192 = vadd.f32 %v2892, %v3191
        %v3193 = vpop.f32.mrf.mxu0
        %3194 = vmatprep.mubr.f32.mxu0 0.0
        %v3195 = vand.u32 %v258, 4294901760
        %v3196 = vsub.f32 %v258, %v3195
        %v3197 = vand.u32 %v3196, 4294901760
        %3198 = vmatmul.mubr.f32.gmra.mxu0 %v3197
        %v3199 = vpop.f32.mrf.mxu0
        %v3200 = vadd.f32 %v2899, %v3199
        %v3201 = vpop.f32.mrf.mxu0
        %3202 = vmatprep.mubr.f32.mxu0 0.0
        %v3203 = vand.u32 %v259, 4294901760
        %v3204 = vsub.f32 %v259, %v3203
        %v3205 = vand.u32 %v3204, 4294901760
        %3206 = vmatmul.mubr.f32.gmra.mxu0 %v3205
        %v3207 = vpop.f32.mrf.mxu0
        %v3208 = vadd.f32 %v2906, %v3207
        %v3209 = vpop.f32.mrf.mxu0
        %3210 = vmatprep.mubr.f32.mxu0 0.0
        %v3211 = vand.u32 %v260, 4294901760
        %v3212 = vsub.f32 %v260, %v3211
        %v3213 = vand.u32 %v3212, 4294901760
        %3214 = vmatmul.mubr.f32.gmra.mxu0 %v3213
        %v3215 = vpop.f32.mrf.mxu0
        %v3216 = vadd.f32 %v2913, %v3215
        %v3217 = vpop.f32.mrf.mxu0
        %3218 = vmatprep.mubr.f32.mxu0 0.0
        %v3219 = vand.u32 %v261, 4294901760
        %v3220 = vsub.f32 %v261, %v3219
        %v3221 = vand.u32 %v3220, 4294901760
        %3222 = vmatmul.mubr.f32.gmra.mxu0 %v3221
        %v3223 = vpop.f32.mrf.mxu0
        %v3224 = vadd.f32 %v2920, %v3223
        %v3225 = vpop.f32.mrf.mxu0
        %3226 = vmatprep.mubr.f32.mxu0 0.0
        %v3227 = vand.u32 %v262, 4294901760
        %v3228 = vsub.f32 %v262, %v3227
        %v3229 = vand.u32 %v3228, 4294901760
        %3230 = vmatmul.mubr.f32.gmra.mxu0 %v3229
        %v3231 = vpop.f32.mrf.mxu0
        %v3232 = vadd.f32 %v2927, %v3231
        %v3233 = vpop.f32.mrf.mxu0
        %3234 = vmatprep.mubr.f32.mxu0 0.0
        %v3235 = vand.u32 %v263, 4294901760
        %v3236 = vsub.f32 %v263, %v3235
        %v3237 = vand.u32 %v3236, 4294901760
        %3238 = vmatmul.mubr.f32.gmra.mxu0 %v3237
        %v3239 = vpop.f32.mrf.mxu0
        %v3240 = vadd.f32 %v2934, %v3239
        %v3241 = vpop.f32.mrf.mxu0
        %3242 = vmatprep.mubr.f32.mxu0 0.0
        %v3243 = vand.u32 %v264, 4294901760
        %v3244 = vsub.f32 %v264, %v3243
        %v3245 = vand.u32 %v3244, 4294901760
        %3246 = vmatmul.mubr.f32.gmra.mxu0 %v3245
        %v3247 = vpop.f32.mrf.mxu0
        %v3248 = vadd.f32 %v2941, %v3247
        %v3249 = vpop.f32.mrf.mxu0
        %3250 = vmatprep.mubr.f32.mxu0 0.0
        %v3251 = vand.u32 %v265, 4294901760
        %v3252 = vsub.f32 %v265, %v3251
        %v3253 = vand.u32 %v3252, 4294901760
        %3254 = vmatmul.mubr.f32.gmra.mxu0 %v3253
        %v3255 = vpop.f32.mrf.mxu0
        %v3256 = vadd.f32 %v2948, %v3255
        %v3257 = vpop.f32.mrf.mxu0
        %3258 = vmatprep.mubr.f32.mxu0 0.0
        %v3259 = vand.u32 %v266, 4294901760
        %v3260 = vsub.f32 %v266, %v3259
        %v3261 = vand.u32 %v3260, 4294901760
        %3262 = vmatmul.mubr.f32.gmra.mxu0 %v3261
        %v3263 = vpop.f32.mrf.mxu0
        %v3264 = vadd.f32 %v2955, %v3263
        %v3265 = vpop.f32.mrf.mxu0
        %3266 = vmatprep.mubr.f32.mxu0 0.0
        %v3267 = vand.u32 %v267, 4294901760
        %v3268 = vsub.f32 %v267, %v3267
        %v3269 = vand.u32 %v3268, 4294901760
        %3270 = vmatmul.mubr.f32.gmra.mxu0 %v3269
        %v3271 = vpop.f32.mrf.mxu0
        %v3272 = vadd.f32 %v2962, %v3271
        %v3273 = vpop.f32.mrf.mxu0
        %3274 = vmatprep.mubr.f32.mxu0 0.0
        %v3275 = vand.u32 %v268, 4294901760
        %v3276 = vsub.f32 %v268, %v3275
        %v3277 = vand.u32 %v3276, 4294901760
        %3278 = vmatmul.mubr.f32.gmra.mxu0 %v3277
        %v3279 = vpop.f32.mrf.mxu0
        %v3280 = vadd.f32 %v2969, %v3279
        %v3281 = vpop.f32.mrf.mxu0
        %3282 = vmatprep.mubr.f32.mxu0 0.0
        %v3283 = vand.u32 %v269, 4294901760
        %v3284 = vsub.f32 %v269, %v3283
        %v3285 = vand.u32 %v3284, 4294901760
        %3286 = vmatmul.mubr.f32.gmra.mxu0 %v3285
        %v3287 = vpop.f32.mrf.mxu0
        %v3288 = vadd.f32 %v2976, %v3287
        %v3289 = vpop.f32.mrf.mxu0
        %3290 = vmatprep.mubr.f32.mxu0 0.0
        %v3291 = vand.u32 %v270, 4294901760
        %v3292 = vsub.f32 %v270, %v3291
        %v3293 = vand.u32 %v3292, 4294901760
        %3294 = vmatmul.mubr.f32.gmra.mxu0 %v3293
        %v3295 = vpop.f32.mrf.mxu0
        %v3296 = vadd.f32 %v2983, %v3295
        %v3297 = vpop.f32.mrf.mxu0
        %3298 = vmatprep.mubr.f32.mxu0 0.0
        %v3299 = vand.u32 %v271, 4294901760
        %v3300 = vsub.f32 %v271, %v3299
        %v3301 = vand.u32 %v3300, 4294901760
        %3302 = vmatmul.mubr.f32.gmra.mxu0 %v3301
        %v3303 = vpop.f32.mrf.mxu0
        %v3304 = vadd.f32 %v2990, %v3303
        %v3305 = vpop.f32.mrf.mxu0
        %3306 = vmatprep.mubr.f32.mxu0 0.0
        %v3307 = vand.u32 %v272, 4294901760
        %v3308 = vsub.f32 %v272, %v3307
        %v3309 = vand.u32 %v3308, 4294901760
        %3310 = vmatmul.mubr.f32.gmra.mxu0 %v3309
        %v3311 = vpop.f32.mrf.mxu0
        %v3312 = vadd.f32 %v2997, %v3311
        %v3313 = vpop.f32.mrf.mxu0
        %3314 = vmatprep.mubr.f32.mxu0 0.0
        %v3315 = vand.u32 %v273, 4294901760
        %v3316 = vsub.f32 %v273, %v3315
        %v3317 = vand.u32 %v3316, 4294901760
        %3318 = vmatmul.mubr.f32.gmra.mxu0 %v3317
        %v3319 = vpop.f32.mrf.mxu0
        %v3320 = vadd.f32 %v3004, %v3319
        %v3321 = vpop.f32.mrf.mxu0
        %3322 = vmatprep.mubr.f32.mxu0 0.0
        %v3323 = vand.u32 %v274, 4294901760
        %v3324 = vsub.f32 %v274, %v3323
        %v3325 = vand.u32 %v3324, 4294901760
        %3326 = vmatmul.mubr.f32.gmra.mxu0 %v3325
        %v3327 = vpop.f32.mrf.mxu0
        %v3328 = vadd.f32 %v3011, %v3327
        %v3329 = vpop.f32.mrf.mxu0
        %3330 = vmatprep.mubr.f32.mxu0 0.0
        %v3331 = vand.u32 %v275, 4294901760
        %v3332 = vsub.f32 %v275, %v3331
        %v3333 = vand.u32 %v3332, 4294901760
        %3334 = vmatmul.mubr.f32.gmra.mxu0 %v3333
        %v3335 = vpop.f32.mrf.mxu0
        %v3336 = vadd.f32 %v3018, %v3335
        %v3337 = vpop.f32.mrf.mxu0
        %3338 = vmatprep.mubr.f32.mxu0 0.0
        %v3339 = vand.u32 %v276, 4294901760
        %v3340 = vsub.f32 %v276, %v3339
        %v3341 = vand.u32 %v3340, 4294901760
        %3342 = vmatmul.mubr.f32.gmra.mxu0 %v3341
        %v3343 = vpop.f32.mrf.mxu0
        %v3344 = vadd.f32 %v3025, %v3343
        %v3345 = vpop.f32.mrf.mxu0
        %3346 = vmatprep.mubr.f32.mxu0 0.0
        %v3347 = vand.u32 %v277, 4294901760
        %v3348 = vsub.f32 %v277, %v3347
        %v3349 = vand.u32 %v3348, 4294901760
        %3350 = vmatmul.mubr.f32.gmra.mxu0 %v3349
        %v3351 = vpop.f32.mrf.mxu0
        %v3352 = vadd.f32 %v3032, %v3351
        %v3353 = vpop.f32.mrf.mxu0
        %3354 = vmatprep.mubr.f32.mxu0 0.0
        %v3355 = vand.u32 %v278, 4294901760
        %v3356 = vsub.f32 %v278, %v3355
        %v3357 = vand.u32 %v3356, 4294901760
        %3358 = vmatmul.mubr.f32.gmra.mxu0 %v3357
        %v3359 = vpop.f32.mrf.mxu0
        %v3360 = vadd.f32 %v3039, %v3359
        %v3361 = vpop.f32.mrf.mxu0
        %3362 = vmatprep.mubr.f32.mxu0 0.0
        %v3363 = vand.u32 %v279, 4294901760
        %v3364 = vsub.f32 %v279, %v3363
        %v3365 = vand.u32 %v3364, 4294901760
        %3366 = vmatmul.mubr.f32.gmra.mxu0 %v3365
        %v3367 = vpop.f32.mrf.mxu0
        %v3368 = vadd.f32 %v3046, %v3367
        %v3369 = vpop.f32.mrf.mxu0
        %3370 = vmatprep.mubr.f32.mxu0 0.0
        %v3371 = vand.u32 %v280, 4294901760
        %v3372 = vsub.f32 %v280, %v3371
        %v3373 = vand.u32 %v3372, 4294901760
        %3374 = vmatmul.mubr.f32.gmra.mxu0 %v3373
        %v3375 = vpop.f32.mrf.mxu0
        %v3376 = vadd.f32 %v3053, %v3375
        %v3377 = vpop.f32.mrf.mxu0
        %3378 = vdwg.mxu0
        %3379 = vmatprep.subr.mxu0 0.0
        %3380 = vmatpush1.xpose.msra.mxu0 0.0
        %3381 = vmatprep.subr.mxu0 0.0
        %3382 = vmatpush1.xpose.msra.mxu0 0.0
        %3383 = vmatprep.subr.mxu0 0.0
        %3384 = vmatpush1.xpose.msra.mxu0 0.0
        %3385 = vmatprep.subr.mxu0 0.0
        %3386 = vmatpush1.xpose.msra.mxu0 0.0
        %3387 = vmatprep.subr.mxu0 0.0
        %3388 = vmatpush1.xpose.msra.mxu0 0.0
        %3389 = vmatprep.subr.mxu0 0.0
        %3390 = vmatpush1.xpose.msra.mxu0 0.0
        %3391 = vmatprep.subr.mxu0 0.0
        %3392 = vmatpush1.xpose.msra.mxu0 0.0
        %3393 = vmatprep.subr.mxu0 0.0
        %3394 = vmatpush1.xpose.msra.mxu0 0.0
        %3395 = vmatprep.subr.mxu0 0.0
        %3396 = vmatpush1.xpose.msra.mxu0 0.0
        %3397 = vmatprep.subr.mxu0 0.0
        %3398 = vmatpush1.xpose.msra.mxu0 0.0
        %3399 = vmatprep.subr.mxu0 0.0
        %3400 = vmatpush1.xpose.msra.mxu0 0.0
        %3401 = vmatprep.subr.mxu0 0.0
        %3402 = vmatpush1.xpose.msra.mxu0 0.0
        %3403 = vmatprep.subr.mxu0 0.0
        %3404 = vmatpush1.xpose.msra.mxu0 0.0
        %3405 = vmatprep.subr.mxu0 0.0
        %3406 = vmatpush1.xpose.msra.mxu0 0.0
        %3407 = vmatprep.subr.mxu0 0.0
        %v3408 = vand.u32 %v2108, 4294901760
        %v3409 = vsub.f32 %v2108, %v3408
        %v3410 = vand.u32 %v3409, 4294901760
        %3411 = vmatpush1.xpose.msra.mxu0 %v3410
        %3412 = vmatprep.subr.mxu0 0.0
        %v3413 = vand.u32 %v2107, 4294901760
        %v3414 = vsub.f32 %v2107, %v3413
        %v3415 = vand.u32 %v3414, 4294901760
        %3416 = vmatpush1.xpose.msra.mxu0 %v3415
        %3417 = vmatprep.subr.mxu0 0.0
        %3418 = vmatpush2.xpose.msra.mxu0 0.0
        %3419 = vmatprep.subr.mxu0 0.0
        %3420 = vmatpush2.xpose.msra.mxu0 0.0
        %3421 = vmatprep.subr.mxu0 0.0
        %3422 = vmatpush2.xpose.msra.mxu0 0.0
        %3423 = vmatprep.subr.mxu0 0.0
        %3424 = vmatpush2.xpose.msra.mxu0 0.0
        %3425 = vmatprep.subr.mxu0 0.0
        %3426 = vmatpush2.xpose.msra.mxu0 0.0
        %3427 = vmatprep.subr.mxu0 0.0
        %3428 = vmatpush2.xpose.msra.mxu0 0.0
        %3429 = vmatprep.subr.mxu0 0.0
        %3430 = vmatpush2.xpose.msra.mxu0 0.0
        %3431 = vmatprep.subr.mxu0 0.0
        %3432 = vmatpush2.xpose.msra.mxu0 0.0
        %3433 = vmatprep.subr.mxu0 0.0
        %3434 = vmatpush2.xpose.msra.mxu0 0.0
        %3435 = vmatprep.subr.mxu0 0.0
        %3436 = vmatpush2.xpose.msra.mxu0 0.0
        %3437 = vmatprep.subr.mxu0 0.0
        %3438 = vmatpush2.xpose.msra.mxu0 0.0
        %3439 = vmatprep.subr.mxu0 0.0
        %3440 = vmatpush2.xpose.msra.mxu0 0.0
        %3441 = vmatprep.subr.mxu0 0.0
        %3442 = vmatpush2.xpose.msra.mxu0 0.0
        %3443 = vmatprep.subr.mxu0 0.0
        %3444 = vmatpush2.xpose.msra.mxu0 0.0
        %3445 = vmatprep.subr.mxu0 0.0
        %3446 = vmatpush2.xpose.msra.mxu0 0.0
        %3447 = vmatprep.subr.mxu0 0.0
        %3448 = vmatpush2.xpose.msra.mxu0 0.0
        %3449 = vmatprep.mubr.f32.mxu0 0.0
        %v3450 = vand.u32 %v249, 4294901760
        %3451 = vmatmul.mubr.f32.gmra.mxu0 %v3450
        %v3452 = vpop.f32.mrf.mxu0
        %v3453 = vadd.f32 %v3128, %v3452
        %v3454 = vpop.f32.mrf.mxu0
        %3455 = vmatprep.mubr.f32.mxu0 0.0
        %v3456 = vand.u32 %v250, 4294901760
        %3457 = vmatmul.mubr.f32.gmra.mxu0 %v3456
        %v3458 = vpop.f32.mrf.mxu0
        %v3459 = vadd.f32 %v3136, %v3458
        %v3460 = vpop.f32.mrf.mxu0
        %3461 = vmatprep.mubr.f32.mxu0 0.0
        %v3462 = vand.u32 %v251, 4294901760
        %3463 = vmatmul.mubr.f32.gmra.mxu0 %v3462
        %v3464 = vpop.f32.mrf.mxu0
        %v3465 = vadd.f32 %v3144, %v3464
        %v3466 = vpop.f32.mrf.mxu0
        %3467 = vmatprep.mubr.f32.mxu0 0.0
        %v3468 = vand.u32 %v252, 4294901760
        %3469 = vmatmul.mubr.f32.gmra.mxu0 %v3468
        %v3470 = vpop.f32.mrf.mxu0
        %v3471 = vadd.f32 %v3152, %v3470
        %v3472 = vpop.f32.mrf.mxu0
        %3473 = vmatprep.mubr.f32.mxu0 0.0
        %v3474 = vand.u32 %v253, 4294901760
        %3475 = vmatmul.mubr.f32.gmra.mxu0 %v3474
        %v3476 = vpop.f32.mrf.mxu0
        %v3477 = vadd.f32 %v3160, %v3476
        %v3478 = vpop.f32.mrf.mxu0
        %3479 = vmatprep.mubr.f32.mxu0 0.0
        %v3480 = vand.u32 %v254, 4294901760
        %3481 = vmatmul.mubr.f32.gmra.mxu0 %v3480
        %v3482 = vpop.f32.mrf.mxu0
        %v3483 = vadd.f32 %v3168, %v3482
        %v3484 = vpop.f32.mrf.mxu0
        %3485 = vmatprep.mubr.f32.mxu0 0.0
        %v3486 = vand.u32 %v255, 4294901760
        %3487 = vmatmul.mubr.f32.gmra.mxu0 %v3486
        %v3488 = vpop.f32.mrf.mxu0
        %v3489 = vadd.f32 %v3176, %v3488
        %v3490 = vpop.f32.mrf.mxu0
        %3491 = vmatprep.mubr.f32.mxu0 0.0
        %v3492 = vand.u32 %v256, 4294901760
        %3493 = vmatmul.mubr.f32.gmra.mxu0 %v3492
        %v3494 = vpop.f32.mrf.mxu0
        %v3495 = vadd.f32 %v3184, %v3494
        %v3496 = vpop.f32.mrf.mxu0
        %3497 = vmatprep.mubr.f32.mxu0 0.0
        %v3498 = vand.u32 %v257, 4294901760
        %3499 = vmatmul.mubr.f32.gmra.mxu0 %v3498
        %v3500 = vpop.f32.mrf.mxu0
        %v3501 = vadd.f32 %v3192, %v3500
        %v3502 = vpop.f32.mrf.mxu0
        %3503 = vmatprep.mubr.f32.mxu0 0.0
        %v3504 = vand.u32 %v258, 4294901760
        %3505 = vmatmul.mubr.f32.gmra.mxu0 %v3504
        %v3506 = vpop.f32.mrf.mxu0
        %v3507 = vadd.f32 %v3200, %v3506
        %v3508 = vpop.f32.mrf.mxu0
        %3509 = vmatprep.mubr.f32.mxu0 0.0
        %v3510 = vand.u32 %v259, 4294901760
        %3511 = vmatmul.mubr.f32.gmra.mxu0 %v3510
        %v3512 = vpop.f32.mrf.mxu0
        %v3513 = vadd.f32 %v3208, %v3512
        %v3514 = vpop.f32.mrf.mxu0
        %3515 = vmatprep.mubr.f32.mxu0 0.0
        %v3516 = vand.u32 %v260, 4294901760
        %3517 = vmatmul.mubr.f32.gmra.mxu0 %v3516
        %v3518 = vpop.f32.mrf.mxu0
        %v3519 = vadd.f32 %v3216, %v3518
        %v3520 = vpop.f32.mrf.mxu0
        %3521 = vmatprep.mubr.f32.mxu0 0.0
        %v3522 = vand.u32 %v261, 4294901760
        %3523 = vmatmul.mubr.f32.gmra.mxu0 %v3522
        %v3524 = vpop.f32.mrf.mxu0
        %v3525 = vadd.f32 %v3224, %v3524
        %v3526 = vpop.f32.mrf.mxu0
        %3527 = vmatprep.mubr.f32.mxu0 0.0
        %v3528 = vand.u32 %v262, 4294901760
        %3529 = vmatmul.mubr.f32.gmra.mxu0 %v3528
        %v3530 = vpop.f32.mrf.mxu0
        %v3531 = vadd.f32 %v3232, %v3530
        %v3532 = vpop.f32.mrf.mxu0
        %3533 = vmatprep.mubr.f32.mxu0 0.0
        %v3534 = vand.u32 %v263, 4294901760
        %3535 = vmatmul.mubr.f32.gmra.mxu0 %v3534
        %v3536 = vpop.f32.mrf.mxu0
        %v3537 = vadd.f32 %v3240, %v3536
        %v3538 = vpop.f32.mrf.mxu0
        %3539 = vmatprep.mubr.f32.mxu0 0.0
        %v3540 = vand.u32 %v264, 4294901760
        %3541 = vmatmul.mubr.f32.gmra.mxu0 %v3540
        %v3542 = vpop.f32.mrf.mxu0
        %v3543 = vadd.f32 %v3248, %v3542
        %v3544 = vpop.f32.mrf.mxu0
        %3545 = vmatprep.mubr.f32.mxu0 0.0
        %v3546 = vand.u32 %v265, 4294901760
        %3547 = vmatmul.mubr.f32.gmra.mxu0 %v3546
        %v3548 = vpop.f32.mrf.mxu0
        %v3549 = vadd.f32 %v3256, %v3548
        %v3550 = vpop.f32.mrf.mxu0
        %3551 = vmatprep.mubr.f32.mxu0 0.0
        %v3552 = vand.u32 %v266, 4294901760
        %3553 = vmatmul.mubr.f32.gmra.mxu0 %v3552
        %v3554 = vpop.f32.mrf.mxu0
        %v3555 = vadd.f32 %v3264, %v3554
        %v3556 = vpop.f32.mrf.mxu0
        %3557 = vmatprep.mubr.f32.mxu0 0.0
        %v3558 = vand.u32 %v267, 4294901760
        %3559 = vmatmul.mubr.f32.gmra.mxu0 %v3558
        %v3560 = vpop.f32.mrf.mxu0
        %v3561 = vadd.f32 %v3272, %v3560
        %v3562 = vpop.f32.mrf.mxu0
        %3563 = vmatprep.mubr.f32.mxu0 0.0
        %v3564 = vand.u32 %v268, 4294901760
        %3565 = vmatmul.mubr.f32.gmra.mxu0 %v3564
        %v3566 = vpop.f32.mrf.mxu0
        %v3567 = vadd.f32 %v3280, %v3566
        %v3568 = vpop.f32.mrf.mxu0
        %3569 = vmatprep.mubr.f32.mxu0 0.0
        %v3570 = vand.u32 %v269, 4294901760
        %3571 = vmatmul.mubr.f32.gmra.mxu0 %v3570
        %v3572 = vpop.f32.mrf.mxu0
        %v3573 = vadd.f32 %v3288, %v3572
        %v3574 = vpop.f32.mrf.mxu0
        %3575 = vmatprep.mubr.f32.mxu0 0.0
        %v3576 = vand.u32 %v270, 4294901760
        %3577 = vmatmul.mubr.f32.gmra.mxu0 %v3576
        %v3578 = vpop.f32.mrf.mxu0
        %v3579 = vadd.f32 %v3296, %v3578
        %v3580 = vpop.f32.mrf.mxu0
        %3581 = vmatprep.mubr.f32.mxu0 0.0
        %v3582 = vand.u32 %v271, 4294901760
        %3583 = vmatmul.mubr.f32.gmra.mxu0 %v3582
        %v3584 = vpop.f32.mrf.mxu0
        %v3585 = vadd.f32 %v3304, %v3584
        %v3586 = vpop.f32.mrf.mxu0
        %3587 = vmatprep.mubr.f32.mxu0 0.0
        %v3588 = vand.u32 %v272, 4294901760
        %3589 = vmatmul.mubr.f32.gmra.mxu0 %v3588
        %v3590 = vpop.f32.mrf.mxu0
        %v3591 = vadd.f32 %v3312, %v3590
        %v3592 = vpop.f32.mrf.mxu0
        %3593 = vmatprep.mubr.f32.mxu0 0.0
        %v3594 = vand.u32 %v273, 4294901760
        %3595 = vmatmul.mubr.f32.gmra.mxu0 %v3594
        %v3596 = vpop.f32.mrf.mxu0
        %v3597 = vadd.f32 %v3320, %v3596
        %v3598 = vpop.f32.mrf.mxu0
        %3599 = vmatprep.mubr.f32.mxu0 0.0
        %v3600 = vand.u32 %v274, 4294901760
        %3601 = vmatmul.mubr.f32.gmra.mxu0 %v3600
        %v3602 = vpop.f32.mrf.mxu0
        %v3603 = vadd.f32 %v3328, %v3602
        %v3604 = vpop.f32.mrf.mxu0
        %3605 = vmatprep.mubr.f32.mxu0 0.0
        %v3606 = vand.u32 %v275, 4294901760
        %3607 = vmatmul.mubr.f32.gmra.mxu0 %v3606
        %v3608 = vpop.f32.mrf.mxu0
        %v3609 = vadd.f32 %v3336, %v3608
        %v3610 = vpop.f32.mrf.mxu0
        %3611 = vmatprep.mubr.f32.mxu0 0.0
        %v3612 = vand.u32 %v276, 4294901760
        %3613 = vmatmul.mubr.f32.gmra.mxu0 %v3612
        %v3614 = vpop.f32.mrf.mxu0
        %v3615 = vadd.f32 %v3344, %v3614
        %v3616 = vpop.f32.mrf.mxu0
        %3617 = vmatprep.mubr.f32.mxu0 0.0
        %v3618 = vand.u32 %v277, 4294901760
        %3619 = vmatmul.mubr.f32.gmra.mxu0 %v3618
        %v3620 = vpop.f32.mrf.mxu0
        %v3621 = vadd.f32 %v3352, %v3620
        %v3622 = vpop.f32.mrf.mxu0
        %3623 = vmatprep.mubr.f32.mxu0 0.0
        %v3624 = vand.u32 %v278, 4294901760
        %3625 = vmatmul.mubr.f32.gmra.mxu0 %v3624
        %v3626 = vpop.f32.mrf.mxu0
        %v3627 = vadd.f32 %v3360, %v3626
        %v3628 = vpop.f32.mrf.mxu0
        %3629 = vmatprep.mubr.f32.mxu0 0.0
        %v3630 = vand.u32 %v279, 4294901760
        %3631 = vmatmul.mubr.f32.gmra.mxu0 %v3630
        %v3632 = vpop.f32.mrf.mxu0
        %v3633 = vadd.f32 %v3368, %v3632
        %v3634 = vpop.f32.mrf.mxu0
        %3635 = vmatprep.mubr.f32.mxu0 0.0
        %v3636 = vand.u32 %v280, 4294901760
        %3637 = vmatmul.mubr.f32.gmra.mxu0 %v3636
        %v3638 = vpop.f32.mrf.mxu0
        %v3639 = vadd.f32 %v3376, %v3638
        %v3640 = vpop.f32.mrf.mxu0
        %3641 = vdwg.mxu0
        %3642 = vmatprep.subr.mxu0 0.0
        %3643 = vmatpush1.xpose.msra.mxu0 0.0
        %3644 = vmatprep.subr.mxu0 0.0
        %3645 = vmatpush1.xpose.msra.mxu0 0.0
        %3646 = vmatprep.subr.mxu0 0.0
        %3647 = vmatpush1.xpose.msra.mxu0 0.0
        %3648 = vmatprep.subr.mxu0 0.0
        %3649 = vmatpush1.xpose.msra.mxu0 0.0
        %3650 = vmatprep.subr.mxu0 0.0
        %3651 = vmatpush1.xpose.msra.mxu0 0.0
        %3652 = vmatprep.subr.mxu0 0.0
        %3653 = vmatpush1.xpose.msra.mxu0 0.0
        %3654 = vmatprep.subr.mxu0 0.0
        %3655 = vmatpush1.xpose.msra.mxu0 0.0
        %3656 = vmatprep.subr.mxu0 0.0
        %3657 = vmatpush1.xpose.msra.mxu0 0.0
        %3658 = vmatprep.subr.mxu0 0.0
        %3659 = vmatpush1.xpose.msra.mxu0 0.0
        %3660 = vmatprep.subr.mxu0 0.0
        %3661 = vmatpush1.xpose.msra.mxu0 0.0
        %3662 = vmatprep.subr.mxu0 0.0
        %3663 = vmatpush1.xpose.msra.mxu0 0.0
        %3664 = vmatprep.subr.mxu0 0.0
        %3665 = vmatpush1.xpose.msra.mxu0 0.0
        %3666 = vmatprep.subr.mxu0 0.0
        %3667 = vmatpush1.xpose.msra.mxu0 0.0
        %3668 = vmatprep.subr.mxu0 0.0
        %3669 = vmatpush1.xpose.msra.mxu0 0.0
        %3670 = vmatprep.subr.mxu0 0.0
        %v3671 = vand.u32 %v2108, 4294901760
        %3672 = vmatpush1.xpose.msra.mxu0 %v3671
        %3673 = vmatprep.subr.mxu0 0.0
        %v3674 = vand.u32 %v2107, 4294901760
        %3675 = vmatpush1.xpose.msra.mxu0 %v3674
        %3676 = vmatprep.subr.mxu0 0.0
        %3677 = vmatpush2.xpose.msra.mxu0 0.0
        %3678 = vmatprep.subr.mxu0 0.0
        %3679 = vmatpush2.xpose.msra.mxu0 0.0
        %3680 = vmatprep.subr.mxu0 0.0
        %3681 = vmatpush2.xpose.msra.mxu0 0.0
        %3682 = vmatprep.subr.mxu0 0.0
        %3683 = vmatpush2.xpose.msra.mxu0 0.0
        %3684 = vmatprep.subr.mxu0 0.0
        %3685 = vmatpush2.xpose.msra.mxu0 0.0
        %3686 = vmatprep.subr.mxu0 0.0
        %3687 = vmatpush2.xpose.msra.mxu0 0.0
        %3688 = vmatprep.subr.mxu0 0.0
        %3689 = vmatpush2.xpose.msra.mxu0 0.0
        %3690 = vmatprep.subr.mxu0 0.0
        %3691 = vmatpush2.xpose.msra.mxu0 0.0
        %3692 = vmatprep.subr.mxu0 0.0
        %3693 = vmatpush2.xpose.msra.mxu0 0.0
        %3694 = vmatprep.subr.mxu0 0.0
        %3695 = vmatpush2.xpose.msra.mxu0 0.0
        %3696 = vmatprep.subr.mxu0 0.0
        %3697 = vmatpush2.xpose.msra.mxu0 0.0
        %3698 = vmatprep.subr.mxu0 0.0
        %3699 = vmatpush2.xpose.msra.mxu0 0.0
        %3700 = vmatprep.subr.mxu0 0.0
        %3701 = vmatpush2.xpose.msra.mxu0 0.0
        %3702 = vmatprep.subr.mxu0 0.0
        %3703 = vmatpush2.xpose.msra.mxu0 0.0
        %3704 = vmatprep.subr.mxu0 0.0
        %3705 = vmatpush2.xpose.msra.mxu0 0.0
        %3706 = vmatprep.subr.mxu0 0.0
        %3707 = vmatpush2.xpose.msra.mxu0 0.0
        %3708 = vmatprep.mubr.f32.mxu0 0.0
        %v3709 = vand.u32 %v249, 4294901760
        %3710 = vmatmul.mubr.f32.gmra.mxu0 %v3709
        %v3711 = vpop.f32.mrf.mxu0
        %v3712 = vadd.f32 %v3453, %v3711
        %v3713 = vpop.f32.mrf.mxu0
        %3714 = vmatprep.mubr.f32.mxu0 0.0
        %v3715 = vand.u32 %v250, 4294901760
        %3716 = vmatmul.mubr.f32.gmra.mxu0 %v3715
        %v3717 = vpop.f32.mrf.mxu0
        %v3718 = vadd.f32 %v3459, %v3717
        %v3719 = vpop.f32.mrf.mxu0
        %3720 = vmatprep.mubr.f32.mxu0 0.0
        %v3721 = vand.u32 %v251, 4294901760
        %3722 = vmatmul.mubr.f32.gmra.mxu0 %v3721
        %v3723 = vpop.f32.mrf.mxu0
        %v3724 = vadd.f32 %v3465, %v3723
        %v3725 = vpop.f32.mrf.mxu0
        %3726 = vmatprep.mubr.f32.mxu0 0.0
        %v3727 = vand.u32 %v252, 4294901760
        %3728 = vmatmul.mubr.f32.gmra.mxu0 %v3727
        %v3729 = vpop.f32.mrf.mxu0
        %v3730 = vadd.f32 %v3471, %v3729
        %v3731 = vpop.f32.mrf.mxu0
        %3732 = vmatprep.mubr.f32.mxu0 0.0
        %v3733 = vand.u32 %v253, 4294901760
        %3734 = vmatmul.mubr.f32.gmra.mxu0 %v3733
        %v3735 = vpop.f32.mrf.mxu0
        %v3736 = vadd.f32 %v3477, %v3735
        %v3737 = vpop.f32.mrf.mxu0
        %3738 = vmatprep.mubr.f32.mxu0 0.0
        %v3739 = vand.u32 %v254, 4294901760
        %3740 = vmatmul.mubr.f32.gmra.mxu0 %v3739
        %v3741 = vpop.f32.mrf.mxu0
        %v3742 = vadd.f32 %v3483, %v3741
        %v3743 = vpop.f32.mrf.mxu0
        %3744 = vmatprep.mubr.f32.mxu0 0.0
        %v3745 = vand.u32 %v255, 4294901760
        %3746 = vmatmul.mubr.f32.gmra.mxu0 %v3745
        %v3747 = vpop.f32.mrf.mxu0
        %v3748 = vadd.f32 %v3489, %v3747
        %v3749 = vpop.f32.mrf.mxu0
        %3750 = vmatprep.mubr.f32.mxu0 0.0
        %v3751 = vand.u32 %v256, 4294901760
        %3752 = vmatmul.mubr.f32.gmra.mxu0 %v3751
        %v3753 = vpop.f32.mrf.mxu0
        %v3754 = vadd.f32 %v3495, %v3753
        %v3755 = vpop.f32.mrf.mxu0
        %3756 = vmatprep.mubr.f32.mxu0 0.0
        %v3757 = vand.u32 %v257, 4294901760
        %3758 = vmatmul.mubr.f32.gmra.mxu0 %v3757
        %v3759 = vpop.f32.mrf.mxu0
        %v3760 = vadd.f32 %v3501, %v3759
        %v3761 = vpop.f32.mrf.mxu0
        %3762 = vmatprep.mubr.f32.mxu0 0.0
        %v3763 = vand.u32 %v258, 4294901760
        %3764 = vmatmul.mubr.f32.gmra.mxu0 %v3763
        %v3765 = vpop.f32.mrf.mxu0
        %v3766 = vadd.f32 %v3507, %v3765
        %v3767 = vpop.f32.mrf.mxu0
        %3768 = vmatprep.mubr.f32.mxu0 0.0
        %v3769 = vand.u32 %v259, 4294901760
        %3770 = vmatmul.mubr.f32.gmra.mxu0 %v3769
        %v3771 = vpop.f32.mrf.mxu0
        %v3772 = vadd.f32 %v3513, %v3771
        %v3773 = vpop.f32.mrf.mxu0
        %3774 = vmatprep.mubr.f32.mxu0 0.0
        %v3775 = vand.u32 %v260, 4294901760
        %3776 = vmatmul.mubr.f32.gmra.mxu0 %v3775
        %v3777 = vpop.f32.mrf.mxu0
        %v3778 = vadd.f32 %v3519, %v3777
        %v3779 = vpop.f32.mrf.mxu0
        %3780 = vmatprep.mubr.f32.mxu0 0.0
        %v3781 = vand.u32 %v261, 4294901760
        %3782 = vmatmul.mubr.f32.gmra.mxu0 %v3781
        %v3783 = vpop.f32.mrf.mxu0
        %v3784 = vadd.f32 %v3525, %v3783
        %v3785 = vpop.f32.mrf.mxu0
        %3786 = vmatprep.mubr.f32.mxu0 0.0
        %v3787 = vand.u32 %v262, 4294901760
        %3788 = vmatmul.mubr.f32.gmra.mxu0 %v3787
        %v3789 = vpop.f32.mrf.mxu0
        %v3790 = vadd.f32 %v3531, %v3789
        %v3791 = vpop.f32.mrf.mxu0
        %3792 = vmatprep.mubr.f32.mxu0 0.0
        %v3793 = vand.u32 %v263, 4294901760
        %3794 = vmatmul.mubr.f32.gmra.mxu0 %v3793
        %v3795 = vpop.f32.mrf.mxu0
        %v3796 = vadd.f32 %v3537, %v3795
        %v3797 = vpop.f32.mrf.mxu0
        %3798 = vmatprep.mubr.f32.mxu0 0.0
        %v3799 = vand.u32 %v264, 4294901760
        %3800 = vmatmul.mubr.f32.gmra.mxu0 %v3799
        %v3801 = vpop.f32.mrf.mxu0
        %v3802 = vadd.f32 %v3543, %v3801
        %v3803 = vpop.f32.mrf.mxu0
        %3804 = vmatprep.mubr.f32.mxu0 0.0
        %v3805 = vand.u32 %v265, 4294901760
        %3806 = vmatmul.mubr.f32.gmra.mxu0 %v3805
        %v3807 = vpop.f32.mrf.mxu0
        %v3808 = vadd.f32 %v3549, %v3807
        %v3809 = vpop.f32.mrf.mxu0
        %3810 = vmatprep.mubr.f32.mxu0 0.0
        %v3811 = vand.u32 %v266, 4294901760
        %3812 = vmatmul.mubr.f32.gmra.mxu0 %v3811
        %v3813 = vpop.f32.mrf.mxu0
        %v3814 = vadd.f32 %v3555, %v3813
        %v3815 = vpop.f32.mrf.mxu0
        %3816 = vmatprep.mubr.f32.mxu0 0.0
        %v3817 = vand.u32 %v267, 4294901760
        %3818 = vmatmul.mubr.f32.gmra.mxu0 %v3817
        %v3819 = vpop.f32.mrf.mxu0
        %v3820 = vadd.f32 %v3561, %v3819
        %v3821 = vpop.f32.mrf.mxu0
        %3822 = vmatprep.mubr.f32.mxu0 0.0
        %v3823 = vand.u32 %v268, 4294901760
        %3824 = vmatmul.mubr.f32.gmra.mxu0 %v3823
        %v3825 = vpop.f32.mrf.mxu0
        %v3826 = vadd.f32 %v3567, %v3825
        %v3827 = vpop.f32.mrf.mxu0
        %3828 = vmatprep.mubr.f32.mxu0 0.0
        %v3829 = vand.u32 %v269, 4294901760
        %3830 = vmatmul.mubr.f32.gmra.mxu0 %v3829
        %v3831 = vpop.f32.mrf.mxu0
        %v3832 = vadd.f32 %v3573, %v3831
        %v3833 = vpop.f32.mrf.mxu0
        %3834 = vmatprep.mubr.f32.mxu0 0.0
        %v3835 = vand.u32 %v270, 4294901760
        %3836 = vmatmul.mubr.f32.gmra.mxu0 %v3835
        %v3837 = vpop.f32.mrf.mxu0
        %v3838 = vadd.f32 %v3579, %v3837
        %v3839 = vpop.f32.mrf.mxu0
        %3840 = vmatprep.mubr.f32.mxu0 0.0
        %v3841 = vand.u32 %v271, 4294901760
        %3842 = vmatmul.mubr.f32.gmra.mxu0 %v3841
        %v3843 = vpop.f32.mrf.mxu0
        %v3844 = vadd.f32 %v3585, %v3843
        %v3845 = vpop.f32.mrf.mxu0
        %3846 = vmatprep.mubr.f32.mxu0 0.0
        %v3847 = vand.u32 %v272, 4294901760
        %3848 = vmatmul.mubr.f32.gmra.mxu0 %v3847
        %v3849 = vpop.f32.mrf.mxu0
        %v3850 = vadd.f32 %v3591, %v3849
        %v3851 = vpop.f32.mrf.mxu0
        %3852 = vmatprep.mubr.f32.mxu0 0.0
        %v3853 = vand.u32 %v273, 4294901760
        %3854 = vmatmul.mubr.f32.gmra.mxu0 %v3853
        %v3855 = vpop.f32.mrf.mxu0
        %v3856 = vadd.f32 %v3597, %v3855
        %v3857 = vpop.f32.mrf.mxu0
        %3858 = vmatprep.mubr.f32.mxu0 0.0
        %v3859 = vand.u32 %v274, 4294901760
        %3860 = vmatmul.mubr.f32.gmra.mxu0 %v3859
        %v3861 = vpop.f32.mrf.mxu0
        %v3862 = vadd.f32 %v3603, %v3861
        %v3863 = vpop.f32.mrf.mxu0
        %3864 = vmatprep.mubr.f32.mxu0 0.0
        %v3865 = vand.u32 %v275, 4294901760
        %3866 = vmatmul.mubr.f32.gmra.mxu0 %v3865
        %v3867 = vpop.f32.mrf.mxu0
        %v3868 = vadd.f32 %v3609, %v3867
        %v3869 = vpop.f32.mrf.mxu0
        %3870 = vmatprep.mubr.f32.mxu0 0.0
        %v3871 = vand.u32 %v276, 4294901760
        %3872 = vmatmul.mubr.f32.gmra.mxu0 %v3871
        %v3873 = vpop.f32.mrf.mxu0
        %v3874 = vadd.f32 %v3615, %v3873
        %v3875 = vpop.f32.mrf.mxu0
        %3876 = vmatprep.mubr.f32.mxu0 0.0
        %v3877 = vand.u32 %v277, 4294901760
        %3878 = vmatmul.mubr.f32.gmra.mxu0 %v3877
        %v3879 = vpop.f32.mrf.mxu0
        %v3880 = vadd.f32 %v3621, %v3879
        %v3881 = vpop.f32.mrf.mxu0
        %3882 = vmatprep.mubr.f32.mxu0 0.0
        %v3883 = vand.u32 %v278, 4294901760
        %3884 = vmatmul.mubr.f32.gmra.mxu0 %v3883
        %v3885 = vpop.f32.mrf.mxu0
        %v3886 = vadd.f32 %v3627, %v3885
        %v3887 = vpop.f32.mrf.mxu0
        %3888 = vmatprep.mubr.f32.mxu0 0.0
        %v3889 = vand.u32 %v279, 4294901760
        %3890 = vmatmul.mubr.f32.gmra.mxu0 %v3889
        %v3891 = vpop.f32.mrf.mxu0
        %v3892 = vadd.f32 %v3633, %v3891
        %v3893 = vpop.f32.mrf.mxu0
        %3894 = vmatprep.mubr.f32.mxu0 0.0
        %v3895 = vand.u32 %v280, 4294901760
        %3896 = vmatmul.mubr.f32.gmra.mxu0 %v3895
        %v3897 = vpop.f32.mrf.mxu0
        %v3898 = vadd.f32 %v3639, %v3897
        %v3899 = vpop.f32.mrf.mxu0
        %3900 = vdwg.mxu0
        %v3901 = vmul.f32 %v1918, 0.5
        %v3902 = vmul.f32 %v1924, 0.5
        %v3903 = vmul.f32 %v1930, 0.5
        %v3904 = vmul.f32 %v1936, 0.5
        %v3905 = vmul.f32 %v1942, 0.5
        %v3906 = vmul.f32 %v1948, 0.5
        %v3907 = vmul.f32 %v1954, 0.5
        %v3908 = vmul.f32 %v1960, 0.5
        %v3909 = vmul.f32 %v1966, 0.5
        %v3910 = vmul.f32 %v1972, 0.5
        %v3911 = vmul.f32 %v1978, 0.5
        %v3912 = vmul.f32 %v1984, 0.5
        %v3913 = vmul.f32 %v1990, 0.5
        %v3914 = vmul.f32 %v1996, 0.5
        %v3915 = vmul.f32 %v2002, 0.5
        %v3916 = vmul.f32 %v2008, 0.5
        %v3917 = vmul.f32 %v2014, 0.5
        %v3918 = vmul.f32 %v2020, 0.5
        %v3919 = vmul.f32 %v2026, 0.5
        %v3920 = vmul.f32 %v2032, 0.5
        %v3921 = vmul.f32 %v2038, 0.5
        %v3922 = vmul.f32 %v2044, 0.5
        %v3923 = vmul.f32 %v2050, 0.5
        %v3924 = vmul.f32 %v2056, 0.5
        %v3925 = vmul.f32 %v2062, 0.5
        %v3926 = vmul.f32 %v2068, 0.5
        %v3927 = vmul.f32 %v2074, 0.5
        %v3928 = vmul.f32 %v2080, 0.5
        %v3929 = vmul.f32 %v2086, 0.5
        %v3930 = vmul.f32 %v2092, 0.5
        %v3931 = vmul.f32 %v2098, 0.5
        %v3932 = vmul.f32 %v2104, 0.5
        %v3933 = vsub.f32 %v3712, %v3901
        %v3934 = vsub.f32 %v3718, %v3902
        %v3935 = vsub.f32 %v3724, %v3903
        %v3936 = vsub.f32 %v3730, %v3904
        %v3937 = vsub.f32 %v3736, %v3905
        %v3938 = vsub.f32 %v3742, %v3906
        %v3939 = vsub.f32 %v3748, %v3907
        %v3940 = vsub.f32 %v3754, %v3908
        %v3941 = vsub.f32 %v3760, %v3909
        %v3942 = vsub.f32 %v3766, %v3910
        %v3943 = vsub.f32 %v3772, %v3911
        %v3944 = vsub.f32 %v3778, %v3912
        %v3945 = vsub.f32 %v3784, %v3913
        %v3946 = vsub.f32 %v3790, %v3914
        %v3947 = vsub.f32 %v3796, %v3915
        %v3948 = vsub.f32 %v3802, %v3916
        %v3949 = vsub.f32 %v3808, %v3917
        %v3950 = vsub.f32 %v3814, %v3918
        %v3951 = vsub.f32 %v3820, %v3919
        %v3952 = vsub.f32 %v3826, %v3920
        %v3953 = vsub.f32 %v3832, %v3921
        %v3954 = vsub.f32 %v3838, %v3922
        %v3955 = vsub.f32 %v3844, %v3923
        %v3956 = vsub.f32 %v3850, %v3924
        %v3957 = vsub.f32 %v3856, %v3925
        %v3958 = vsub.f32 %v3862, %v3926
        %v3959 = vsub.f32 %v3868, %v3927
        %v3960 = vsub.f32 %v3874, %v3928
        %v3961 = vsub.f32 %v3880, %v3929
        %v3962 = vsub.f32 %v3886, %v3930
        %v3963 = vsub.f32 %v3892, %v3931
        %v3964 = vsub.f32 %v3898, %v3932
        %v3965 = vld [vmem:[%s3] sm:$0x1]
        %v3967 = vlaneseq
        %v3968 = vshrl.u32 %v3967, 7
        %v3969 = vsub.s32 0, %v3968
        %v3970 = vrot.slane %v3965, %v3969
        %v3972 = vadd.f32 %v3933, %v3970
        %v3973 = vadd.f32 %v3934, %v3970
        %v3974 = vadd.f32 %v3935, %v3970
        %v3975 = vadd.f32 %v3936, %v3970
        %v3976 = vadd.f32 %v3937, %v3970
        %v3977 = vadd.f32 %v3938, %v3970
        %v3978 = vadd.f32 %v3939, %v3970
        %v3979 = vadd.f32 %v3940, %v3970
        %v3980 = vadd.f32 %v3941, %v3970
        %v3981 = vadd.f32 %v3942, %v3970
        %v3982 = vadd.f32 %v3943, %v3970
        %v3983 = vadd.f32 %v3944, %v3970
        %v3984 = vadd.f32 %v3945, %v3970
        %v3985 = vadd.f32 %v3946, %v3970
        %v3986 = vadd.f32 %v3947, %v3970
        %v3987 = vadd.f32 %v3948, %v3970
        %v3988 = vadd.f32 %v3949, %v3970
        %v3989 = vadd.f32 %v3950, %v3970
        %v3990 = vadd.f32 %v3951, %v3970
        %v3991 = vadd.f32 %v3952, %v3970
        %v3992 = vadd.f32 %v3953, %v3970
        %v3993 = vadd.f32 %v3954, %v3970
        %v3994 = vadd.f32 %v3955, %v3970
        %v3995 = vadd.f32 %v3956, %v3970
        %v3996 = vadd.f32 %v3957, %v3970
        %v3997 = vadd.f32 %v3958, %v3970
        %v3998 = vadd.f32 %v3959, %v3970
        %v3999 = vadd.f32 %v3960, %v3970
        %v4000 = vadd.f32 %v3961, %v3970
        %v4001 = vadd.f32 %v3962, %v3970
        %v4002 = vadd.f32 %v3963, %v3970
        %v4003 = vadd.f32 %v3964, %v3970
        %vm4004 = vcmask 130048
        %v4005 = vsel %vm4004, %v3972, -inf
        %4006 = vmax.xlane.f32.xlu0 %v4005
        %v4007 = vpop.xlane.xlu0 %4006
        %v4008 = vsel %vm4004, %v3973, -inf
        %4009 = vmax.xlane.f32.xlu0 %v4008
        %v4010 = vpop.xlane.xlu0 %4009
        %v4011 = vsel %vm4004, %v3974, -inf
        %4012 = vmax.xlane.f32.xlu0 %v4011
        %v4013 = vpop.xlane.xlu0 %4012
        %v4014 = vsel %vm4004, %v3975, -inf
        %4015 = vmax.xlane.f32.xlu0 %v4014
        %v4016 = vpop.xlane.xlu0 %4015
        %v4017 = vsel %vm4004, %v3976, -inf
        %4018 = vmax.xlane.f32.xlu0 %v4017
        %v4019 = vpop.xlane.xlu0 %4018
        %v4020 = vsel %vm4004, %v3977, -inf
        %4021 = vmax.xlane.f32.xlu0 %v4020
        %v4022 = vpop.xlane.xlu0 %4021
        %v4023 = vsel %vm4004, %v3978, -inf
        %4024 = vmax.xlane.f32.xlu0 %v4023
        %v4025 = vpop.xlane.xlu0 %4024
        %v4026 = vsel %vm4004, %v3979, -inf
        %4027 = vmax.xlane.f32.xlu0 %v4026
        %v4028 = vpop.xlane.xlu0 %4027
        %v4029 = vsel %vm4004, %v3980, -inf
        %4030 = vmax.xlane.f32.xlu0 %v4029
        %v4031 = vpop.xlane.xlu0 %4030
        %v4032 = vsel %vm4004, %v3981, -inf
        %4033 = vmax.xlane.f32.xlu0 %v4032
        %v4034 = vpop.xlane.xlu0 %4033
        %v4035 = vsel %vm4004, %v3982, -inf
        %4036 = vmax.xlane.f32.xlu0 %v4035
        %v4037 = vpop.xlane.xlu0 %4036
        %v4038 = vsel %vm4004, %v3983, -inf
        %4039 = vmax.xlane.f32.xlu0 %v4038
        %v4040 = vpop.xlane.xlu0 %4039
        %v4041 = vsel %vm4004, %v3984, -inf
        %4042 = vmax.xlane.f32.xlu0 %v4041
        %v4043 = vpop.xlane.xlu0 %4042
        %v4044 = vsel %vm4004, %v3985, -inf
        %4045 = vmax.xlane.f32.xlu0 %v4044
        %v4046 = vpop.xlane.xlu0 %4045
        %v4047 = vsel %vm4004, %v3986, -inf
        %4048 = vmax.xlane.f32.xlu0 %v4047
        %v4049 = vpop.xlane.xlu0 %4048
        %v4050 = vsel %vm4004, %v3987, -inf
        %4051 = vmax.xlane.f32.xlu0 %v4050
        %v4052 = vpop.xlane.xlu0 %4051
        %v4053 = vsel %vm4004, %v3988, -inf
        %4054 = vmax.xlane.f32.xlu0 %v4053
        %v4055 = vpop.xlane.xlu0 %4054
        %v4056 = vsel %vm4004, %v3989, -inf
        %4057 = vmax.xlane.f32.xlu0 %v4056
        %v4058 = vpop.xlane.xlu0 %4057
        %v4059 = vsel %vm4004, %v3990, -inf
        %4060 = vmax.xlane.f32.xlu0 %v4059
        %v4061 = vpop.xlane.xlu0 %4060
        %v4062 = vsel %vm4004, %v3991, -inf
        %4063 = vmax.xlane.f32.xlu0 %v4062
        %v4064 = vpop.xlane.xlu0 %4063
        %v4065 = vsel %vm4004, %v3992, -inf
        %4066 = vmax.xlane.f32.xlu0 %v4065
        %v4067 = vpop.xlane.xlu0 %4066
        %v4068 = vsel %vm4004, %v3993, -inf
        %4069 = vmax.xlane.f32.xlu0 %v4068
        %v4070 = vpop.xlane.xlu0 %4069
        %v4071 = vsel %vm4004, %v3994, -inf
        %4072 = vmax.xlane.f32.xlu0 %v4071
        %v4073 = vpop.xlane.xlu0 %4072
        %v4074 = vsel %vm4004, %v3995, -inf
        %4075 = vmax.xlane.f32.xlu0 %v4074
        %v4076 = vpop.xlane.xlu0 %4075
        %v4077 = vsel %vm4004, %v3996, -inf
        %4078 = vmax.xlane.f32.xlu0 %v4077
        %v4079 = vpop.xlane.xlu0 %4078
        %v4080 = vsel %vm4004, %v3997, -inf
        %4081 = vmax.xlane.f32.xlu0 %v4080
        %v4082 = vpop.xlane.xlu0 %4081
        %v4083 = vsel %vm4004, %v3998, -inf
        %4084 = vmax.xlane.f32.xlu0 %v4083
        %v4085 = vpop.xlane.xlu0 %4084
        %v4086 = vsel %vm4004, %v3999, -inf
        %4087 = vmax.xlane.f32.xlu0 %v4086
        %v4088 = vpop.xlane.xlu0 %4087
        %v4089 = vsel %vm4004, %v4000, -inf
        %4090 = vmax.xlane.f32.xlu0 %v4089
        %v4091 = vpop.xlane.xlu0 %4090
        %v4092 = vsel %vm4004, %v4001, -inf
        %4093 = vmax.xlane.f32.xlu0 %v4092
        %v4094 = vpop.xlane.xlu0 %4093
        %v4095 = vsel %vm4004, %v4002, -inf
        %4096 = vmax.xlane.f32.xlu0 %v4095
        %v4097 = vpop.xlane.xlu0 %4096
        %v4098 = vsel %vm4004, %v4003, -inf
        %4099 = vmax.xlane.f32.xlu0 %v4098
        %v4100 = vpop.xlane.xlu0 %4099
        %v4101 = vsub.f32 %v3972, %v4007
        %v4102 = vsub.f32 %v3973, %v4010
        %v4103 = vsub.f32 %v3974, %v4013
        %v4104 = vsub.f32 %v3975, %v4016
        %v4105 = vsub.f32 %v3976, %v4019
        %v4106 = vsub.f32 %v3977, %v4022
        %v4107 = vsub.f32 %v3978, %v4025
        %v4108 = vsub.f32 %v3979, %v4028
        %v4109 = vsub.f32 %v3980, %v4031
        %v4110 = vsub.f32 %v3981, %v4034
        %v4111 = vsub.f32 %v3982, %v4037
        %v4112 = vsub.f32 %v3983, %v4040
        %v4113 = vsub.f32 %v3984, %v4043
        %v4114 = vsub.f32 %v3985, %v4046
        %v4115 = vsub.f32 %v3986, %v4049
        %v4116 = vsub.f32 %v3987, %v4052
        %v4117 = vsub.f32 %v3988, %v4055
        %v4118 = vsub.f32 %v3989, %v4058
        %v4119 = vsub.f32 %v3990, %v4061
        %v4120 = vsub.f32 %v3991, %v4064
        %v4121 = vsub.f32 %v3992, %v4067
        %v4122 = vsub.f32 %v3993, %v4070
        %v4123 = vsub.f32 %v3994, %v4073
        %v4124 = vsub.f32 %v3995, %v4076
        %v4125 = vsub.f32 %v3996, %v4079
        %v4126 = vsub.f32 %v3997, %v4082
        %v4127 = vsub.f32 %v3998, %v4085
        %v4128 = vsub.f32 %v3999, %v4088
        %v4129 = vsub.f32 %v4000, %v4091
        %v4130 = vsub.f32 %v4001, %v4094
        %v4131 = vsub.f32 %v4002, %v4097
        %v4132 = vsub.f32 %v4003, %v4100
        %v4133 = vmul.f32 %v4101, 1.442695
        %v4134 = vpow.pop %v4133
        %v4135 = vmul.f32 %v4102, 1.442695
        %v4136 = vpow.pop %v4135
        %v4137 = vmul.f32 %v4103, 1.442695
        %v4138 = vpow.pop %v4137
        %v4139 = vmul.f32 %v4104, 1.442695
        %v4140 = vpow.pop %v4139
        %v4141 = vmul.f32 %v4105, 1.442695
        %v4142 = vpow.pop %v4141
        %v4143 = vmul.f32 %v4106, 1.442695
        %v4144 = vpow.pop %v4143
        %v4145 = vmul.f32 %v4107, 1.442695
        %v4146 = vpow.pop %v4145
        %v4147 = vmul.f32 %v4108, 1.442695
        %v4148 = vpow.pop %v4147
        %v4149 = vmul.f32 %v4109, 1.442695
        %v4150 = vpow.pop %v4149
        %v4151 = vmul.f32 %v4110, 1.442695
        %v4152 = vpow.pop %v4151
        %v4153 = vmul.f32 %v4111, 1.442695
        %v4154 = vpow.pop %v4153
        %v4155 = vmul.f32 %v4112, 1.442695
        %v4156 = vpow.pop %v4155
        %v4157 = vmul.f32 %v4113, 1.442695
        %v4158 = vpow.pop %v4157
        %v4159 = vmul.f32 %v4114, 1.442695
        %v4160 = vpow.pop %v4159
        %v4161 = vmul.f32 %v4115, 1.442695
        %v4162 = vpow.pop %v4161
        %v4163 = vmul.f32 %v4116, 1.442695
        %v4164 = vpow.pop %v4163
        %v4165 = vmul.f32 %v4117, 1.442695
        %v4166 = vpow.pop %v4165
        %v4167 = vmul.f32 %v4118, 1.442695
        %v4168 = vpow.pop %v4167
        %v4169 = vmul.f32 %v4119, 1.442695
        %v4170 = vpow.pop %v4169
        %v4171 = vmul.f32 %v4120, 1.442695
        %v4172 = vpow.pop %v4171
        %v4173 = vmul.f32 %v4121, 1.442695
        %v4174 = vpow.pop %v4173
        %v4175 = vmul.f32 %v4122, 1.442695
        %v4176 = vpow.pop %v4175
        %v4177 = vmul.f32 %v4123, 1.442695
        %v4178 = vpow.pop %v4177
        %v4179 = vmul.f32 %v4124, 1.442695
        %v4180 = vpow.pop %v4179
        %v4181 = vmul.f32 %v4125, 1.442695
        %v4182 = vpow.pop %v4181
        %v4183 = vmul.f32 %v4126, 1.442695
        %v4184 = vpow.pop %v4183
        %v4185 = vmul.f32 %v4127, 1.442695
        %v4186 = vpow.pop %v4185
        %v4187 = vmul.f32 %v4128, 1.442695
        %v4188 = vpow.pop %v4187
        %v4189 = vmul.f32 %v4129, 1.442695
        %v4190 = vpow.pop %v4189
        %v4191 = vmul.f32 %v4130, 1.442695
        %v4192 = vpow.pop %v4191
        %v4193 = vmul.f32 %v4131, 1.442695
        %v4194 = vpow.pop %v4193
        %v4195 = vmul.f32 %v4132, 1.442695
        %v4196 = vpow.pop %v4195
        %v4197 = vsel %vm4004, %v4134, 0.0
        %4198 = vadd.xlane.f32.xlu0 %v4197
        %v4199 = vpop.xlane.xlu0 %4198
        %v4200 = vsel %vm4004, %v4136, 0.0
        %4201 = vadd.xlane.f32.xlu0 %v4200
        %v4202 = vpop.xlane.xlu0 %4201
        %v4203 = vsel %vm4004, %v4138, 0.0
        %4204 = vadd.xlane.f32.xlu0 %v4203
        %v4205 = vpop.xlane.xlu0 %4204
        %v4206 = vsel %vm4004, %v4140, 0.0
        %4207 = vadd.xlane.f32.xlu0 %v4206
        %v4208 = vpop.xlane.xlu0 %4207
        %v4209 = vsel %vm4004, %v4142, 0.0
        %4210 = vadd.xlane.f32.xlu0 %v4209
        %v4211 = vpop.xlane.xlu0 %4210
        %v4212 = vsel %vm4004, %v4144, 0.0
        %4213 = vadd.xlane.f32.xlu0 %v4212
        %v4214 = vpop.xlane.xlu0 %4213
        %v4215 = vsel %vm4004, %v4146, 0.0
        %4216 = vadd.xlane.f32.xlu0 %v4215
        %v4217 = vpop.xlane.xlu0 %4216
        %v4218 = vsel %vm4004, %v4148, 0.0
        %4219 = vadd.xlane.f32.xlu0 %v4218
        %v4220 = vpop.xlane.xlu0 %4219
        %v4221 = vsel %vm4004, %v4150, 0.0
        %4222 = vadd.xlane.f32.xlu0 %v4221
        %v4223 = vpop.xlane.xlu0 %4222
        %v4224 = vsel %vm4004, %v4152, 0.0
        %4225 = vadd.xlane.f32.xlu0 %v4224
        %v4226 = vpop.xlane.xlu0 %4225
        %v4227 = vsel %vm4004, %v4154, 0.0
        %4228 = vadd.xlane.f32.xlu0 %v4227
        %v4229 = vpop.xlane.xlu0 %4228
        %v4230 = vsel %vm4004, %v4156, 0.0
        %4231 = vadd.xlane.f32.xlu0 %v4230
        %v4232 = vpop.xlane.xlu0 %4231
        %v4233 = vsel %vm4004, %v4158, 0.0
        %4234 = vadd.xlane.f32.xlu0 %v4233
        %v4235 = vpop.xlane.xlu0 %4234
        %v4236 = vsel %vm4004, %v4160, 0.0
        %4237 = vadd.xlane.f32.xlu0 %v4236
        %v4238 = vpop.xlane.xlu0 %4237
        %v4239 = vsel %vm4004, %v4162, 0.0
        %4240 = vadd.xlane.f32.xlu0 %v4239
        %v4241 = vpop.xlane.xlu0 %4240
        %v4242 = vsel %vm4004, %v4164, 0.0
        %4243 = vadd.xlane.f32.xlu0 %v4242
        %v4244 = vpop.xlane.xlu0 %4243
        %v4245 = vsel %vm4004, %v4166, 0.0
        %4246 = vadd.xlane.f32.xlu0 %v4245
        %v4247 = vpop.xlane.xlu0 %4246
        %v4248 = vsel %vm4004, %v4168, 0.0
        %4249 = vadd.xlane.f32.xlu0 %v4248
        %v4250 = vpop.xlane.xlu0 %4249
        %v4251 = vsel %vm4004, %v4170, 0.0
        %4252 = vadd.xlane.f32.xlu0 %v4251
        %v4253 = vpop.xlane.xlu0 %4252
        %v4254 = vsel %vm4004, %v4172, 0.0
        %4255 = vadd.xlane.f32.xlu0 %v4254
        %v4256 = vpop.xlane.xlu0 %4255
        %v4257 = vsel %vm4004, %v4174, 0.0
        %4258 = vadd.xlane.f32.xlu0 %v4257
        %v4259 = vpop.xlane.xlu0 %4258
        %v4260 = vsel %vm4004, %v4176, 0.0
        %4261 = vadd.xlane.f32.xlu0 %v4260
        %v4262 = vpop.xlane.xlu0 %4261
        %v4263 = vsel %vm4004, %v4178, 0.0
        %4264 = vadd.xlane.f32.xlu0 %v4263
        %v4265 = vpop.xlane.xlu0 %4264
        %v4266 = vsel %vm4004, %v4180, 0.0
        %4267 = vadd.xlane.f32.xlu0 %v4266
        %v4268 = vpop.xlane.xlu0 %4267
        %v4269 = vsel %vm4004, %v4182, 0.0
        %4270 = vadd.xlane.f32.xlu0 %v4269
        %v4271 = vpop.xlane.xlu0 %4270
        %v4272 = vsel %vm4004, %v4184, 0.0
        %4273 = vadd.xlane.f32.xlu0 %v4272
        %v4274 = vpop.xlane.xlu0 %4273
        %v4275 = vsel %vm4004, %v4186, 0.0
        %4276 = vadd.xlane.f32.xlu0 %v4275
        %v4277 = vpop.xlane.xlu0 %4276
        %v4278 = vsel %vm4004, %v4188, 0.0
        %4279 = vadd.xlane.f32.xlu0 %v4278
        %v4280 = vpop.xlane.xlu0 %4279
        %v4281 = vsel %vm4004, %v4190, 0.0
        %4282 = vadd.xlane.f32.xlu0 %v4281
        %v4283 = vpop.xlane.xlu0 %4282
        %v4284 = vsel %vm4004, %v4192, 0.0
        %4285 = vadd.xlane.f32.xlu0 %v4284
        %v4286 = vpop.xlane.xlu0 %4285
        %v4287 = vsel %vm4004, %v4194, 0.0
        %4288 = vadd.xlane.f32.xlu0 %v4287
        %v4289 = vpop.xlane.xlu0 %4288
        %v4290 = vsel %vm4004, %v4196, 0.0
        %4291 = vadd.xlane.f32.xlu0 %v4290
        %v4292 = vpop.xlane.xlu0 %4291
        %v4293 = vlog2.pop %v4199
        %v4294 = vmul.f32 %v4293, 0.6931472
        %v4295 = vlog2.pop %v4202
        %v4296 = vmul.f32 %v4295, 0.6931472
        %v4297 = vlog2.pop %v4205
        %v4298 = vmul.f32 %v4297, 0.6931472
        %v4299 = vlog2.pop %v4208
        %v4300 = vmul.f32 %v4299, 0.6931472
        %v4301 = vlog2.pop %v4211
        %v4302 = vmul.f32 %v4301, 0.6931472
        %v4303 = vlog2.pop %v4214
        %v4304 = vmul.f32 %v4303, 0.6931472
        %v4305 = vlog2.pop %v4217
        %v4306 = vmul.f32 %v4305, 0.6931472
        %v4307 = vlog2.pop %v4220
        %v4308 = vmul.f32 %v4307, 0.6931472
        %v4309 = vlog2.pop %v4223
        %v4310 = vmul.f32 %v4309, 0.6931472
        %v4311 = vlog2.pop %v4226
        %v4312 = vmul.f32 %v4311, 0.6931472
        %v4313 = vlog2.pop %v4229
        %v4314 = vmul.f32 %v4313, 0.6931472
        %v4315 = vlog2.pop %v4232
        %v4316 = vmul.f32 %v4315, 0.6931472
        %v4317 = vlog2.pop %v4235
        %v4318 = vmul.f32 %v4317, 0.6931472
        %v4319 = vlog2.pop %v4238
        %v4320 = vmul.f32 %v4319, 0.6931472
        %v4321 = vlog2.pop %v4241
        %v4322 = vmul.f32 %v4321, 0.6931472
        %v4323 = vlog2.pop %v4244
        %v4324 = vmul.f32 %v4323, 0.6931472
        %v4325 = vlog2.pop %v4247
        %v4326 = vmul.f32 %v4325, 0.6931472
        %v4327 = vlog2.pop %v4250
        %v4328 = vmul.f32 %v4327, 0.6931472
        %v4329 = vlog2.pop %v4253
        %v4330 = vmul.f32 %v4329, 0.6931472
        %v4331 = vlog2.pop %v4256
        %v4332 = vmul.f32 %v4331, 0.6931472
        %v4333 = vlog2.pop %v4259
        %v4334 = vmul.f32 %v4333, 0.6931472
        %v4335 = vlog2.pop %v4262
        %v4336 = vmul.f32 %v4335, 0.6931472
        %v4337 = vlog2.pop %v4265
        %v4338 = vmul.f32 %v4337, 0.6931472
        %v4339 = vlog2.pop %v4268
        %v4340 = vmul.f32 %v4339, 0.6931472
        %v4341 = vlog2.pop %v4271
        %v4342 = vmul.f32 %v4341, 0.6931472
        %v4343 = vlog2.pop %v4274
        %v4344 = vmul.f32 %v4343, 0.6931472
        %v4345 = vlog2.pop %v4277
        %v4346 = vmul.f32 %v4345, 0.6931472
        %v4347 = vlog2.pop %v4280
        %v4348 = vmul.f32 %v4347, 0.6931472
        %v4349 = vlog2.pop %v4283
        %v4350 = vmul.f32 %v4349, 0.6931472
        %v4351 = vlog2.pop %v4286
        %v4352 = vmul.f32 %v4351, 0.6931472
        %v4353 = vlog2.pop %v4289
        %v4354 = vmul.f32 %v4353, 0.6931472
        %v4355 = vlog2.pop %v4292
        %v4356 = vmul.f32 %v4355, 0.6931472
        %v4357 = vadd.f32 %v4007, %v4294
        %v4358 = vadd.f32 %v4010, %v4296
        %v4359 = vadd.f32 %v4013, %v4298
        %v4360 = vadd.f32 %v4016, %v4300
        %v4361 = vadd.f32 %v4019, %v4302
        %v4362 = vadd.f32 %v4022, %v4304
        %v4363 = vadd.f32 %v4025, %v4306
        %v4364 = vadd.f32 %v4028, %v4308
        %v4365 = vadd.f32 %v4031, %v4310
        %v4366 = vadd.f32 %v4034, %v4312
        %v4367 = vadd.f32 %v4037, %v4314
        %v4368 = vadd.f32 %v4040, %v4316
        %v4369 = vadd.f32 %v4043, %v4318
        %v4370 = vadd.f32 %v4046, %v4320
        %v4371 = vadd.f32 %v4049, %v4322
        %v4372 = vadd.f32 %v4052, %v4324
        %v4373 = vadd.f32 %v4055, %v4326
        %v4374 = vadd.f32 %v4058, %v4328
        %v4375 = vadd.f32 %v4061, %v4330
        %v4376 = vadd.f32 %v4064, %v4332
        %v4377 = vadd.f32 %v4067, %v4334
        %v4378 = vadd.f32 %v4070, %v4336
        %v4379 = vadd.f32 %v4073, %v4338
        %v4380 = vadd.f32 %v4076, %v4340
        %v4381 = vadd.f32 %v4079, %v4342
        %v4382 = vadd.f32 %v4082, %v4344
        %v4383 = vadd.f32 %v4085, %v4346
        %v4384 = vadd.f32 %v4088, %v4348
        %v4385 = vadd.f32 %v4091, %v4350
        %v4386 = vadd.f32 %v4094, %v4352
        %v4387 = vadd.f32 %v4097, %v4354
        %v4388 = vadd.f32 %v4100, %v4356
        %vm4389 = vcmask 7168
        %4390 = vst.msk [vmem:[%s247] sm:$0xff] %vm4389, %v4357
        %4391 = vst.msk [vmem:[%s247 + $0x8] sm:$0xff] %vm4389, %v4358
        %4392 = vst.msk [vmem:[%s247 + $0x10] sm:$0xff] %vm4389, %v4359
        %4393 = vst.msk [vmem:[%s247 + $0x18] sm:$0xff] %vm4389, %v4360
        %4394 = vst.msk [vmem:[%s247 + $0x20] sm:$0xff] %vm4389, %v4361
        %4395 = vst.msk [vmem:[%s247 + $0x28] sm:$0xff] %vm4389, %v4362
        %4396 = vst.msk [vmem:[%s247 + $0x30] sm:$0xff] %vm4389, %v4363
        %4397 = vst.msk [vmem:[%s247 + $0x38] sm:$0xff] %vm4389, %v4364
        %4398 = vst.msk [vmem:[%s247 + $0x40] sm:$0xff] %vm4389, %v4365
        %4399 = vst.msk [vmem:[%s247 + $0x48] sm:$0xff] %vm4389, %v4366
        %4400 = vst.msk [vmem:[%s247 + $0x50] sm:$0xff] %vm4389, %v4367
        %4401 = vst.msk [vmem:[%s247 + $0x58] sm:$0xff] %vm4389, %v4368
        %4402 = vst.msk [vmem:[%s247 + $0x60] sm:$0xff] %vm4389, %v4369
        %4403 = vst.msk [vmem:[%s247 + $0x68] sm:$0xff] %vm4389, %v4370
        %4404 = vst.msk [vmem:[%s247 + $0x70] sm:$0xff] %vm4389, %v4371
        %4405 = vst.msk [vmem:[%s247 + $0x78] sm:$0xff] %vm4389, %v4372
        %4406 = vst.msk [vmem:[%s247 + $0x80] sm:$0xff] %vm4389, %v4373
        %4407 = vst.msk [vmem:[%s247 + $0x88] sm:$0xff] %vm4389, %v4374
        %4408 = vst.msk [vmem:[%s247 + $0x90] sm:$0xff] %vm4389, %v4375
        %4409 = vst.msk [vmem:[%s247 + $0x98] sm:$0xff] %vm4389, %v4376
        %4410 = vst.msk [vmem:[%s247 + $0xa0] sm:$0xff] %vm4389, %v4377
        %4411 = vst.msk [vmem:[%s247 + $0xa8] sm:$0xff] %vm4389, %v4378
        %4412 = vst.msk [vmem:[%s247 + $0xb0] sm:$0xff] %vm4389, %v4379
        %4413 = vst.msk [vmem:[%s247 + $0xb8] sm:$0xff] %vm4389, %v4380
        %4414 = vst.msk [vmem:[%s247 + $0xc0] sm:$0xff] %vm4389, %v4381
        %4415 = vst.msk [vmem:[%s247 + $0xc8] sm:$0xff] %vm4389, %v4382
        %4416 = vst.msk [vmem:[%s247 + $0xd0] sm:$0xff] %vm4389, %v4383
        %4417 = vst.msk [vmem:[%s247 + $0xd8] sm:$0xff] %vm4389, %v4384
        %4418 = vst.msk [vmem:[%s247 + $0xe0] sm:$0xff] %vm4389, %v4385
        %4419 = vst.msk [vmem:[%s247 + $0xe8] sm:$0xff] %vm4389, %v4386
        %4420 = vst.msk [vmem:[%s247 + $0xf0] sm:$0xff] %vm4389, %v4387
        %4421 = vst.msk [vmem:[%s247 + $0xf8] sm:$0xff] %vm4389, %v4388
        %s4422 = smul.u32 32, %s19
        %p4423 = scmp.lt.s32.totalorder %s4422, 63
        %s4424 = scalar_select %p4423, %s4422, 63
        %s4425 = smul.addr %s4424, 8
        %s4426 = scalar_lea.vmem %s4, %s4425
        // Predicated region
        $region49: #{tpu_custom_call.1} parent=35 // pred_check
          %p4427 = pneg %p126
        $region50: #{tpu_custom_call.1} parent=35 // pred_check_branch
          %4429 = sbr.rel (%p4427) target = $region52
        $region51: #{tpu_custom_call.1} parent=35 // pred_region
          %s4430 = smul.u32 32, %s19
        $region52: #{tpu_custom_call.1} parent=35 // pred_fallthru
          _
      $region36: #{tpu_custom_call.1} parent=5 // pred_fallthru
        _
      %p4431 = scmp.le.s32.totalorder 2, %s14
      // Predicated region
      $region53: #{tpu_custom_call.1} parent=5 // pred_check
        %p4432 = pneg %p4431
      $region54: #{tpu_custom_call.1} parent=5 // pred_check_branch
        %4434 = sbr.rel (%p4432) target = $region56
      $region55: #{tpu_custom_call.1} parent=5 // pred_region
        %s4435 = ssub.s32 %s14, 2
        // Predicated region
        $region57: #{tpu_custom_call.1} parent=55 // pred_check
          %p4436 = pneg %p132
        $region58: #{tpu_custom_call.1} parent=55 // pred_check_branch
          %4438 = sbr.rel (%p4436) target = $region60
        $region59: #{tpu_custom_call.1} parent=55 // pred_region
          %s4439 = smul.u32 32, %s20
          %p4440 = scmp.lt.s32.totalorder %s4439, 63
          %s4441 = scalar_select %p4440, %s4439, 63
          %s4442 = smul.addr %s4441, 8
          %s4443 = scalar_lea.vmem %s4, %s4442
        $region60: #{tpu_custom_call.1} parent=55 // pred_fallthru
          _
      $region56: #{tpu_custom_call.1} parent=5 // pred_fallthru
        _
    $region6: #{tpu_custom_call.1} parent=1 // loop_footer
      %s18 = sadd.s32 1, %s14
    $region7: #{tpu_custom_call.1} parent=1 // loop_footer_branch
      %13 = sbr.rel target = $region3
    $region8: #{tpu_custom_call.1} parent=1 // loop_exit
      _
    %4444 = vsyncpa [#allocation3], 1
    %s4445 = scalar_lea.sflag [#allocation3], 1
    %4446 = vsyncpa %s4445, 1
    %4447 = vsyncpa [#allocation5], 1

</llo_original>
